<compile_context>
chip_gen: v5e
topology: v5e:2x2
jax: 0.10.0
libtpu: 0.0.40
codegen_flags: <defaults>
</compile_context>

<pallas_src>
import functools

import jax
import jax.numpy as jnp
from jax import lax
from jax.experimental import pallas as pl
from jax.experimental.pallas import tpu as pltpu

FEAT_DIM = 16


def _cross(ax, ay, az, bx, by, bz):
    return ay * bz - az * by, az * bx - ax * bz, ax * by - ay * bx


def _nsf_kernel(q_ref, geom_ref, rows_ref, out_ref, acc_min, acc_sel, *,
                feat_dim):
    """One (point-tile, face-chunk) step of the streaming closest-face scan."""
    f_step = pl.program_id(2)
    n_fsteps = pl.num_programs(2)

    q = q_ref[0]                                  # (TP, 3)
    px, py, pz = q[:, 0:1], q[:, 1:2], q[:, 2:3]  # (TP, 1)

    g = geom_ref[0]                               # (16, FC) precomputed geometry
    v0x, v0y, v0z = g[0:1, :], g[1:2, :], g[2:3, :]
    ux, uy, uz = g[3:4, :], g[4:5, :], g[5:6, :]       # u = v1 - v0
    vx, vy, vz = g[6:7, :], g[7:8, :], g[8:9, :]       # v = v2 - v0
    nx, ny, nz = g[9:10, :], g[10:11, :], g[11:12, :]  # n = u x v
    inv_nn = g[12:13, :]
    inv_l01 = g[13:14, :]
    inv_l02 = g[14:15, :]
    inv_l12 = g[15:16, :]

    # w = p - v0, broadcast to (TP, FC)
    wx, wy, wz = px - v0x, py - v0y, pz - v0z

    # barycentric coords of the in-plane projection (inside test)
    cux, cuy, cuz = _cross(ux, uy, uz, wx, wy, wz)
    b2 = (cux * nx + cuy * ny + cuz * nz) * inv_nn
    cwx, cwy, cwz = _cross(wx, wy, wz, vx, vy, vz)
    b1 = (cwx * nx + cwy * ny + cwz * nz) * inv_nn
    b0 = 1.0 - b1 - b2
    inside = (b0 >= 0.0) & (b1 >= 0.0) & (b2 >= 0.0)

    wn = wx * nx + wy * ny + wz * nz
    d_plane = wn * wn * inv_nn

    # squared distance to the three edges; reuse u, v, v-u and w, w, w-u
    def seg_sq(apx, apy, apz, ex, ey, ez, inv_l):
        t = jnp.clip((apx * ex + apy * ey + apz * ez) * inv_l, 0.0, 1.0)
        dx, dy, dz = apx - t * ex, apy - t * ey, apz - t * ez
        return dx * dx + dy * dy + dz * dz

    d01 = seg_sq(wx, wy, wz, ux, uy, uz, inv_l01)
    d02 = seg_sq(wx, wy, wz, vx, vy, vz, inv_l02)
    d12 = seg_sq(wx - ux, wy - uy, wz - uz,
                 vx - ux, vy - uy, vz - uz, inv_l12)
    d_edge = jnp.minimum(jnp.minimum(d01, d02), d12)

    d = jnp.where(inside, d_plane, d_edge)        # (TP, FC) squared distance

    # chunk argmin (first occurrence) -> one-hot for the MXU gather
    dmin = jnp.min(d, axis=1, keepdims=True)      # (TP, 1)
    fc = d.shape[1]
    lane = lax.broadcasted_iota(jnp.int32, d.shape, 1)
    first = jnp.min(jnp.where(d == dmin, lane, fc), axis=1, keepdims=True)
    onehot = (lane == first).astype(jnp.float32)  # (TP, FC)

    # fused gather: [closest tri coords (9) | per-vertex features (3*dim) | pad]
    # HIGHEST precision => gathered f32 values are exact (tolerance-critical).
    sel = jnp.dot(onehot, rows_ref[0],
                  precision=lax.Precision.HIGHEST,
                  preferred_element_type=jnp.float32)   # (TP, GW)

    @pl.when(f_step == 0)
    def _():
        acc_min[...] = jnp.full_like(acc_min, jnp.inf)
        acc_sel[...] = jnp.zeros_like(acc_sel)

    better = dmin < acc_min[...]                  # (TP, 1)
    acc_min[...] = jnp.where(better, dmin, acc_min[...])
    acc_sel[...] = jnp.where(better, sel, acc_sel[...])

    @pl.when(f_step == n_fsteps - 1)
    def _():
        s = acc_sel[...]
        q0x, q0y, q0z = s[:, 0:1], s[:, 1:2], s[:, 2:3]
        s1x, s1y, s1z = s[:, 3:4], s[:, 4:5], s[:, 5:6]
        s2x, s2y, s2z = s[:, 6:7], s[:, 7:8], s[:, 8:9]

        # barycentric_coordinates_of_projection on the selected triangle
        Ux, Uy, Uz = s1x - q0x, s1y - q0y, s1z - q0z
        Vx, Vy, Vz = s2x - q0x, s2y - q0y, s2z - q0z
        Wx, Wy, Wz = px - q0x, py - q0y, pz - q0z
        Nx, Ny, Nz = _cross(Ux, Uy, Uz, Vx, Vy, Vz)
        sn = Nx * Nx + Ny * Ny + Nz * Nz
        sn = jnp.where(sn == 0.0, 1e-6, sn)       # matches torch reference
        inv_s = 1.0 / sn                          # exact (do NOT approximate)
        cx, cy, cz = _cross(Ux, Uy, Uz, Wx, Wy, Wz)
        bb2 = (cx * Nx + cy * Ny + cz * Nz) * inv_s
        cx, cy, cz = _cross(Wx, Wy, Wz, Vx, Vy, Vz)
        bb1 = (cx * Nx + cy * Ny + cz * Nz) * inv_s
        bb0 = 1.0 - bb1 - bb2

        f0 = s[:, 9:9 + feat_dim]
        f1 = s[:, 9 + feat_dim:9 + 2 * feat_dim]
        f2 = s[:, 9 + 2 * feat_dim:9 + 3 * feat_dim]
        res = bb0 * f0 + bb1 * f1 + bb2 * f2      # (TP, dim)
        out_ref[0] = jnp.transpose(res)           # lane-dense (dim, TP)


def face_vertices(attrs, faces):
    """attrs: (S, V, C), faces: (S, F, 3) int -> (S, F, 3, C)."""
    return jax.vmap(lambda a, f: a[f])(attrs, faces)


def nsf_forward(points, subject_garment_id, features, verts, faces,
                feat_dim=FEAT_DIM, tile_p=256, tile_f=512):
    """points: (B, 3, P) f32. Returns (B, feat_dim, P) f32."""
    B, _, P = points.shape
    F = faces.shape[1]
    assert tile_p % 8 == 0 and tile_f % 128 == 0

    feats_v = jnp.transpose(features[:, :feat_dim, :], (0, 2, 1))      # (S, V, dim)
    face_loc = face_vertices(verts, faces)[subject_garment_id]         # (B, F, 3, 3)
    face_feat = face_vertices(feats_v, faces)[subject_garment_id]      # (B, F, 3, dim)
    face_loc = face_loc.astype(jnp.float32)
    face_feat = face_feat.astype(jnp.float32)

    # --- pad faces to a multiple of tile_f with a far, NON-degenerate triangle
    f_pad = pl.cdiv(F, tile_f) * tile_f - F
    if f_pad:
        sentinel = jnp.array([[1e6, 1e6, 1e6],
                              [1e6 + 1.0, 1e6, 1e6],
                              [1e6, 1e6 + 1.0, 1e6]], jnp.float32)
        face_loc = jnp.concatenate(
            [face_loc, jnp.broadcast_to(sentinel, (B, f_pad, 3, 3))], axis=1)
        face_feat = jnp.concatenate(
            [face_feat, jnp.zeros((B, f_pad, 3, feat_dim), jnp.float32)], axis=1)
    Fp = F + f_pad

    # --- per-face geometry precomputed once (host): v0, u, v, n + reciprocals
    v0 = face_loc[:, :, 0, :]
    u = face_loc[:, :, 1, :] - v0
    v = face_loc[:, :, 2, :] - v0
    n = jnp.cross(u, v)
    inv_nn = 1.0 / jnp.maximum(jnp.sum(n * n, -1, keepdims=True), 1e-12)
    inv_l01 = 1.0 / jnp.maximum(jnp.sum(u * u, -1, keepdims=True), 1e-12)
    inv_l02 = 1.0 / jnp.maximum(jnp.sum(v * v, -1, keepdims=True), 1e-12)
    e12 = v - u
    inv_l12 = 1.0 / jnp.maximum(jnp.sum(e12 * e12, -1, keepdims=True), 1e-12)
    geom = jnp.concatenate([v0, u, v, n, inv_nn, inv_l01, inv_l02, inv_l12],
                           axis=-1)                                    # (B, Fp, 16)
    geom = jnp.transpose(geom, (0, 2, 1))                              # (B, 16, Fp)

    # --- fused gather table rows: [tri coords (9) | features (3*dim) | pad]
    gw = 9 + 3 * feat_dim
    gw_pad = ((gw + 63) // 64) * 64
    rows = jnp.concatenate(
        [face_loc.reshape(B, Fp, 9),
         face_feat.reshape(B, Fp, 3 * feat_dim),
         jnp.zeros((B, Fp, gw_pad - gw), jnp.float32)], axis=-1)       # (B, Fp, GW)

    # --- query points: (B, P, 3), pad P to a multiple of tile_p
    query = jnp.transpose(points, (0, 2, 1)).astype(jnp.float32)
    p_pad = pl.cdiv(P, tile_p) * tile_p - P
    if p_pad:
        query = jnp.pad(query, ((0, 0), (0, p_pad), (0, 0)))
    Pp = P + p_pad

    out = pl.pallas_call(
        functools.partial(_nsf_kernel, feat_dim=feat_dim),
        out_shape=jax.ShapeDtypeStruct((B, feat_dim, Pp), jnp.float32),
        grid_spec=pltpu.PrefetchScalarGridSpec(
            num_scalar_prefetch=0,
            grid=(B, Pp // tile_p, Fp // tile_f),
            in_specs=[
                pl.BlockSpec((1, tile_p, 3), lambda b, p, f: (b, p, 0)),
                pl.BlockSpec((1, 16, tile_f), lambda b, p, f: (b, 0, f)),
                pl.BlockSpec((1, tile_f, gw_pad), lambda b, p, f: (b, f, 0)),
            ],
            out_specs=pl.BlockSpec((1, feat_dim, tile_p),
                                   lambda b, p, f: (b, 0, p)),
            scratch_shapes=[pltpu.VMEM((tile_p, 1), jnp.float32),
                            pltpu.VMEM((tile_p, gw_pad), jnp.float32)]),
        compiler_params=pltpu.CompilerParams(
            dimension_semantics=("parallel", "parallel", "arbitrary")),
    )(query, geom, rows)

    return out[:, :, :P]                                               # (B, dim, P)


def nsf_forward_ref(points, subject_garment_id, features, verts, faces,
                    feat_dim=FEAT_DIM):
    """Pure-JAX reference mirroring the PyTorch forward."""
    query = jnp.transpose(points, (0, 2, 1))                           # (B, P, 3)
    feats_v = jnp.transpose(features[:, :feat_dim, :], (0, 2, 1))
    face_loc = face_vertices(verts, faces)[subject_garment_id]         # (B, F, 3, 3)
    face_feat = face_vertices(feats_v, faces)[subject_garment_id]      # (B, F, 3, dim)

    def tri_dist(p, tri):
        v0, v1, v2 = tri[0], tri[1], tri[2]
        u, v, w = v1 - v0, v2 - v0, p - v0
        n = jnp.cross(u, v)
        nn = jnp.maximum(jnp.dot(n, n), 1e-12)
        b2 = jnp.dot(jnp.cross(u, w), n) / nn
        b1 = jnp.dot(jnp.cross(w, v), n) / nn
        b0 = 1.0 - b1 - b2
        inside = (b0 >= 0) & (b1 >= 0) & (b2 >= 0)
        d_plane = jnp.dot(w, n) ** 2 / nn

        def seg(a, b):
            ab, ap = b - a, p - a
            t = jnp.clip(jnp.dot(ap, ab) / jnp.maximum(jnp.dot(ab, ab), 1e-12),
                         0.0, 1.0)
            diff = ap - t * ab
            return jnp.dot(diff, diff)

        d_edge = jnp.minimum(jnp.minimum(seg(v0, v1), seg(v0, v2)), seg(v1, v2))
        return jnp.where(inside, d_plane, d_edge)

    d = jax.vmap(lambda qb, tb: jax.vmap(
        lambda p: jax.vmap(lambda t: tri_dist(p, t))(tb))(qb))(query, face_loc)
    pts_ind = jnp.argmin(d, axis=-1)                                   # (B, P)

    closest_tri = jax.vmap(lambda fl, i: fl[i])(face_loc, pts_ind)     # (B, P, 3, 3)
    closest_feat = jax.vmap(lambda ff, i: ff[i])(face_feat, pts_ind)   # (B, P, 3, dim)

    p = query
    q0 = closest_tri[..., 0, :]
    u = closest_tri[..., 1, :] - q0
    v = closest_tri[..., 2, :] - q0
    w = p - q0
    n = jnp.cross(u, v)
    s = jnp.sum(n * n, axis=-1)
    s = jnp.where(s == 0.0, 1e-6, s)
    inv = 1.0 / s
    b2 = jnp.sum(jnp.cross(u, w) * n, axis=-1) * inv
    b1 = jnp.sum(jnp.cross(w, v) * n, axis=-1) * inv
    b0 = 1.0 - b1 - b2
    bary = jnp.stack([b0, b1, b2], axis=-1)                            # (B, P, 3)
    feat = jnp.sum(closest_feat * bary[..., None], axis=-2)            # (B, P, dim)
    return jnp.transpose(feat, (0, 2, 1))                              # (B, dim, P)


if __name__ == "__main__":
    key = jax.random.PRNGKey(0)
    k_pert, k_feat, k_sel, k_bary, k_off = jax.random.split(key, 5)

    B = 2                 # batch
    S = 2                 # num_subjects
    F = 200               # faces of the coarse smpl_d mesh (synthetic)
    V = 3 * F             # each face owns its 3 vertices -> well separated mesh
    P = 320               # query points per batch element
    feat_dim = FEAT_DIM   # self.dim

    # Well-separated, non-degenerate triangles -> unambiguous closest face.
    idx = jnp.arange(F, dtype=jnp.int32)
    centers = jnp.stack([(idx % 8) * 4,
                         ((idx // 8) % 8) * 4,
                         (idx // 64) * 4], axis=-1).astype(jnp.float32)  # (F, 3)
    base = jnp.array([[0.9, 0.0, 0.0],
                      [-0.45, 0.8, 0.0],
                      [-0.45, -0.8, 0.2]], jnp.float32)                  # (3, 3)
    pert = 0.15 * jax.random.uniform(k_pert, (S, F, 3, 3),
                                     minval=-1.0, maxval=1.0)
    verts = (centers[None, :, None, :] + base[None, None, :, :] + pert)
    verts = verts.reshape(S, V, 3).astype(jnp.float32)
    faces = jnp.tile(jnp.arange(V, dtype=jnp.int32).reshape(1, F, 3), (S, 1, 1))

    subject_garment_id = jnp.array([0, 1], dtype=jnp.int32)

    # Query points: on a random face of their subject + small offset.
    face_id = jax.random.randint(k_sel, (B, P), 0, F)
    bary = jax.random.uniform(k_bary, (B, P, 3), minval=0.05, maxval=1.0)
    bary = bary / jnp.sum(bary, axis=-1, keepdims=True)
    tri_pts = verts.reshape(S, F, 3, 3)[subject_garment_id]              # (B, F, 3, 3)
    tri_q = jax.vmap(lambda t, i: t[i])(tri_pts, face_id)                # (B, P, 3, 3)
    surf = jnp.einsum('bpk,bpkd->bpd', bary, tri_q)                      # (B, P, 3)
    off = 0.15 * jax.random.uniform(k_off, (B, P, 3), minval=-1.0, maxval=1.0)
    points = jnp.transpose(surf + off, (0, 2, 1)).astype(jnp.float32)    # (B, 3, P)

    # module init: ones(dim+3, V)*0.5 per subject; perturb deterministically
    features = 0.5 + 0.1 * jax.random.normal(
        k_feat, (S, feat_dim + 3, V), dtype=jnp.float32)

    feat = nsf_forward(points, subject_garment_id, features, verts, faces,
                       feat_dim=feat_dim, tile_p=128, tile_f=128)
    feat = jax.block_until_ready(feat)

    ref = jax.block_until_ready(
        nsf_forward_ref(points, subject_garment_id, features, verts, faces,
                        feat_dim=feat_dim))

    assert feat.shape == (B, feat_dim, P), feat.shape
    err = float(jnp.max(jnp.abs(feat - ref)))
    assert err < 1e-4, f"max abs err {err}"
    print("KERNEL_OK")
</pallas_src>

<mosaic_0001>
module attributes {stable_mosaic.version = 11 : i64} {
  func.func @_nsf_kernel(%arg0: i32, %arg1: i32, %arg2: i32, %arg3: memref<1x128x3xf32, #tpu.memory_space<vmem>>, %arg4: memref<1x16x128xf32, #tpu.memory_space<vmem>>, %arg5: memref<1x128x64xf32, #tpu.memory_space<vmem>>, %arg6: memref<1x16x128xf32, #tpu.memory_space<vmem>>, %arg7: memref<128x1xf32, #tpu.memory_space<vmem>>, %arg8: memref<128x64xf32, #tpu.memory_space<vmem>>) attributes {dimension_semantics = [#tpu.dimension_semantics<parallel>, #tpu.dimension_semantics<parallel>, #tpu.dimension_semantics<arbitrary>], iteration_bounds = array<i64: 2, 3, 2>, scalar_prefetch = 0 : i64, scratch_operands = 2 : i64, tpu.core_type = #tpu.core_type<tc>, window_params = [{transform_indices = @transform_0, window_bounds = array<i64: 1, 128, 3>}, {transform_indices = @transform_1, window_bounds = array<i64: 1, 16, 128>}, {transform_indices = @transform_2, window_bounds = array<i64: 1, 128, 64>}, {transform_indices = @transform_3, window_bounds = array<i64: 1, 16, 128>}]} {
    %c0 = arith.constant 0 : index
    %c0_0 = arith.constant 0 : index
    %c0_1 = arith.constant 0 : index
    %0 = vector.load %arg3[%c0, %c0_0, %c0_1] : memref<1x128x3xf32, #tpu.memory_space<vmem>>, vector<1x128x3xf32>
    %1 = vector.shape_cast %0 : vector<1x128x3xf32> to vector<128x3xf32>
    %2 = vector.extract_strided_slice %1 {offsets = [0, 0], sizes = [128, 1], strides = [1, 1]} : vector<128x3xf32> to vector<128x1xf32>
    %3 = vector.extract_strided_slice %1 {offsets = [0, 1], sizes = [128, 1], strides = [1, 1]} : vector<128x3xf32> to vector<128x1xf32>
    %4 = vector.extract_strided_slice %1 {offsets = [0, 2], sizes = [128, 1], strides = [1, 1]} : vector<128x3xf32> to vector<128x1xf32>
    %c0_2 = arith.constant 0 : index
    %c0_3 = arith.constant 0 : index
    %c0_4 = arith.constant 0 : index
    %5 = vector.load %arg4[%c0_2, %c0_3, %c0_4] : memref<1x16x128xf32, #tpu.memory_space<vmem>>, vector<1x16x128xf32>
    %6 = vector.shape_cast %5 : vector<1x16x128xf32> to vector<16x128xf32>
    %7 = vector.extract_strided_slice %6 {offsets = [0, 0], sizes = [1, 128], strides = [1, 1]} : vector<16x128xf32> to vector<1x128xf32>
    %8 = vector.extract_strided_slice %6 {offsets = [1, 0], sizes = [1, 128], strides = [1, 1]} : vector<16x128xf32> to vector<1x128xf32>
    %9 = vector.extract_strided_slice %6 {offsets = [2, 0], sizes = [1, 128], strides = [1, 1]} : vector<16x128xf32> to vector<1x128xf32>
    %10 = vector.extract_strided_slice %6 {offsets = [3, 0], sizes = [1, 128], strides = [1, 1]} : vector<16x128xf32> to vector<1x128xf32>
    %11 = vector.extract_strided_slice %6 {offsets = [4, 0], sizes = [1, 128], strides = [1, 1]} : vector<16x128xf32> to vector<1x128xf32>
    %12 = vector.extract_strided_slice %6 {offsets = [5, 0], sizes = [1, 128], strides = [1, 1]} : vector<16x128xf32> to vector<1x128xf32>
    %13 = vector.extract_strided_slice %6 {offsets = [6, 0], sizes = [1, 128], strides = [1, 1]} : vector<16x128xf32> to vector<1x128xf32>
    %14 = vector.extract_strided_slice %6 {offsets = [7, 0], sizes = [1, 128], strides = [1, 1]} : vector<16x128xf32> to vector<1x128xf32>
    %15 = vector.extract_strided_slice %6 {offsets = [8, 0], sizes = [1, 128], strides = [1, 1]} : vector<16x128xf32> to vector<1x128xf32>
    %16 = vector.extract_strided_slice %6 {offsets = [9, 0], sizes = [1, 128], strides = [1, 1]} : vector<16x128xf32> to vector<1x128xf32>
    %17 = vector.extract_strided_slice %6 {offsets = [10, 0], sizes = [1, 128], strides = [1, 1]} : vector<16x128xf32> to vector<1x128xf32>
    %18 = vector.extract_strided_slice %6 {offsets = [11, 0], sizes = [1, 128], strides = [1, 1]} : vector<16x128xf32> to vector<1x128xf32>
    %19 = vector.extract_strided_slice %6 {offsets = [12, 0], sizes = [1, 128], strides = [1, 1]} : vector<16x128xf32> to vector<1x128xf32>
    %20 = vector.extract_strided_slice %6 {offsets = [13, 0], sizes = [1, 128], strides = [1, 1]} : vector<16x128xf32> to vector<1x128xf32>
    %21 = vector.extract_strided_slice %6 {offsets = [14, 0], sizes = [1, 128], strides = [1, 1]} : vector<16x128xf32> to vector<1x128xf32>
    %22 = vector.extract_strided_slice %6 {offsets = [15, 0], sizes = [1, 128], strides = [1, 1]} : vector<16x128xf32> to vector<1x128xf32>
    %23 = vector.broadcast %2 : vector<128x1xf32> to vector<128x128xf32>
    %24 = vector.broadcast %7 : vector<1x128xf32> to vector<128x128xf32>
    %25 = arith.subf %23, %24 : vector<128x128xf32>
    %26 = vector.broadcast %3 : vector<128x1xf32> to vector<128x128xf32>
    %27 = vector.broadcast %8 : vector<1x128xf32> to vector<128x128xf32>
    %28 = arith.subf %26, %27 : vector<128x128xf32>
    %29 = vector.broadcast %4 : vector<128x1xf32> to vector<128x128xf32>
    %30 = vector.broadcast %9 : vector<1x128xf32> to vector<128x128xf32>
    %31 = arith.subf %29, %30 : vector<128x128xf32>
    %32 = vector.broadcast %11 : vector<1x128xf32> to vector<128x128xf32>
    %33 = arith.mulf %32, %31 : vector<128x128xf32>
    %34 = vector.broadcast %12 : vector<1x128xf32> to vector<128x128xf32>
    %35 = arith.mulf %34, %28 : vector<128x128xf32>
    %36 = arith.subf %33, %35 : vector<128x128xf32>
    %37 = vector.broadcast %12 : vector<1x128xf32> to vector<128x128xf32>
    %38 = arith.mulf %37, %25 : vector<128x128xf32>
    %39 = vector.broadcast %10 : vector<1x128xf32> to vector<128x128xf32>
    %40 = arith.mulf %39, %31 : vector<128x128xf32>
    %41 = arith.subf %38, %40 : vector<128x128xf32>
    %42 = vector.broadcast %10 : vector<1x128xf32> to vector<128x128xf32>
    %43 = arith.mulf %42, %28 : vector<128x128xf32>
    %44 = vector.broadcast %11 : vector<1x128xf32> to vector<128x128xf32>
    %45 = arith.mulf %44, %25 : vector<128x128xf32>
    %46 = arith.subf %43, %45 : vector<128x128xf32>
    %47 = vector.broadcast %16 : vector<1x128xf32> to vector<128x128xf32>
    %48 = arith.mulf %36, %47 : vector<128x128xf32>
    %49 = vector.broadcast %17 : vector<1x128xf32> to vector<128x128xf32>
    %50 = arith.mulf %41, %49 : vector<128x128xf32>
    %51 = arith.addf %48, %50 : vector<128x128xf32>
    %52 = vector.broadcast %18 : vector<1x128xf32> to vector<128x128xf32>
    %53 = arith.mulf %46, %52 : vector<128x128xf32>
    %54 = arith.addf %51, %53 : vector<128x128xf32>
    %55 = vector.broadcast %19 : vector<1x128xf32> to vector<128x128xf32>
    %56 = arith.mulf %54, %55 : vector<128x128xf32>
    %57 = vector.broadcast %15 : vector<1x128xf32> to vector<128x128xf32>
    %58 = arith.mulf %28, %57 : vector<128x128xf32>
    %59 = vector.broadcast %14 : vector<1x128xf32> to vector<128x128xf32>
    %60 = arith.mulf %31, %59 : vector<128x128xf32>
    %61 = arith.subf %58, %60 : vector<128x128xf32>
    %62 = vector.broadcast %13 : vector<1x128xf32> to vector<128x128xf32>
    %63 = arith.mulf %31, %62 : vector<128x128xf32>
    %64 = vector.broadcast %15 : vector<1x128xf32> to vector<128x128xf32>
    %65 = arith.mulf %25, %64 : vector<128x128xf32>
    %66 = arith.subf %63, %65 : vector<128x128xf32>
    %67 = vector.broadcast %14 : vector<1x128xf32> to vector<128x128xf32>
    %68 = arith.mulf %25, %67 : vector<128x128xf32>
    %69 = vector.broadcast %13 : vector<1x128xf32> to vector<128x128xf32>
    %70 = arith.mulf %28, %69 : vector<128x128xf32>
    %71 = arith.subf %68, %70 : vector<128x128xf32>
    %72 = vector.broadcast %16 : vector<1x128xf32> to vector<128x128xf32>
    %73 = arith.mulf %61, %72 : vector<128x128xf32>
    %74 = vector.broadcast %17 : vector<1x128xf32> to vector<128x128xf32>
    %75 = arith.mulf %66, %74 : vector<128x128xf32>
    %76 = arith.addf %73, %75 : vector<128x128xf32>
    %77 = vector.broadcast %18 : vector<1x128xf32> to vector<128x128xf32>
    %78 = arith.mulf %71, %77 : vector<128x128xf32>
    %79 = arith.addf %76, %78 : vector<128x128xf32>
    %80 = vector.broadcast %19 : vector<1x128xf32> to vector<128x128xf32>
    %81 = arith.mulf %79, %80 : vector<128x128xf32>
    %cst = arith.constant 1.000000e+00 : f32
    %82 = vector.broadcast %cst : f32 to vector<128x128xf32>
    %83 = arith.subf %82, %81 : vector<128x128xf32>
    %84 = arith.subf %83, %56 : vector<128x128xf32>
    %cst_5 = arith.constant 0.000000e+00 : f32
    %85 = vector.broadcast %cst_5 : f32 to vector<128x128xf32>
    %86 = arith.cmpf oge, %84, %85 : vector<128x128xf32>
    %cst_6 = arith.constant 0.000000e+00 : f32
    %87 = vector.broadcast %cst_6 : f32 to vector<128x128xf32>
    %88 = arith.cmpf oge, %81, %87 : vector<128x128xf32>
    %89 = arith.andi %86, %88 : vector<128x128xi1>
    %cst_7 = arith.constant 0.000000e+00 : f32
    %90 = vector.broadcast %cst_7 : f32 to vector<128x128xf32>
    %91 = arith.cmpf oge, %56, %90 : vector<128x128xf32>
    %92 = arith.andi %89, %91 : vector<128x128xi1>
    %93 = vector.broadcast %16 : vector<1x128xf32> to vector<128x128xf32>
    %94 = arith.mulf %25, %93 : vector<128x128xf32>
    %95 = vector.broadcast %17 : vector<1x128xf32> to vector<128x128xf32>
    %96 = arith.mulf %28, %95 : vector<128x128xf32>
    %97 = arith.addf %94, %96 : vector<128x128xf32>
    %98 = vector.broadcast %18 : vector<1x128xf32> to vector<128x128xf32>
    %99 = arith.mulf %31, %98 : vector<128x128xf32>
    %100 = arith.addf %97, %99 : vector<128x128xf32>
    %101 = arith.mulf %100, %100 : vector<128x128xf32>
    %102 = vector.broadcast %19 : vector<1x128xf32> to vector<128x128xf32>
    %103 = arith.mulf %101, %102 : vector<128x128xf32>
    %104 = vector.broadcast %10 : vector<1x128xf32> to vector<128x128xf32>
    %105 = arith.mulf %25, %104 : vector<128x128xf32>
    %106 = vector.broadcast %11 : vector<1x128xf32> to vector<128x128xf32>
    %107 = arith.mulf %28, %106 : vector<128x128xf32>
    %108 = arith.addf %105, %107 : vector<128x128xf32>
    %109 = vector.broadcast %12 : vector<1x128xf32> to vector<128x128xf32>
    %110 = arith.mulf %31, %109 : vector<128x128xf32>
    %111 = arith.addf %108, %110 : vector<128x128xf32>
    %112 = vector.broadcast %20 : vector<1x128xf32> to vector<128x128xf32>
    %113 = arith.mulf %111, %112 : vector<128x128xf32>
    %cst_8 = arith.constant 0.000000e+00 : f32
    %cst_9 = arith.constant 1.000000e+00 : f32
    %114 = vector.broadcast %cst_8 : f32 to vector<128x128xf32>
    %115 = arith.maximumf %114, %113 : vector<128x128xf32>
    %116 = vector.broadcast %cst_9 : f32 to vector<128x128xf32>
    %117 = arith.minimumf %116, %115 : vector<128x128xf32>
    %118 = vector.broadcast %10 : vector<1x128xf32> to vector<128x128xf32>
    %119 = arith.mulf %117, %118 : vector<128x128xf32>
    %120 = arith.subf %25, %119 : vector<128x128xf32>
    %121 = vector.broadcast %11 : vector<1x128xf32> to vector<128x128xf32>
    %122 = arith.mulf %117, %121 : vector<128x128xf32>
    %123 = arith.subf %28, %122 : vector<128x128xf32>
    %124 = vector.broadcast %12 : vector<1x128xf32> to vector<128x128xf32>
    %125 = arith.mulf %117, %124 : vector<128x128xf32>
    %126 = arith.subf %31, %125 : vector<128x128xf32>
    %127 = arith.mulf %120, %120 : vector<128x128xf32>
    %128 = arith.mulf %123, %123 : vector<128x128xf32>
    %129 = arith.addf %127, %128 : vector<128x128xf32>
    %130 = arith.mulf %126, %126 : vector<128x128xf32>
    %131 = arith.addf %129, %130 : vector<128x128xf32>
    %132 = vector.broadcast %13 : vector<1x128xf32> to vector<128x128xf32>
    %133 = arith.mulf %25, %132 : vector<128x128xf32>
    %134 = vector.broadcast %14 : vector<1x128xf32> to vector<128x128xf32>
    %135 = arith.mulf %28, %134 : vector<128x128xf32>
    %136 = arith.addf %133, %135 : vector<128x128xf32>
    %137 = vector.broadcast %15 : vector<1x128xf32> to vector<128x128xf32>
    %138 = arith.mulf %31, %137 : vector<128x128xf32>
    %139 = arith.addf %136, %138 : vector<128x128xf32>
    %140 = vector.broadcast %21 : vector<1x128xf32> to vector<128x128xf32>
    %141 = arith.mulf %139, %140 : vector<128x128xf32>
    %cst_10 = arith.constant 0.000000e+00 : f32
    %cst_11 = arith.constant 1.000000e+00 : f32
    %142 = vector.broadcast %cst_10 : f32 to vector<128x128xf32>
    %143 = arith.maximumf %142, %141 : vector<128x128xf32>
    %144 = vector.broadcast %cst_11 : f32 to vector<128x128xf32>
    %145 = arith.minimumf %144, %143 : vector<128x128xf32>
    %146 = vector.broadcast %13 : vector<1x128xf32> to vector<128x128xf32>
    %147 = arith.mulf %145, %146 : vector<128x128xf32>
    %148 = arith.subf %25, %147 : vector<128x128xf32>
    %149 = vector.broadcast %14 : vector<1x128xf32> to vector<128x128xf32>
    %150 = arith.mulf %145, %149 : vector<128x128xf32>
    %151 = arith.subf %28, %150 : vector<128x128xf32>
    %152 = vector.broadcast %15 : vector<1x128xf32> to vector<128x128xf32>
    %153 = arith.mulf %145, %152 : vector<128x128xf32>
    %154 = arith.subf %31, %153 : vector<128x128xf32>
    %155 = arith.mulf %148, %148 : vector<128x128xf32>
    %156 = arith.mulf %151, %151 : vector<128x128xf32>
    %157 = arith.addf %155, %156 : vector<128x128xf32>
    %158 = arith.mulf %154, %154 : vector<128x128xf32>
    %159 = arith.addf %157, %158 : vector<128x128xf32>
    %160 = vector.broadcast %10 : vector<1x128xf32> to vector<128x128xf32>
    %161 = arith.subf %25, %160 : vector<128x128xf32>
    %162 = vector.broadcast %11 : vector<1x128xf32> to vector<128x128xf32>
    %163 = arith.subf %28, %162 : vector<128x128xf32>
    %164 = vector.broadcast %12 : vector<1x128xf32> to vector<128x128xf32>
    %165 = arith.subf %31, %164 : vector<128x128xf32>
    %166 = arith.subf %13, %10 : vector<1x128xf32>
    %167 = arith.subf %14, %11 : vector<1x128xf32>
    %168 = arith.subf %15, %12 : vector<1x128xf32>
    %169 = vector.broadcast %166 : vector<1x128xf32> to vector<128x128xf32>
    %170 = arith.mulf %161, %169 : vector<128x128xf32>
    %171 = vector.broadcast %167 : vector<1x128xf32> to vector<128x128xf32>
    %172 = arith.mulf %163, %171 : vector<128x128xf32>
    %173 = arith.addf %170, %172 : vector<128x128xf32>
    %174 = vector.broadcast %168 : vector<1x128xf32> to vector<128x128xf32>
    %175 = arith.mulf %165, %174 : vector<128x128xf32>
    %176 = arith.addf %173, %175 : vector<128x128xf32>
    %177 = vector.broadcast %22 : vector<1x128xf32> to vector<128x128xf32>
    %178 = arith.mulf %176, %177 : vector<128x128xf32>
    %cst_12 = arith.constant 0.000000e+00 : f32
    %cst_13 = arith.constant 1.000000e+00 : f32
    %179 = vector.broadcast %cst_12 : f32 to vector<128x128xf32>
    %180 = arith.maximumf %179, %178 : vector<128x128xf32>
    %181 = vector.broadcast %cst_13 : f32 to vector<128x128xf32>
    %182 = arith.minimumf %181, %180 : vector<128x128xf32>
    %183 = vector.broadcast %166 : vector<1x128xf32> to vector<128x128xf32>
    %184 = arith.mulf %182, %183 : vector<128x128xf32>
    %185 = arith.subf %161, %184 : vector<128x128xf32>
    %186 = vector.broadcast %167 : vector<1x128xf32> to vector<128x128xf32>
    %187 = arith.mulf %182, %186 : vector<128x128xf32>
    %188 = arith.subf %163, %187 : vector<128x128xf32>
    %189 = vector.broadcast %168 : vector<1x128xf32> to vector<128x128xf32>
    %190 = arith.mulf %182, %189 : vector<128x128xf32>
    %191 = arith.subf %165, %190 : vector<128x128xf32>
    %192 = arith.mulf %185, %185 : vector<128x128xf32>
    %193 = arith.mulf %188, %188 : vector<128x128xf32>
    %194 = arith.addf %192, %193 : vector<128x128xf32>
    %195 = arith.mulf %191, %191 : vector<128x128xf32>
    %196 = arith.addf %194, %195 : vector<128x128xf32>
    %197 = arith.minimumf %131, %159 : vector<128x128xf32>
    %198 = arith.minimumf %197, %196 : vector<128x128xf32>
    %199 = arith.select %92, %103, %198 : vector<128x128xi1>, vector<128x128xf32>
    %cst_14 = arith.constant dense<0x7F800000> : vector<128xf32>
    %200 = vector.multi_reduction <minimumf>, %199, %cst_14 [1] : vector<128x128xf32> to vector<128xf32>
    %201 = vector.shape_cast %200 : vector<128xf32> to vector<128x1xf32>
    %202 = tpu.iota {dimensions = array<i32: 1>} : vector<128x128xi32>
    %203 = vector.broadcast %201 : vector<128x1xf32> to vector<128x128xf32>
    %204 = arith.cmpf oeq, %199, %203 : vector<128x128xf32>
    %c128_i32 = arith.constant 128 : i32
    %205 = vector.broadcast %c128_i32 : i32 to vector<128x128xi32>
    %206 = arith.select %204, %202, %205 : vector<128x128xi1>, vector<128x128xi32>
    %cst_15 = arith.constant dense<2147483647> : vector<128xi32>
    %207 = vector.multi_reduction <minsi>, %206, %cst_15 [1] : vector<128x128xi32> to vector<128xi32>
    %208 = vector.shape_cast %207 : vector<128xi32> to vector<128x1xi32>
    %209 = vector.broadcast %208 : vector<128x1xi32> to vector<128x128xi32>
    %210 = arith.cmpi eq, %202, %209 : vector<128x128xi32>
    %211 = arith.extui %210 : vector<128x128xi1> to vector<128x128xi32>
    %212 = arith.sitofp %211 : vector<128x128xi32> to vector<128x128xf32>
    %c0_16 = arith.constant 0 : index
    %c0_17 = arith.constant 0 : index
    %c0_18 = arith.constant 0 : index
    %213 = vector.load %arg5[%c0_16, %c0_17, %c0_18] : memref<1x128x64xf32, #tpu.memory_space<vmem>>, vector<1x128x64xf32>
    %214 = vector.shape_cast %213 : vector<1x128x64xf32> to vector<128x64xf32>
    %cst_19 = arith.constant dense<0.000000e+00> : vector<128x64xf32>
    %215 = tpu.matmul %212, %214, %cst_19 {dimension_numbers = #tpu.dot_dimension_numbers<[1], [0], [0], [1], [0, 0, 1, 1], [], []>, precision = #tpu.contract_precision<fp32>} : vector<128x128xf32>, vector<128x64xf32>, vector<128x64xf32> -> vector<128x64xf32>
    %c0_i32 = arith.constant 0 : i32
    %216 = arith.cmpi eq, %arg2, %c0_i32 : i32
    %217 = arith.extui %216 : i1 to i32
    %c0_i32_20 = arith.constant 0 : i32
    %218 = arith.cmpi ne, %217, %c0_i32_20 : i32
    scf.if %218 {
      %cst_32 = arith.constant 0x7F800000 : f32
      %232 = vector.broadcast %cst_32 : f32 to vector<128x1xf32>
      %c0_33 = arith.constant 0 : index
      %c0_34 = arith.constant 0 : index
      %233 = vector.load %arg7[%c0_33, %c0_34] : memref<128x1xf32, #tpu.memory_space<vmem>>, vector<128x1xf32>
      tpu.vector_store %arg7[%c0_33, %c0_34], %232 {strides = array<i32>} : memref<128x1xf32, #tpu.memory_space<vmem>>, vector<128x1xf32>,
      %cst_35 = arith.constant 0.000000e+00 : f32
      %234 = vector.broadcast %cst_35 : f32 to vector<128x64xf32>
      %c0_36 = arith.constant 0 : index
      %c0_37 = arith.constant 0 : index
      %235 = vector.load %arg8[%c0_36, %c0_37] : memref<128x64xf32, #tpu.memory_space<vmem>>, vector<128x64xf32>
      tpu.vector_store %arg8[%c0_36, %c0_37], %234 {strides = array<i32>} : memref<128x64xf32, #tpu.memory_space<vmem>>, vector<128x64xf32>,
    } else {
    }
    %c0_21 = arith.constant 0 : index
    %c0_22 = arith.constant 0 : index
    %219 = vector.load %arg7[%c0_21, %c0_22] : memref<128x1xf32, #tpu.memory_space<vmem>>, vector<128x1xf32>
    %220 = arith.cmpf olt, %201, %219 : vector<128x1xf32>
    %c0_23 = arith.constant 0 : index
    %c0_24 = arith.constant 0 : index
    %221 = vector.load %arg7[%c0_23, %c0_24] : memref<128x1xf32, #tpu.memory_space<vmem>>, vector<128x1xf32>
    %222 = arith.select %220, %201, %221 : vector<128x1xi1>, vector<128x1xf32>
    %c0_25 = arith.constant 0 : index
    %c0_26 = arith.constant 0 : index
    %223 = vector.load %arg7[%c0_25, %c0_26] : memref<128x1xf32, #tpu.memory_space<vmem>>, vector<128x1xf32>
    tpu.vector_store %arg7[%c0_25, %c0_26], %222 {strides = array<i32>} : memref<128x1xf32, #tpu.memory_space<vmem>>, vector<128x1xf32>,
    %c0_27 = arith.constant 0 : index
    %c0_28 = arith.constant 0 : index
    %224 = vector.load %arg8[%c0_27, %c0_28] : memref<128x64xf32, #tpu.memory_space<vmem>>, vector<128x64xf32>
    %225 = vector.shape_cast %220 : vector<128x1xi1> to vector<128x1xi1>
    %226 = vector.broadcast %225 : vector<128x1xi1> to vector<128x64xi1>
    %227 = arith.select %226, %215, %224 : vector<128x64xi1>, vector<128x64xf32>
    %c0_29 = arith.constant 0 : index
    %c0_30 = arith.constant 0 : index
    %228 = vector.load %arg8[%c0_29, %c0_30] : memref<128x64xf32, #tpu.memory_space<vmem>>, vector<128x64xf32>
    tpu.vector_store %arg8[%c0_29, %c0_30], %227 {strides = array<i32>} : memref<128x64xf32, #tpu.memory_space<vmem>>, vector<128x64xf32>,
    %c1_i32 = arith.constant 1 : i32
    %229 = arith.cmpi eq, %arg2, %c1_i32 : i32
    %230 = arith.extui %229 : i1 to i32
    %c0_i32_31 = arith.constant 0 : i32
    %231 = arith.cmpi ne, %230, %c0_i32_31 : i32
    scf.if %231 {
      %c0_32 = arith.constant 0 : index
      %c0_33 = arith.constant 0 : index
      %232 = vector.load %arg8[%c0_32, %c0_33] : memref<128x64xf32, #tpu.memory_space<vmem>>, vector<128x64xf32>
      %233 = vector.extract_strided_slice %232 {offsets = [0, 0], sizes = [128, 1], strides = [1, 1]} : vector<128x64xf32> to vector<128x1xf32>
      %234 = vector.extract_strided_slice %232 {offsets = [0, 1], sizes = [128, 1], strides = [1, 1]} : vector<128x64xf32> to vector<128x1xf32>
      %235 = vector.extract_strided_slice %232 {offsets = [0, 2], sizes = [128, 1], strides = [1, 1]} : vector<128x64xf32> to vector<128x1xf32>
      %236 = vector.extract_strided_slice %232 {offsets = [0, 3], sizes = [128, 1], strides = [1, 1]} : vector<128x64xf32> to vector<128x1xf32>
      %237 = vector.extract_strided_slice %232 {offsets = [0, 4], sizes = [128, 1], strides = [1, 1]} : vector<128x64xf32> to vector<128x1xf32>
      %238 = vector.extract_strided_slice %232 {offsets = [0, 5], sizes = [128, 1], strides = [1, 1]} : vector<128x64xf32> to vector<128x1xf32>
      %239 = vector.extract_strided_slice %232 {offsets = [0, 6], sizes = [128, 1], strides = [1, 1]} : vector<128x64xf32> to vector<128x1xf32>
      %240 = vector.extract_strided_slice %232 {offsets = [0, 7], sizes = [128, 1], strides = [1, 1]} : vector<128x64xf32> to vector<128x1xf32>
      %241 = vector.extract_strided_slice %232 {offsets = [0, 8], sizes = [128, 1], strides = [1, 1]} : vector<128x64xf32> to vector<128x1xf32>
      %242 = arith.subf %236, %233 : vector<128x1xf32>
      %243 = arith.subf %237, %234 : vector<128x1xf32>
      %244 = arith.subf %238, %235 : vector<128x1xf32>
      %245 = arith.subf %239, %233 : vector<128x1xf32>
      %246 = arith.subf %240, %234 : vector<128x1xf32>
      %247 = arith.subf %241, %235 : vector<128x1xf32>
      %248 = arith.subf %2, %233 : vector<128x1xf32>
      %249 = arith.subf %3, %234 : vector<128x1xf32>
      %250 = arith.subf %4, %235 : vector<128x1xf32>
      %251 = arith.mulf %243, %247 : vector<128x1xf32>
      %252 = arith.mulf %244, %246 : vector<128x1xf32>
      %253 = arith.subf %251, %252 : vector<128x1xf32>
      %254 = arith.mulf %244, %245 : vector<128x1xf32>
      %255 = arith.mulf %242, %247 : vector<128x1xf32>
      %256 = arith.subf %254, %255 : vector<128x1xf32>
      %257 = arith.mulf %242, %246 : vector<128x1xf32>
      %258 = arith.mulf %243, %245 : vector<128x1xf32>
      %259 = arith.subf %257, %258 : vector<128x1xf32>
      %260 = arith.mulf %253, %253 : vector<128x1xf32>
      %261 = arith.mulf %256, %256 : vector<128x1xf32>
      %262 = arith.addf %260, %261 : vector<128x1xf32>
      %263 = arith.mulf %259, %259 : vector<128x1xf32>
      %264 = arith.addf %262, %263 : vector<128x1xf32>
      %cst_34 = arith.constant 0.000000e+00 : f32
      %265 = vector.broadcast %cst_34 : f32 to vector<128x1xf32>
      %266 = arith.cmpf oeq, %264, %265 : vector<128x1xf32>
      %cst_35 = arith.constant 9.99999997E-7 : f32
      %267 = vector.broadcast %cst_35 : f32 to vector<128x1xf32>
      %268 = arith.select %266, %267, %264 : vector<128x1xi1>, vector<128x1xf32>
      %cst_36 = arith.constant 1.000000e+00 : f32
      %269 = vector.broadcast %cst_36 : f32 to vector<128x1xf32>
      %270 = arith.divf %269, %268 : vector<128x1xf32>
      %271 = arith.mulf %243, %250 : vector<128x1xf32>
      %272 = arith.mulf %244, %249 : vector<128x1xf32>
      %273 = arith.subf %271, %272 : vector<128x1xf32>
      %274 = arith.mulf %244, %248 : vector<128x1xf32>
      %275 = arith.mulf %242, %250 : vector<128x1xf32>
      %276 = arith.subf %274, %275 : vector<128x1xf32>
      %277 = arith.mulf %242, %249 : vector<128x1xf32>
      %278 = arith.mulf %243, %248 : vector<128x1xf32>
      %279 = arith.subf %277, %278 : vector<128x1xf32>
      %280 = arith.mulf %273, %253 : vector<128x1xf32>
      %281 = arith.mulf %276, %256 : vector<128x1xf32>
      %282 = arith.addf %280, %281 : vector<128x1xf32>
      %283 = arith.mulf %279, %259 : vector<128x1xf32>
      %284 = arith.addf %282, %283 : vector<128x1xf32>
      %285 = arith.mulf %284, %270 : vector<128x1xf32>
      %286 = arith.mulf %249, %247 : vector<128x1xf32>
      %287 = arith.mulf %250, %246 : vector<128x1xf32>
      %288 = arith.subf %286, %287 : vector<128x1xf32>
      %289 = arith.mulf %250, %245 : vector<128x1xf32>
      %290 = arith.mulf %248, %247 : vector<128x1xf32>
      %291 = arith.subf %289, %290 : vector<128x1xf32>
      %292 = arith.mulf %248, %246 : vector<128x1xf32>
      %293 = arith.mulf %249, %245 : vector<128x1xf32>
      %294 = arith.subf %292, %293 : vector<128x1xf32>
      %295 = arith.mulf %288, %253 : vector<128x1xf32>
      %296 = arith.mulf %291, %256 : vector<128x1xf32>
      %297 = arith.addf %295, %296 : vector<128x1xf32>
      %298 = arith.mulf %294, %259 : vector<128x1xf32>
      %299 = arith.addf %297, %298 : vector<128x1xf32>
      %300 = arith.mulf %299, %270 : vector<128x1xf32>
      %cst_37 = arith.constant 1.000000e+00 : f32
      %301 = vector.broadcast %cst_37 : f32 to vector<128x1xf32>
      %302 = arith.subf %301, %300 : vector<128x1xf32>
      %303 = arith.subf %302, %285 : vector<128x1xf32>
      %304 = vector.extract_strided_slice %232 {offsets = [0, 9], sizes = [128, 16], strides = [1, 1]} : vector<128x64xf32> to vector<128x16xf32>
      %305 = vector.extract_strided_slice %232 {offsets = [0, 25], sizes = [128, 16], strides = [1, 1]} : vector<128x64xf32> to vector<128x16xf32>
      %306 = vector.extract_strided_slice %232 {offsets = [0, 41], sizes = [128, 16], strides = [1, 1]} : vector<128x64xf32> to vector<128x16xf32>
      %307 = vector.broadcast %303 : vector<128x1xf32> to vector<128x16xf32>
      %308 = arith.mulf %307, %304 : vector<128x16xf32>
      %309 = vector.broadcast %300 : vector<128x1xf32> to vector<128x16xf32>
      %310 = arith.mulf %309, %305 : vector<128x16xf32>
      %311 = arith.addf %308, %310 : vector<128x16xf32>
      %312 = vector.broadcast %285 : vector<128x1xf32> to vector<128x16xf32>
      %313 = arith.mulf %312, %306 : vector<128x16xf32>
      %314 = arith.addf %311, %313 : vector<128x16xf32>
      %315 = tpu.transpose %314, [1, 0] : vector<128x16xf32> -> vector<16x128xf32>
      %c0_38 = arith.constant 0 : index
      %c0_39 = arith.constant 0 : index
      %c0_40 = arith.constant 0 : index
      %316 = vector.load %arg6[%c0_38, %c0_39, %c0_40] : memref<1x16x128xf32, #tpu.memory_space<vmem>>, vector<1x16x128xf32>
      %317 = vector.shape_cast %316 : vector<1x16x128xf32> to vector<16x128xf32>
      %318 = vector.shape_cast %315 : vector<16x128xf32> to vector<1x16x128xf32>
      tpu.vector_store %arg6[%c0_38, %c0_39, %c0_40], %318 {strides = array<i32>} : memref<1x16x128xf32, #tpu.memory_space<vmem>>, vector<1x16x128xf32>,
    } else {
    }
    return
  }
  func.func @transform_0(%arg0: i32, %arg1: i32, %arg2: i32) -> (i32, i32, i32) {
    %c0_i32 = arith.constant 0 : i32
    %c0_i32_0 = arith.constant 0 : i32
    return %arg0, %arg1, %c0_i32 : i32, i32, i32
  }
  func.func @transform_1(%arg0: i32, %arg1: i32, %arg2: i32) -> (i32, i32, i32) {
    %c0_i32 = arith.constant 0 : i32
    %c0_i32_0 = arith.constant 0 : i32
    return %arg0, %c0_i32, %arg2 : i32, i32, i32
  }
  func.func @transform_2(%arg0: i32, %arg1: i32, %arg2: i32) -> (i32, i32, i32) {
    %c0_i32 = arith.constant 0 : i32
    %c0_i32_0 = arith.constant 0 : i32
    return %arg0, %arg2, %c0_i32 : i32, i32, i32
  }
  func.func @transform_3(%arg0: i32, %arg1: i32, %arg2: i32) -> (i32, i32, i32) {
    %c0_i32 = arith.constant 0 : i32
    %c0_i32_0 = arith.constant 0 : i32
    return %arg0, %c0_i32, %arg1 : i32, i32, i32
  }
}

</mosaic_0001>

<llo_original>
// kernel: tpu_custom_call.1
$region0: #{tpu_custom_call.1}
  #allocation0 [shape = 'u32[]', space=smem, size = 0x4, offset = 0x4, fixed_abs, tag = 'smem constant byte address 0x4 - core index']
  #allocation1 [shape = 'u32[72,128]{1,0:T(1,128)}', space=vmem, size = 0x9000, scoped, tag = 'internal scratch']
  #allocation2 [shape = 'f32[128,1]{1,0:T(8,128)}', space=vmem, size = 0x10000, scoped, tag = 'scratch operand']
  #allocation3 [shape = 'f32[128,64]{1,0:T(8,128)}', space=vmem, size = 0x10000, scoped, tag = 'scratch operand']
  %s0 = inlined_call_operand.vmem [shape: f32[2,384,3], index: 0, kind: input, shape index: {}]
  %s1 = inlined_call_operand.vmem [shape: f32[2,16,256], index: 1, kind: input, shape index: {}]
  %s2 = inlined_call_operand.vmem [shape: f32[2,256,64], index: 2, kind: input, shape index: {}]
  %s3 = inlined_call_operand.hbm [shape: f32[2,16,384], index: 3, kind: output, shape index: {}]
  %s4 = sld [smem:[#allocation0]]
  $region91: #{tpu_custom_call.1} parent=0
    _
  %s6 = ssub.s32 1, %s4
  %s7 = scalar_select 0, %s6, %s4
  $region1: #{tpu_custom_call.1} parent=0
    #allocation4 [shape = 'u8[16384]{0}', space=vmem, size = 0x4000, scoped, tag = 'input window, operand 1']
    #allocation5 [shape = 'u8[16384]{0}', space=vmem, size = 0x4000, scoped, tag = 'output window, operand 0']
    #allocation6 [shape = 's32[2]{0}', space=sflag, size = 0x8, scoped, tag = 'scoped memory for tpu_custom_call.1']
    %8 = vsyncpa [#allocation6], 0
    %s9 = scalar_lea.sflag [#allocation6], 1
    %10 = vsyncpa %s9, 0
    loop: start=0, step=1, limit=14
    $region2: #{tpu_custom_call.1} parent=1 // loop_pre_header
      _
    $region3: #{tpu_custom_call.1} parent=1 // loop_header
      %s12 = sphi 0, %s16
      %p13 = scmp.ge.s32.totalorder %s12, 14
      %s19 = sphi 0, %s38
      %s20 = sphi 0, %s34
      %s21 = sphi 0, %s30
      %s22 = sphi 0, %s19
      %s23 = sphi 0, %s20
      %s24 = sphi 0, %s21
      %s25 = sphi 0, %s22
      %s26 = sphi 0, %s23
      %s27 = sphi 0, %s24
      %s43 = sphi 0, %s45
      %s46 = sphi 0, %s43
      %s47 = sphi 0, %s46
      %s63 = sphi 0, %s47
      %s71 = sphi 0, %s73
      %s74 = sphi 0, %s71
      %s75 = sphi 0, %s74
      %s91 = sphi 0, %s75
      %s99 = sphi 0, %s101
      %s102 = sphi 0, %s99
      %s103 = sphi 0, %s102
      %s119 = sphi 0, %s103
      %s127 = sphi 0, %s129
      %s130 = sphi 0, %s127
      %s131 = sphi 0, %s130
      %s147 = sphi 0, %s131
    $region4: #{tpu_custom_call.1} parent=1 // loop_header_branch
      %15 = sbr.rel (%p13) target = $region8
    $region5: #{tpu_custom_call.1} parent=1 // loop_body
      %s17 = ssub.s32 %s12, 1
      %s18 = ssub.s32 %s12, 2
      %s28 = sadd.s32 1, %s21
      %p29 = scmp.ge.s32.totalorder %s28, 2
      %s30 = scalar_select %p29, 0, %s28
      %s31 = sadd.s32 1, %s20
      %s32 = scalar_select %p29, %s31, %s20
      %p33 = scmp.ge.s32.totalorder %s32, 3
      %s34 = scalar_select %p33, 0, %s32
      %s35 = sadd.s32 1, %s19
      %s36 = scalar_select %p33, %s35, %s19
      %p37 = scmp.ge.s32.totalorder %s36, 2
      %s38 = scalar_select %p37, 0, %s36
      %s39 = ssub.s32 %s19, %s38
      %s40 = ssub.s32 %s20, %s34
      %s41 = sor.u32 %s39, %s40
      %p42 = scmp.eq.s32.totalorder %s41, 0
      %s44 = sadd.s32 %s43, 1
      %s45 = scalar_select %p42, %s43, %s44
      %p48 = pneg %p42
      %p49 = scmp.eq.s32.totalorder %s12, 11
      %p50 = por %p48, %p49
      %p51 = scmp.ne.s32.totalorder %s43, %s46
      %p52 = scmp.eq.s32.totalorder %s12, 0
      %p53 = por %p51, %p52
      %p54 = scmp.ne.s32.totalorder %s43, %s46
      %p55 = scmp.eq.s32.totalorder %s17, 11
      %p56 = por %p54, %p55
      %p57 = scmp.ne.s32.totalorder %s46, %s47
      %p58 = scmp.eq.s32.totalorder %s17, 0
      %p59 = por %p57, %p58
      %p60 = scmp.ne.s32.totalorder %s46, %s47
      %p61 = scmp.eq.s32.totalorder %s18, 11
      %p62 = por %p60, %p61
      %p64 = scmp.ne.s32.totalorder %s47, %s63
      %p65 = scmp.eq.s32.totalorder %s18, 0
      %p66 = por %p64, %p65
      %s67 = ssub.s32 %s19, %s38
      %s68 = ssub.s32 %s21, %s30
      %s69 = sor.u32 %s67, %s68
      %p70 = scmp.eq.s32.totalorder %s69, 0
      %s72 = sadd.s32 %s71, 1
      %s73 = scalar_select %p70, %s71, %s72
      %p76 = pneg %p70
      %p77 = scmp.eq.s32.totalorder %s12, 11
      %p78 = por %p76, %p77
      %p79 = scmp.ne.s32.totalorder %s71, %s74
      %p80 = scmp.eq.s32.totalorder %s12, 0
      %p81 = por %p79, %p80
      %p82 = scmp.ne.s32.totalorder %s71, %s74
      %p83 = scmp.eq.s32.totalorder %s17, 11
      %p84 = por %p82, %p83
      %p85 = scmp.ne.s32.totalorder %s74, %s75
      %p86 = scmp.eq.s32.totalorder %s17, 0
      %p87 = por %p85, %p86
      %p88 = scmp.ne.s32.totalorder %s74, %s75
      %p89 = scmp.eq.s32.totalorder %s18, 11
      %p90 = por %p88, %p89
      %p92 = scmp.ne.s32.totalorder %s75, %s91
      %p93 = scmp.eq.s32.totalorder %s18, 0
      %p94 = por %p92, %p93
      %s95 = ssub.s32 %s19, %s38
      %s96 = ssub.s32 %s21, %s30
      %s97 = sor.u32 %s95, %s96
      %p98 = scmp.eq.s32.totalorder %s97, 0
      %s100 = sadd.s32 %s99, 1
      %s101 = scalar_select %p98, %s99, %s100
      %p104 = pneg %p98
      %p105 = scmp.eq.s32.totalorder %s12, 11
      %p106 = por %p104, %p105
      %p107 = scmp.ne.s32.totalorder %s99, %s102
      %p108 = scmp.eq.s32.totalorder %s12, 0
      %p109 = por %p107, %p108
      %p110 = scmp.ne.s32.totalorder %s99, %s102
      %p111 = scmp.eq.s32.totalorder %s17, 11
      %p112 = por %p110, %p111
      %p113 = scmp.ne.s32.totalorder %s102, %s103
      %p114 = scmp.eq.s32.totalorder %s17, 0
      %p115 = por %p113, %p114
      %p116 = scmp.ne.s32.totalorder %s102, %s103
      %p117 = scmp.eq.s32.totalorder %s18, 11
      %p118 = por %p116, %p117
      %p120 = scmp.ne.s32.totalorder %s103, %s119
      %p121 = scmp.eq.s32.totalorder %s18, 0
      %p122 = por %p120, %p121
      %s123 = ssub.s32 %s19, %s38
      %s124 = ssub.s32 %s20, %s34
      %s125 = sor.u32 %s123, %s124
      %p126 = scmp.eq.s32.totalorder %s125, 0
      %s128 = sadd.s32 %s127, 1
      %s129 = scalar_select %p126, %s127, %s128
      %p132 = pneg %p126
      %p133 = scmp.eq.s32.totalorder %s12, 11
      %p134 = por %p132, %p133
      %p135 = scmp.ne.s32.totalorder %s127, %s130
      %p136 = scmp.eq.s32.totalorder %s12, 0
      %p137 = por %p135, %p136
      %p138 = scmp.ne.s32.totalorder %s127, %s130
      %p139 = scmp.eq.s32.totalorder %s17, 11
      %p140 = por %p138, %p139
      %p141 = scmp.ne.s32.totalorder %s130, %s131
      %p142 = scmp.eq.s32.totalorder %s17, 0
      %p143 = por %p141, %p142
      %p144 = scmp.ne.s32.totalorder %s130, %s131
      %p145 = scmp.eq.s32.totalorder %s18, 11
      %p146 = por %p144, %p145
      %p148 = scmp.ne.s32.totalorder %s131, %s147
      %p149 = scmp.eq.s32.totalorder %s18, 0
      %p150 = por %p148, %p149
      %p151 = scmp.le.s32.totalorder 1, %s12
      %p152 = scmp.lt.s32.totalorder %s12, 13
      %p153 = pnand %p151, %p152
      %p154 = pneg %p153
      // Predicated region
      $region9: #{tpu_custom_call.1} parent=5 // pred_check
        _
      $region10: #{tpu_custom_call.1} parent=5 // pred_check_branch
        %156 = sbr.rel (%p153) target = $region12
      $region11: #{tpu_custom_call.1} parent=5 // pred_region
        %s157 = ssub.s32 %s12, 1
      $region12: #{tpu_custom_call.1} parent=5 // pred_fallthru
        _
      %p158 = scmp.lt.s32.totalorder %s12, 12
      // Predicated region
      $region13: #{tpu_custom_call.1} parent=5 // pred_check
        %p159 = pneg %p158
      $region14: #{tpu_custom_call.1} parent=5 // pred_check_branch
        %161 = sbr.rel (%p159) target = $region16
      $region15: #{tpu_custom_call.1} parent=5 // pred_region
        // Predicated region
        $region17: #{tpu_custom_call.1} parent=15 // pred_check
          %p162 = pneg %p53
        $region18: #{tpu_custom_call.1} parent=15 // pred_check_branch
          %164 = sbr.rel (%p162) target = $region20
        $region19: #{tpu_custom_call.1} parent=15 // pred_region
          %s165 = smul.u32 16, %s20
          %p166 = scmp.lt.s32.totalorder %s19, 1
          %s167 = scalar_select %p166, %s19, 1
          %p168 = scmp.lt.s32.totalorder %s165, 47
          %s169 = scalar_select %p168, %s165, 47
          %s170 = smul.addr %s167, 48
          %s171 = sadd.s32 %s169, %s170
          %s172 = smul.addr %s171, 8
          %s173 = scalar_lea.vmem %s0, %s172
          %s174 = smul.u32 16, %s20
        $region20: #{tpu_custom_call.1} parent=15 // pred_fallthru
          _
        // Predicated region
        $region21: #{tpu_custom_call.1} parent=15 // pred_check
          %p175 = pneg %p81
        $region22: #{tpu_custom_call.1} parent=15 // pred_check_branch
          %177 = sbr.rel (%p175) target = $region24
        $region23: #{tpu_custom_call.1} parent=15 // pred_region
          %s178 = sand.u32 %s71, 1
          %s179 = sand.u32 %s71, 1
          %s180 = smul.addr %s179, 16
          %s181 = scalar_lea.vmem [#allocation4], %s180
          %s182 = smul.addr %s19, 4
          %s183 = sadd.s32 %s21, %s182
          %s184 = smul.addr %s183, 8
          %s185 = scalar_lea.vmem %s1, %s184
          // Predicated region
          $region25: #{tpu_custom_call.1} parent=23 // pred_check
            _
          $region26: #{tpu_custom_call.1} parent=23 // pred_check_branch
            %187 = sbr.rel (0) target = $region28
          $region27: #{tpu_custom_call.1} parent=23 // pred_region
            // Predicated region
            $region29: #{tpu_custom_call.1} parent=27 // pred_check
              _
            $region30: #{tpu_custom_call.1} parent=27 // pred_check_branch
              %189 = sbr.rel (0) target = $region32
            $region31: #{tpu_custom_call.1} parent=27 // pred_region
              // Predicated region
              $region44: #{tpu_custom_call.1} parent=31 // pred_check
                _
              $region45: #{tpu_custom_call.1} parent=31 // pred_check_branch
                %207 = sbr.rel (0) target = $region47
              $region46: #{tpu_custom_call.1} parent=31 // pred_region
                loop: start=0, step=1, limit=1
                $region48: #{tpu_custom_call.1} parent=46 // loop_pre_header
                  _
                $region49: #{tpu_custom_call.1} parent=46 // loop_header
                  %s209 = sphi 0, %s213
                  %p210 = scmp.ge.s32.totalorder %s209, 1
                  %s214 = sphi %s185, %s185
                  %s215 = sphi %s181, %s181
                $region50: #{tpu_custom_call.1} parent=46 // loop_header_branch
                  %212 = sbr.rel (%p210) target = $region54
                $region51: #{tpu_custom_call.1} parent=46 // loop_body
                  %v216 = vld [vmem:[%s214] sm:$0xff]
                  %217 = vst [vmem:[%s215] sm:$0xff] %v216
                  %v218 = vld [vmem:[%s214 + $0x10] sm:$0xff]
                  %219 = vst [vmem:[%s215 + $0x8] sm:$0xff] %v218
                $region52: #{tpu_custom_call.1} parent=46 // loop_footer
                  %s213 = sadd.s32 1, %s209
                $region53: #{tpu_custom_call.1} parent=46 // loop_footer_branch
                  %208 = sbr.rel target = $region49
                $region54: #{tpu_custom_call.1} parent=46 // loop_exit
                  _
              $region47: #{tpu_custom_call.1} parent=31 // pred_fallthru
                _
              // Predicated region
              $region55: #{tpu_custom_call.1} parent=31 // pred_check
                _
              $region56: #{tpu_custom_call.1} parent=31 // pred_check_branch
                %221 = sbr.rel target = $region58
              $region57: #{tpu_custom_call.1} parent=31 // pred_region
                _
              $region58: #{tpu_custom_call.1} parent=31 // pred_fallthru
                _
            $region32: #{tpu_custom_call.1} parent=27 // pred_fallthru
              _
            // Predicated region
            $region33: #{tpu_custom_call.1} parent=27 // pred_check
              _
            $region34: #{tpu_custom_call.1} parent=27 // pred_check_branch
              %191 = sbr.rel target = $region36
            $region35: #{tpu_custom_call.1} parent=27 // pred_region
              %s193 = ssub.s32 256, 1
              loop: start=0, step=1, limit=1
              $region37: #{tpu_custom_call.1} parent=35 // loop_pre_header
                _
              $region38: #{tpu_custom_call.1} parent=35 // loop_header
                %s195 = sphi 0, %s199
                %p196 = scmp.ge.s32.totalorder %s195, 1
                %s200 = sphi %s185, %s185
                %s201 = sphi %s181, %s181
              $region39: #{tpu_custom_call.1} parent=35 // loop_header_branch
                %198 = sbr.rel (%p196) target = $region43
              $region40: #{tpu_custom_call.1} parent=35 // loop_body
                %v202 = vld [vmem:[%s200] sm:%s193]
                %203 = vst [vmem:[%s201] sm:%s193] %v202
                %v204 = vld [vmem:[%s200 + $0x10] sm:%s193]
                %205 = vst [vmem:[%s201 + $0x8] sm:%s193] %v204
              $region41: #{tpu_custom_call.1} parent=35 // loop_footer
                %s199 = sadd.s32 1, %s195
              $region42: #{tpu_custom_call.1} parent=35 // loop_footer_branch
                %194 = sbr.rel target = $region38
              $region43: #{tpu_custom_call.1} parent=35 // loop_exit
                _
            $region36: #{tpu_custom_call.1} parent=27 // pred_fallthru
              _
          $region28: #{tpu_custom_call.1} parent=23 // pred_fallthru
            _
          %222 = vnop
        $region24: #{tpu_custom_call.1} parent=15 // pred_fallthru
          _
        // Predicated region
        $region59: #{tpu_custom_call.1} parent=15 // pred_check
          %p223 = pneg %p109
        $region60: #{tpu_custom_call.1} parent=15 // pred_check_branch
          %225 = sbr.rel (%p223) target = $region62
        $region61: #{tpu_custom_call.1} parent=15 // pred_region
          %s226 = smul.u32 16, %s21
          %p227 = scmp.lt.s32.totalorder %s19, 1
          %s228 = scalar_select %p227, %s19, 1
          %p229 = scmp.lt.s32.totalorder %s226, 31
          %s230 = scalar_select %p229, %s226, 31
          %s231 = smul.addr %s228, 32
          %s232 = sadd.s32 %s230, %s231
          %s233 = smul.addr %s232, 8
          %s234 = scalar_lea.vmem %s2, %s233
          %s235 = smul.u32 16, %s21
        $region62: #{tpu_custom_call.1} parent=15 // pred_fallthru
          _
      $region16: #{tpu_custom_call.1} parent=5 // pred_fallthru
        _
      %p236 = scmp.le.s32.totalorder 1, %s12
      %p237 = scmp.lt.s32.totalorder %s12, 13
      %p238 = pnand %p236, %p237
      %p239 = pneg %p238
      // Predicated region
      $region63: #{tpu_custom_call.1} parent=5 // pred_check
        _
      $region64: #{tpu_custom_call.1} parent=5 // pred_check_branch
        %241 = sbr.rel (%p238) target = $region66
      $region65: #{tpu_custom_call.1} parent=5 // pred_region
        %s242 = ssub.s32 %s12, 1
        %s243 = sand.u32 %s74, 1
        %s244 = sand.u32 %s74, 1
        %s245 = smul.addr %s244, 16
        %s246 = scalar_lea.vmem [#allocation4], %s245
        // Predicated region
        $region67: #{tpu_custom_call.1} parent=65 // pred_check
          %p247 = pneg %p87
        $region68: #{tpu_custom_call.1} parent=65 // pred_check_branch
          %249 = sbr.rel (%p247) target = $region70
        $region69: #{tpu_custom_call.1} parent=65 // pred_region
          _
        $region70: #{tpu_custom_call.1} parent=65 // pred_fallthru
          _
        %s250 = smul.u32 16, %s23
        %p251 = scmp.lt.s32.totalorder %s22, 1
        %s252 = scalar_select %p251, %s22, 1
        %p253 = scmp.lt.s32.totalorder %s250, 47
        %s254 = scalar_select %p253, %s250, 47
        %s255 = smul.addr %s252, 48
        %s256 = sadd.s32 %s254, %s255
        %s257 = smul.addr %s256, 8
        %s258 = scalar_lea.vmem %s0, %s257
        %p259 = pneg %p59
        %p260 = pneg %p56
        %s261 = sand.u32 %s74, 1
        %s262 = sand.u32 %s74, 1
        %s263 = smul.addr %s262, 16
        %s264 = scalar_lea.vmem [#allocation4], %s263
        %p265 = pneg %p87
        %p266 = pneg %p84
        %s267 = smul.u32 16, %s24
        %p268 = scmp.lt.s32.totalorder %s22, 1
        %s269 = scalar_select %p268, %s22, 1
        %p270 = scmp.lt.s32.totalorder %s267, 31
        %s271 = scalar_select %p270, %s267, 31
        %s272 = smul.addr %s269, 32
        %s273 = sadd.s32 %s271, %s272
        %s274 = smul.addr %s273, 8
        %s275 = scalar_lea.vmem %s2, %s274
        %p276 = pneg %p115
        %p277 = pneg %p112
        %p278 = pneg %p143
        %p279 = pneg %p140
        %s280 = sand.u32 %s130, 1
        %s281 = scalar_lea.sflag [#allocation6], %s280
        %s282 = sand.u32 %s130, 1
        %s283 = smul.addr %s282, 16
        %s284 = scalar_lea.vmem [#allocation5], %s283
        %s285 = smul.u32 16, %s23
        %p286 = scmp.lt.s32.totalorder %s22, 1
        %s287 = scalar_select %p286, %s22, 1
        %p288 = scmp.lt.s32.totalorder %s285, 47
        %s289 = scalar_select %p288, %s285, 47
        %s290 = smul.addr %s287, 48
        %s291 = sadd.s32 %s289, %s290
        %s292 = smul.addr %s291, 8
        %s293 = scalar_lea.vmem %s0, %s292
        %s294 = smul.u32 16, %s23
        %s295 = smul.u32 16, %s24
        %p296 = scmp.lt.s32.totalorder %s22, 1
        %s297 = scalar_select %p296, %s22, 1
        %p298 = scmp.lt.s32.totalorder %s295, 31
        %s299 = scalar_select %p298, %s295, 31
        %s300 = smul.addr %s297, 32
        %s301 = sadd.s32 %s299, %s300
        %s302 = smul.addr %s301, 8
        %s303 = scalar_lea.vmem %s2, %s302
        %s304 = smul.u32 16, %s24
        %v305 = vld [vmem:[%s293] sm:$0xff]
        %v306 = vld [vmem:[%s293 + $0x8] sm:$0xff]
        %v307 = vld [vmem:[%s293 + $0x10] sm:$0xff]
        %v308 = vld [vmem:[%s293 + $0x18] sm:$0xff]
        %v309 = vld [vmem:[%s293 + $0x20] sm:$0xff]
        %v310 = vld [vmem:[%s293 + $0x28] sm:$0xff]
        %v311 = vld [vmem:[%s293 + $0x30] sm:$0xff]
        %v312 = vld [vmem:[%s293 + $0x38] sm:$0xff]
        %v313 = vld [vmem:[%s293 + $0x40] sm:$0xff]
        %v314 = vld [vmem:[%s293 + $0x48] sm:$0xff]
        %v315 = vld [vmem:[%s293 + $0x50] sm:$0xff]
        %v316 = vld [vmem:[%s293 + $0x58] sm:$0xff]
        %v317 = vld [vmem:[%s293 + $0x60] sm:$0xff]
        %v318 = vld [vmem:[%s293 + $0x68] sm:$0xff]
        %v319 = vld [vmem:[%s293 + $0x70] sm:$0xff]
        %v320 = vld [vmem:[%s293 + $0x78] sm:$0xff]
        %v321 = vld [vmem:[%s246] sm:$0xff]
        %v322 = vld [vmem:[%s246 + $0x8] sm:$0xff]
        %324 = vset.pattern.permute.xlu0 0
        %325 = vperm.xlu0 %324, %v305
        %v326 = vpop.permute.xlu0 %325
        %329 = vset.pattern.permute.xlu0 0
        %330 = vperm.xlu0 %329, %v306
        %v331 = vpop.permute.xlu0 %330
        %334 = vset.pattern.permute.xlu0 0
        %335 = vperm.xlu0 %334, %v307
        %v336 = vpop.permute.xlu0 %335
        %339 = vset.pattern.permute.xlu0 0
        %340 = vperm.xlu0 %339, %v308
        %v341 = vpop.permute.xlu0 %340
        %344 = vset.pattern.permute.xlu0 0
        %345 = vperm.xlu0 %344, %v309
        %v346 = vpop.permute.xlu0 %345
        %349 = vset.pattern.permute.xlu0 0
        %350 = vperm.xlu0 %349, %v310
        %v351 = vpop.permute.xlu0 %350
        %354 = vset.pattern.permute.xlu0 0
        %355 = vperm.xlu0 %354, %v311
        %v356 = vpop.permute.xlu0 %355
        %359 = vset.pattern.permute.xlu0 0
        %360 = vperm.xlu0 %359, %v312
        %v361 = vpop.permute.xlu0 %360
        %364 = vset.pattern.permute.xlu0 0
        %365 = vperm.xlu0 %364, %v313
        %v366 = vpop.permute.xlu0 %365
        %369 = vset.pattern.permute.xlu0 0
        %370 = vperm.xlu0 %369, %v314
        %v371 = vpop.permute.xlu0 %370
        %374 = vset.pattern.permute.xlu0 0
        %375 = vperm.xlu0 %374, %v315
        %v376 = vpop.permute.xlu0 %375
        %379 = vset.pattern.permute.xlu0 0
        %380 = vperm.xlu0 %379, %v316
        %v381 = vpop.permute.xlu0 %380
        %384 = vset.pattern.permute.xlu0 0
        %385 = vperm.xlu0 %384, %v317
        %v386 = vpop.permute.xlu0 %385
        %389 = vset.pattern.permute.xlu0 0
        %390 = vperm.xlu0 %389, %v318
        %v391 = vpop.permute.xlu0 %390
        %394 = vset.pattern.permute.xlu0 0
        %395 = vperm.xlu0 %394, %v319
        %v396 = vpop.permute.xlu0 %395
        %399 = vset.pattern.permute.xlu0 0
        %400 = vperm.xlu0 %399, %v320
        %v401 = vpop.permute.xlu0 %400
        %v403 = vperm.slane %v321, 0
        %v404 = vsub.f32 %v326, %v403
        %v405 = vsub.f32 %v331, %v403
        %v406 = vsub.f32 %v336, %v403
        %v407 = vsub.f32 %v341, %v403
        %v408 = vsub.f32 %v346, %v403
        %v409 = vsub.f32 %v351, %v403
        %v410 = vsub.f32 %v356, %v403
        %v411 = vsub.f32 %v361, %v403
        %v412 = vsub.f32 %v366, %v403
        %v413 = vsub.f32 %v371, %v403
        %v414 = vsub.f32 %v376, %v403
        %v415 = vsub.f32 %v381, %v403
        %v416 = vsub.f32 %v386, %v403
        %v417 = vsub.f32 %v391, %v403
        %v418 = vsub.f32 %v396, %v403
        %v419 = vsub.f32 %v401, %v403
        %420 = vset.pattern.permute.xlu0 1
        %421 = vperm.xlu0 %420, %v305
        %v422 = vpop.permute.xlu0 %421
        %424 = vset.pattern.permute.xlu0 1
        %425 = vperm.xlu0 %424, %v306
        %v426 = vpop.permute.xlu0 %425
        %428 = vset.pattern.permute.xlu0 1
        %429 = vperm.xlu0 %428, %v307
        %v430 = vpop.permute.xlu0 %429
        %432 = vset.pattern.permute.xlu0 1
        %433 = vperm.xlu0 %432, %v308
        %v434 = vpop.permute.xlu0 %433
        %436 = vset.pattern.permute.xlu0 1
        %437 = vperm.xlu0 %436, %v309
        %v438 = vpop.permute.xlu0 %437
        %440 = vset.pattern.permute.xlu0 1
        %441 = vperm.xlu0 %440, %v310
        %v442 = vpop.permute.xlu0 %441
        %444 = vset.pattern.permute.xlu0 1
        %445 = vperm.xlu0 %444, %v311
        %v446 = vpop.permute.xlu0 %445
        %448 = vset.pattern.permute.xlu0 1
        %449 = vperm.xlu0 %448, %v312
        %v450 = vpop.permute.xlu0 %449
        %452 = vset.pattern.permute.xlu0 1
        %453 = vperm.xlu0 %452, %v313
        %v454 = vpop.permute.xlu0 %453
        %456 = vset.pattern.permute.xlu0 1
        %457 = vperm.xlu0 %456, %v314
        %v458 = vpop.permute.xlu0 %457
        %460 = vset.pattern.permute.xlu0 1
        %461 = vperm.xlu0 %460, %v315
        %v462 = vpop.permute.xlu0 %461
        %464 = vset.pattern.permute.xlu0 1
        %465 = vperm.xlu0 %464, %v316
        %v466 = vpop.permute.xlu0 %465
        %468 = vset.pattern.permute.xlu0 1
        %469 = vperm.xlu0 %468, %v317
        %v470 = vpop.permute.xlu0 %469
        %472 = vset.pattern.permute.xlu0 1
        %473 = vperm.xlu0 %472, %v318
        %v474 = vpop.permute.xlu0 %473
        %476 = vset.pattern.permute.xlu0 1
        %477 = vperm.xlu0 %476, %v319
        %v478 = vpop.permute.xlu0 %477
        %480 = vset.pattern.permute.xlu0 1
        %481 = vperm.xlu0 %480, %v320
        %v482 = vpop.permute.xlu0 %481
        %v484 = vperm.slane %v321, 1
        %v485 = vsub.f32 %v422, %v484
        %v486 = vsub.f32 %v426, %v484
        %v487 = vsub.f32 %v430, %v484
        %v488 = vsub.f32 %v434, %v484
        %v489 = vsub.f32 %v438, %v484
        %v490 = vsub.f32 %v442, %v484
        %v491 = vsub.f32 %v446, %v484
        %v492 = vsub.f32 %v450, %v484
        %v493 = vsub.f32 %v454, %v484
        %v494 = vsub.f32 %v458, %v484
        %v495 = vsub.f32 %v462, %v484
        %v496 = vsub.f32 %v466, %v484
        %v497 = vsub.f32 %v470, %v484
        %v498 = vsub.f32 %v474, %v484
        %v499 = vsub.f32 %v478, %v484
        %v500 = vsub.f32 %v482, %v484
        %501 = vset.pattern.permute.xlu0 2
        %502 = vperm.xlu0 %501, %v305
        %v503 = vpop.permute.xlu0 %502
        %505 = vset.pattern.permute.xlu0 2
        %506 = vperm.xlu0 %505, %v306
        %v507 = vpop.permute.xlu0 %506
        %509 = vset.pattern.permute.xlu0 2
        %510 = vperm.xlu0 %509, %v307
        %v511 = vpop.permute.xlu0 %510
        %513 = vset.pattern.permute.xlu0 2
        %514 = vperm.xlu0 %513, %v308
        %v515 = vpop.permute.xlu0 %514
        %517 = vset.pattern.permute.xlu0 2
        %518 = vperm.xlu0 %517, %v309
        %v519 = vpop.permute.xlu0 %518
        %521 = vset.pattern.permute.xlu0 2
        %522 = vperm.xlu0 %521, %v310
        %v523 = vpop.permute.xlu0 %522
        %525 = vset.pattern.permute.xlu0 2
        %526 = vperm.xlu0 %525, %v311
        %v527 = vpop.permute.xlu0 %526
        %529 = vset.pattern.permute.xlu0 2
        %530 = vperm.xlu0 %529, %v312
        %v531 = vpop.permute.xlu0 %530
        %533 = vset.pattern.permute.xlu0 2
        %534 = vperm.xlu0 %533, %v313
        %v535 = vpop.permute.xlu0 %534
        %537 = vset.pattern.permute.xlu0 2
        %538 = vperm.xlu0 %537, %v314
        %v539 = vpop.permute.xlu0 %538
        %541 = vset.pattern.permute.xlu0 2
        %542 = vperm.xlu0 %541, %v315
        %v543 = vpop.permute.xlu0 %542
        %545 = vset.pattern.permute.xlu0 2
        %546 = vperm.xlu0 %545, %v316
        %v547 = vpop.permute.xlu0 %546
        %549 = vset.pattern.permute.xlu0 2
        %550 = vperm.xlu0 %549, %v317
        %v551 = vpop.permute.xlu0 %550
        %553 = vset.pattern.permute.xlu0 2
        %554 = vperm.xlu0 %553, %v318
        %v555 = vpop.permute.xlu0 %554
        %557 = vset.pattern.permute.xlu0 2
        %558 = vperm.xlu0 %557, %v319
        %v559 = vpop.permute.xlu0 %558
        %561 = vset.pattern.permute.xlu0 2
        %562 = vperm.xlu0 %561, %v320
        %v563 = vpop.permute.xlu0 %562
        %v565 = vperm.slane %v321, 2
        %v566 = vsub.f32 %v503, %v565
        %v567 = vsub.f32 %v507, %v565
        %v568 = vsub.f32 %v511, %v565
        %v569 = vsub.f32 %v515, %v565
        %v570 = vsub.f32 %v519, %v565
        %v571 = vsub.f32 %v523, %v565
        %v572 = vsub.f32 %v527, %v565
        %v573 = vsub.f32 %v531, %v565
        %v574 = vsub.f32 %v535, %v565
        %v575 = vsub.f32 %v539, %v565
        %v576 = vsub.f32 %v543, %v565
        %v577 = vsub.f32 %v547, %v565
        %v578 = vsub.f32 %v551, %v565
        %v579 = vsub.f32 %v555, %v565
        %v580 = vsub.f32 %v559, %v565
        %v581 = vsub.f32 %v563, %v565
        %v582 = vperm.slane %v321, 4
        %v583 = vmul.f32 %v582, %v566
        %v584 = vmul.f32 %v582, %v567
        %v585 = vmul.f32 %v582, %v568
        %v586 = vmul.f32 %v582, %v569
        %v587 = vmul.f32 %v582, %v570
        %v588 = vmul.f32 %v582, %v571
        %v589 = vmul.f32 %v582, %v572
        %v590 = vmul.f32 %v582, %v573
        %v591 = vmul.f32 %v582, %v574
        %v592 = vmul.f32 %v582, %v575
        %v593 = vmul.f32 %v582, %v576
        %v594 = vmul.f32 %v582, %v577
        %v595 = vmul.f32 %v582, %v578
        %v596 = vmul.f32 %v582, %v579
        %v597 = vmul.f32 %v582, %v580
        %v598 = vmul.f32 %v582, %v581
        %v599 = vperm.slane %v321, 5
        %v600 = vmul.f32 %v599, %v485
        %v601 = vmul.f32 %v599, %v486
        %v602 = vmul.f32 %v599, %v487
        %v603 = vmul.f32 %v599, %v488
        %v604 = vmul.f32 %v599, %v489
        %v605 = vmul.f32 %v599, %v490
        %v606 = vmul.f32 %v599, %v491
        %v607 = vmul.f32 %v599, %v492
        %v608 = vmul.f32 %v599, %v493
        %v609 = vmul.f32 %v599, %v494
        %v610 = vmul.f32 %v599, %v495
        %v611 = vmul.f32 %v599, %v496
        %v612 = vmul.f32 %v599, %v497
        %v613 = vmul.f32 %v599, %v498
        %v614 = vmul.f32 %v599, %v499
        %v615 = vmul.f32 %v599, %v500
        %v616 = vsub.f32 %v583, %v600
        %v617 = vsub.f32 %v584, %v601
        %v618 = vsub.f32 %v585, %v602
        %v619 = vsub.f32 %v586, %v603
        %v620 = vsub.f32 %v587, %v604
        %v621 = vsub.f32 %v588, %v605
        %v622 = vsub.f32 %v589, %v606
        %v623 = vsub.f32 %v590, %v607
        %v624 = vsub.f32 %v591, %v608
        %v625 = vsub.f32 %v592, %v609
        %v626 = vsub.f32 %v593, %v610
        %v627 = vsub.f32 %v594, %v611
        %v628 = vsub.f32 %v595, %v612
        %v629 = vsub.f32 %v596, %v613
        %v630 = vsub.f32 %v597, %v614
        %v631 = vsub.f32 %v598, %v615
        %v632 = vmul.f32 %v599, %v404
        %v633 = vmul.f32 %v599, %v405
        %v634 = vmul.f32 %v599, %v406
        %v635 = vmul.f32 %v599, %v407
        %v636 = vmul.f32 %v599, %v408
        %v637 = vmul.f32 %v599, %v409
        %v638 = vmul.f32 %v599, %v410
        %v639 = vmul.f32 %v599, %v411
        %v640 = vmul.f32 %v599, %v412
        %v641 = vmul.f32 %v599, %v413
        %v642 = vmul.f32 %v599, %v414
        %v643 = vmul.f32 %v599, %v415
        %v644 = vmul.f32 %v599, %v416
        %v645 = vmul.f32 %v599, %v417
        %v646 = vmul.f32 %v599, %v418
        %v647 = vmul.f32 %v599, %v419
        %v648 = vperm.slane %v321, 3
        %v649 = vmul.f32 %v648, %v566
        %v650 = vmul.f32 %v648, %v567
        %v651 = vmul.f32 %v648, %v568
        %v652 = vmul.f32 %v648, %v569
        %v653 = vmul.f32 %v648, %v570
        %v654 = vmul.f32 %v648, %v571
        %v655 = vmul.f32 %v648, %v572
        %v656 = vmul.f32 %v648, %v573
        %v657 = vmul.f32 %v648, %v574
        %v658 = vmul.f32 %v648, %v575
        %v659 = vmul.f32 %v648, %v576
        %v660 = vmul.f32 %v648, %v577
        %v661 = vmul.f32 %v648, %v578
        %v662 = vmul.f32 %v648, %v579
        %v663 = vmul.f32 %v648, %v580
        %v664 = vmul.f32 %v648, %v581
        %v665 = vsub.f32 %v632, %v649
        %v666 = vsub.f32 %v633, %v650
        %v667 = vsub.f32 %v634, %v651
        %v668 = vsub.f32 %v635, %v652
        %v669 = vsub.f32 %v636, %v653
        %v670 = vsub.f32 %v637, %v654
        %v671 = vsub.f32 %v638, %v655
        %v672 = vsub.f32 %v639, %v656
        %v673 = vsub.f32 %v640, %v657
        %v674 = vsub.f32 %v641, %v658
        %v675 = vsub.f32 %v642, %v659
        %v676 = vsub.f32 %v643, %v660
        %v677 = vsub.f32 %v644, %v661
        %v678 = vsub.f32 %v645, %v662
        %v679 = vsub.f32 %v646, %v663
        %v680 = vsub.f32 %v647, %v664
        %v681 = vmul.f32 %v648, %v485
        %v682 = vmul.f32 %v648, %v486
        %v683 = vmul.f32 %v648, %v487
        %v684 = vmul.f32 %v648, %v488
        %v685 = vmul.f32 %v648, %v489
        %v686 = vmul.f32 %v648, %v490
        %v687 = vmul.f32 %v648, %v491
        %v688 = vmul.f32 %v648, %v492
        %v689 = vmul.f32 %v648, %v493
        %v690 = vmul.f32 %v648, %v494
        %v691 = vmul.f32 %v648, %v495
        %v692 = vmul.f32 %v648, %v496
        %v693 = vmul.f32 %v648, %v497
        %v694 = vmul.f32 %v648, %v498
        %v695 = vmul.f32 %v648, %v499
        %v696 = vmul.f32 %v648, %v500
        %v697 = vmul.f32 %v582, %v404
        %v698 = vmul.f32 %v582, %v405
        %v699 = vmul.f32 %v582, %v406
        %v700 = vmul.f32 %v582, %v407
        %v701 = vmul.f32 %v582, %v408
        %v702 = vmul.f32 %v582, %v409
        %v703 = vmul.f32 %v582, %v410
        %v704 = vmul.f32 %v582, %v411
        %v705 = vmul.f32 %v582, %v412
        %v706 = vmul.f32 %v582, %v413
        %v707 = vmul.f32 %v582, %v414
        %v708 = vmul.f32 %v582, %v415
        %v709 = vmul.f32 %v582, %v416
        %v710 = vmul.f32 %v582, %v417
        %v711 = vmul.f32 %v582, %v418
        %v712 = vmul.f32 %v582, %v419
        %v713 = vsub.f32 %v681, %v697
        %v714 = vsub.f32 %v682, %v698
        %v715 = vsub.f32 %v683, %v699
        %v716 = vsub.f32 %v684, %v700
        %v717 = vsub.f32 %v685, %v701
        %v718 = vsub.f32 %v686, %v702
        %v719 = vsub.f32 %v687, %v703
        %v720 = vsub.f32 %v688, %v704
        %v721 = vsub.f32 %v689, %v705
        %v722 = vsub.f32 %v690, %v706
        %v723 = vsub.f32 %v691, %v707
        %v724 = vsub.f32 %v692, %v708
        %v725 = vsub.f32 %v693, %v709
        %v726 = vsub.f32 %v694, %v710
        %v727 = vsub.f32 %v695, %v711
        %v728 = vsub.f32 %v696, %v712
        %v729 = vperm.slane %v322, 1
        %v730 = vmul.f32 %v616, %v729
        %v731 = vmul.f32 %v617, %v729
        %v732 = vmul.f32 %v618, %v729
        %v733 = vmul.f32 %v619, %v729
        %v734 = vmul.f32 %v620, %v729
        %v735 = vmul.f32 %v621, %v729
        %v736 = vmul.f32 %v622, %v729
        %v737 = vmul.f32 %v623, %v729
        %v738 = vmul.f32 %v624, %v729
        %v739 = vmul.f32 %v625, %v729
        %v740 = vmul.f32 %v626, %v729
        %v741 = vmul.f32 %v627, %v729
        %v742 = vmul.f32 %v628, %v729
        %v743 = vmul.f32 %v629, %v729
        %v744 = vmul.f32 %v630, %v729
        %v745 = vmul.f32 %v631, %v729
        %v746 = vperm.slane %v322, 2
        %v747 = vmul.f32 %v665, %v746
        %v748 = vmul.f32 %v666, %v746
        %v749 = vmul.f32 %v667, %v746
        %v750 = vmul.f32 %v668, %v746
        %v751 = vmul.f32 %v669, %v746
        %v752 = vmul.f32 %v670, %v746
        %v753 = vmul.f32 %v671, %v746
        %v754 = vmul.f32 %v672, %v746
        %v755 = vmul.f32 %v673, %v746
        %v756 = vmul.f32 %v674, %v746
        %v757 = vmul.f32 %v675, %v746
        %v758 = vmul.f32 %v676, %v746
        %v759 = vmul.f32 %v677, %v746
        %v760 = vmul.f32 %v678, %v746
        %v761 = vmul.f32 %v679, %v746
        %v762 = vmul.f32 %v680, %v746
        %v763 = vadd.f32 %v730, %v747
        %v764 = vadd.f32 %v731, %v748
        %v765 = vadd.f32 %v732, %v749
        %v766 = vadd.f32 %v733, %v750
        %v767 = vadd.f32 %v734, %v751
        %v768 = vadd.f32 %v735, %v752
        %v769 = vadd.f32 %v736, %v753
        %v770 = vadd.f32 %v737, %v754
        %v771 = vadd.f32 %v738, %v755
        %v772 = vadd.f32 %v739, %v756
        %v773 = vadd.f32 %v740, %v757
        %v774 = vadd.f32 %v741, %v758
        %v775 = vadd.f32 %v742, %v759
        %v776 = vadd.f32 %v743, %v760
        %v777 = vadd.f32 %v744, %v761
        %v778 = vadd.f32 %v745, %v762
        %v779 = vperm.slane %v322, 3
        %v780 = vmul.f32 %v713, %v779
        %v781 = vmul.f32 %v714, %v779
        %v782 = vmul.f32 %v715, %v779
        %v783 = vmul.f32 %v716, %v779
        %v784 = vmul.f32 %v717, %v779
        %v785 = vmul.f32 %v718, %v779
        %v786 = vmul.f32 %v719, %v779
        %v787 = vmul.f32 %v720, %v779
        %v788 = vmul.f32 %v721, %v779
        %v789 = vmul.f32 %v722, %v779
        %v790 = vmul.f32 %v723, %v779
        %v791 = vmul.f32 %v724, %v779
        %v792 = vmul.f32 %v725, %v779
        %v793 = vmul.f32 %v726, %v779
        %v794 = vmul.f32 %v727, %v779
        %v795 = vmul.f32 %v728, %v779
        %v796 = vadd.f32 %v763, %v780
        %v797 = vadd.f32 %v764, %v781
        %v798 = vadd.f32 %v765, %v782
        %v799 = vadd.f32 %v766, %v783
        %v800 = vadd.f32 %v767, %v784
        %v801 = vadd.f32 %v768, %v785
        %v802 = vadd.f32 %v769, %v786
        %v803 = vadd.f32 %v770, %v787
        %v804 = vadd.f32 %v771, %v788
        %v805 = vadd.f32 %v772, %v789
        %v806 = vadd.f32 %v773, %v790
        %v807 = vadd.f32 %v774, %v791
        %v808 = vadd.f32 %v775, %v792
        %v809 = vadd.f32 %v776, %v793
        %v810 = vadd.f32 %v777, %v794
        %v811 = vadd.f32 %v778, %v795
        %v812 = vperm.slane %v322, 4
        %v813 = vmul.f32 %v796, %v812
        %v814 = vmul.f32 %v797, %v812
        %v815 = vmul.f32 %v798, %v812
        %v816 = vmul.f32 %v799, %v812
        %v817 = vmul.f32 %v800, %v812
        %v818 = vmul.f32 %v801, %v812
        %v819 = vmul.f32 %v802, %v812
        %v820 = vmul.f32 %v803, %v812
        %v821 = vmul.f32 %v804, %v812
        %v822 = vmul.f32 %v805, %v812
        %v823 = vmul.f32 %v806, %v812
        %v824 = vmul.f32 %v807, %v812
        %v825 = vmul.f32 %v808, %v812
        %v826 = vmul.f32 %v809, %v812
        %v827 = vmul.f32 %v810, %v812
        %v828 = vmul.f32 %v811, %v812
        %v829 = vperm.slane %v322, 0
        %v830 = vmul.f32 %v485, %v829
        %v831 = vmul.f32 %v486, %v829
        %v832 = vmul.f32 %v487, %v829
        %v833 = vmul.f32 %v488, %v829
        %v834 = vmul.f32 %v489, %v829
        %v835 = vmul.f32 %v490, %v829
        %v836 = vmul.f32 %v491, %v829
        %v837 = vmul.f32 %v492, %v829
        %v838 = vmul.f32 %v493, %v829
        %v839 = vmul.f32 %v494, %v829
        %v840 = vmul.f32 %v495, %v829
        %v841 = vmul.f32 %v496, %v829
        %v842 = vmul.f32 %v497, %v829
        %v843 = vmul.f32 %v498, %v829
        %v844 = vmul.f32 %v499, %v829
        %v845 = vmul.f32 %v500, %v829
        %v846 = vperm.slane %v321, 7
        %v847 = vmul.f32 %v566, %v846
        %v848 = vmul.f32 %v567, %v846
        %v849 = vmul.f32 %v568, %v846
        %v850 = vmul.f32 %v569, %v846
        %v851 = vmul.f32 %v570, %v846
        %v852 = vmul.f32 %v571, %v846
        %v853 = vmul.f32 %v572, %v846
        %v854 = vmul.f32 %v573, %v846
        %v855 = vmul.f32 %v574, %v846
        %v856 = vmul.f32 %v575, %v846
        %v857 = vmul.f32 %v576, %v846
        %v858 = vmul.f32 %v577, %v846
        %v859 = vmul.f32 %v578, %v846
        %v860 = vmul.f32 %v579, %v846
        %v861 = vmul.f32 %v580, %v846
        %v862 = vmul.f32 %v581, %v846
        %v863 = vsub.f32 %v830, %v847
        %v864 = vsub.f32 %v831, %v848
        %v865 = vsub.f32 %v832, %v849
        %v866 = vsub.f32 %v833, %v850
        %v867 = vsub.f32 %v834, %v851
        %v868 = vsub.f32 %v835, %v852
        %v869 = vsub.f32 %v836, %v853
        %v870 = vsub.f32 %v837, %v854
        %v871 = vsub.f32 %v838, %v855
        %v872 = vsub.f32 %v839, %v856
        %v873 = vsub.f32 %v840, %v857
        %v874 = vsub.f32 %v841, %v858
        %v875 = vsub.f32 %v842, %v859
        %v876 = vsub.f32 %v843, %v860
        %v877 = vsub.f32 %v844, %v861
        %v878 = vsub.f32 %v845, %v862
        %v879 = vperm.slane %v321, 6
        %v880 = vmul.f32 %v566, %v879
        %v881 = vmul.f32 %v567, %v879
        %v882 = vmul.f32 %v568, %v879
        %v883 = vmul.f32 %v569, %v879
        %v884 = vmul.f32 %v570, %v879
        %v885 = vmul.f32 %v571, %v879
        %v886 = vmul.f32 %v572, %v879
        %v887 = vmul.f32 %v573, %v879
        %v888 = vmul.f32 %v574, %v879
        %v889 = vmul.f32 %v575, %v879
        %v890 = vmul.f32 %v576, %v879
        %v891 = vmul.f32 %v577, %v879
        %v892 = vmul.f32 %v578, %v879
        %v893 = vmul.f32 %v579, %v879
        %v894 = vmul.f32 %v580, %v879
        %v895 = vmul.f32 %v581, %v879
        %v896 = vmul.f32 %v404, %v829
        %v897 = vmul.f32 %v405, %v829
        %v898 = vmul.f32 %v406, %v829
        %v899 = vmul.f32 %v407, %v829
        %v900 = vmul.f32 %v408, %v829
        %v901 = vmul.f32 %v409, %v829
        %v902 = vmul.f32 %v410, %v829
        %v903 = vmul.f32 %v411, %v829
        %v904 = vmul.f32 %v412, %v829
        %v905 = vmul.f32 %v413, %v829
        %v906 = vmul.f32 %v414, %v829
        %v907 = vmul.f32 %v415, %v829
        %v908 = vmul.f32 %v416, %v829
        %v909 = vmul.f32 %v417, %v829
        %v910 = vmul.f32 %v418, %v829
        %v911 = vmul.f32 %v419, %v829
        %v912 = vsub.f32 %v880, %v896
        %v913 = vsub.f32 %v881, %v897
        %v914 = vsub.f32 %v882, %v898
        %v915 = vsub.f32 %v883, %v899
        %v916 = vsub.f32 %v884, %v900
        %v917 = vsub.f32 %v885, %v901
        %v918 = vsub.f32 %v886, %v902
        %v919 = vsub.f32 %v887, %v903
        %v920 = vsub.f32 %v888, %v904
        %v921 = vsub.f32 %v889, %v905
        %v922 = vsub.f32 %v890, %v906
        %v923 = vsub.f32 %v891, %v907
        %v924 = vsub.f32 %v892, %v908
        %v925 = vsub.f32 %v893, %v909
        %v926 = vsub.f32 %v894, %v910
        %v927 = vsub.f32 %v895, %v911
        %v928 = vmul.f32 %v404, %v846
        %v929 = vmul.f32 %v405, %v846
        %v930 = vmul.f32 %v406, %v846
        %v931 = vmul.f32 %v407, %v846
        %v932 = vmul.f32 %v408, %v846
        %v933 = vmul.f32 %v409, %v846
        %v934 = vmul.f32 %v410, %v846
        %v935 = vmul.f32 %v411, %v846
        %v936 = vmul.f32 %v412, %v846
        %v937 = vmul.f32 %v413, %v846
        %v938 = vmul.f32 %v414, %v846
        %v939 = vmul.f32 %v415, %v846
        %v940 = vmul.f32 %v416, %v846
        %v941 = vmul.f32 %v417, %v846
        %v942 = vmul.f32 %v418, %v846
        %v943 = vmul.f32 %v419, %v846
        %v944 = vmul.f32 %v485, %v879
        %v945 = vmul.f32 %v486, %v879
        %v946 = vmul.f32 %v487, %v879
        %v947 = vmul.f32 %v488, %v879
        %v948 = vmul.f32 %v489, %v879
        %v949 = vmul.f32 %v490, %v879
        %v950 = vmul.f32 %v491, %v879
        %v951 = vmul.f32 %v492, %v879
        %v952 = vmul.f32 %v493, %v879
        %v953 = vmul.f32 %v494, %v879
        %v954 = vmul.f32 %v495, %v879
        %v955 = vmul.f32 %v496, %v879
        %v956 = vmul.f32 %v497, %v879
        %v957 = vmul.f32 %v498, %v879
        %v958 = vmul.f32 %v499, %v879
        %v959 = vmul.f32 %v500, %v879
        %v960 = vsub.f32 %v928, %v944
        %v961 = vsub.f32 %v929, %v945
        %v962 = vsub.f32 %v930, %v946
        %v963 = vsub.f32 %v931, %v947
        %v964 = vsub.f32 %v932, %v948
        %v965 = vsub.f32 %v933, %v949
        %v966 = vsub.f32 %v934, %v950
        %v967 = vsub.f32 %v935, %v951
        %v968 = vsub.f32 %v936, %v952
        %v969 = vsub.f32 %v937, %v953
        %v970 = vsub.f32 %v938, %v954
        %v971 = vsub.f32 %v939, %v955
        %v972 = vsub.f32 %v940, %v956
        %v973 = vsub.f32 %v941, %v957
        %v974 = vsub.f32 %v942, %v958
        %v975 = vsub.f32 %v943, %v959
        %v976 = vmul.f32 %v863, %v729
        %v977 = vmul.f32 %v864, %v729
        %v978 = vmul.f32 %v865, %v729
        %v979 = vmul.f32 %v866, %v729
        %v980 = vmul.f32 %v867, %v729
        %v981 = vmul.f32 %v868, %v729
        %v982 = vmul.f32 %v869, %v729
        %v983 = vmul.f32 %v870, %v729
        %v984 = vmul.f32 %v871, %v729
        %v985 = vmul.f32 %v872, %v729
        %v986 = vmul.f32 %v873, %v729
        %v987 = vmul.f32 %v874, %v729
        %v988 = vmul.f32 %v875, %v729
        %v989 = vmul.f32 %v876, %v729
        %v990 = vmul.f32 %v877, %v729
        %v991 = vmul.f32 %v878, %v729
        %v992 = vmul.f32 %v912, %v746
        %v993 = vmul.f32 %v913, %v746
        %v994 = vmul.f32 %v914, %v746
        %v995 = vmul.f32 %v915, %v746
        %v996 = vmul.f32 %v916, %v746
        %v997 = vmul.f32 %v917, %v746
        %v998 = vmul.f32 %v918, %v746
        %v999 = vmul.f32 %v919, %v746
        %v1000 = vmul.f32 %v920, %v746
        %v1001 = vmul.f32 %v921, %v746
        %v1002 = vmul.f32 %v922, %v746
        %v1003 = vmul.f32 %v923, %v746
        %v1004 = vmul.f32 %v924, %v746
        %v1005 = vmul.f32 %v925, %v746
        %v1006 = vmul.f32 %v926, %v746
        %v1007 = vmul.f32 %v927, %v746
        %v1008 = vadd.f32 %v976, %v992
        %v1009 = vadd.f32 %v977, %v993
        %v1010 = vadd.f32 %v978, %v994
        %v1011 = vadd.f32 %v979, %v995
        %v1012 = vadd.f32 %v980, %v996
        %v1013 = vadd.f32 %v981, %v997
        %v1014 = vadd.f32 %v982, %v998
        %v1015 = vadd.f32 %v983, %v999
        %v1016 = vadd.f32 %v984, %v1000
        %v1017 = vadd.f32 %v985, %v1001
        %v1018 = vadd.f32 %v986, %v1002
        %v1019 = vadd.f32 %v987, %v1003
        %v1020 = vadd.f32 %v988, %v1004
        %v1021 = vadd.f32 %v989, %v1005
        %v1022 = vadd.f32 %v990, %v1006
        %v1023 = vadd.f32 %v991, %v1007
        %v1024 = vmul.f32 %v960, %v779
        %v1025 = vmul.f32 %v961, %v779
        %v1026 = vmul.f32 %v962, %v779
        %v1027 = vmul.f32 %v963, %v779
        %v1028 = vmul.f32 %v964, %v779
        %v1029 = vmul.f32 %v965, %v779
        %v1030 = vmul.f32 %v966, %v779
        %v1031 = vmul.f32 %v967, %v779
        %v1032 = vmul.f32 %v968, %v779
        %v1033 = vmul.f32 %v969, %v779
        %v1034 = vmul.f32 %v970, %v779
        %v1035 = vmul.f32 %v971, %v779
        %v1036 = vmul.f32 %v972, %v779
        %v1037 = vmul.f32 %v973, %v779
        %v1038 = vmul.f32 %v974, %v779
        %v1039 = vmul.f32 %v975, %v779
        %v1040 = vadd.f32 %v1008, %v1024
        %v1041 = vadd.f32 %v1009, %v1025
        %v1042 = vadd.f32 %v1010, %v1026
        %v1043 = vadd.f32 %v1011, %v1027
        %v1044 = vadd.f32 %v1012, %v1028
        %v1045 = vadd.f32 %v1013, %v1029
        %v1046 = vadd.f32 %v1014, %v1030
        %v1047 = vadd.f32 %v1015, %v1031
        %v1048 = vadd.f32 %v1016, %v1032
        %v1049 = vadd.f32 %v1017, %v1033
        %v1050 = vadd.f32 %v1018, %v1034
        %v1051 = vadd.f32 %v1019, %v1035
        %v1052 = vadd.f32 %v1020, %v1036
        %v1053 = vadd.f32 %v1021, %v1037
        %v1054 = vadd.f32 %v1022, %v1038
        %v1055 = vadd.f32 %v1023, %v1039
        %v1056 = vmul.f32 %v1040, %v812
        %v1057 = vmul.f32 %v1041, %v812
        %v1058 = vmul.f32 %v1042, %v812
        %v1059 = vmul.f32 %v1043, %v812
        %v1060 = vmul.f32 %v1044, %v812
        %v1061 = vmul.f32 %v1045, %v812
        %v1062 = vmul.f32 %v1046, %v812
        %v1063 = vmul.f32 %v1047, %v812
        %v1064 = vmul.f32 %v1048, %v812
        %v1065 = vmul.f32 %v1049, %v812
        %v1066 = vmul.f32 %v1050, %v812
        %v1067 = vmul.f32 %v1051, %v812
        %v1068 = vmul.f32 %v1052, %v812
        %v1069 = vmul.f32 %v1053, %v812
        %v1070 = vmul.f32 %v1054, %v812
        %v1071 = vmul.f32 %v1055, %v812
        %v1072 = vsub.f32 1.0, %v1056
        %v1073 = vsub.f32 1.0, %v1057
        %v1074 = vsub.f32 1.0, %v1058
        %v1075 = vsub.f32 1.0, %v1059
        %v1076 = vsub.f32 1.0, %v1060
        %v1077 = vsub.f32 1.0, %v1061
        %v1078 = vsub.f32 1.0, %v1062
        %v1079 = vsub.f32 1.0, %v1063
        %v1080 = vsub.f32 1.0, %v1064
        %v1081 = vsub.f32 1.0, %v1065
        %v1082 = vsub.f32 1.0, %v1066
        %v1083 = vsub.f32 1.0, %v1067
        %v1084 = vsub.f32 1.0, %v1068
        %v1085 = vsub.f32 1.0, %v1069
        %v1086 = vsub.f32 1.0, %v1070
        %v1087 = vsub.f32 1.0, %v1071
        %v1088 = vsub.f32 %v1072, %v813
        %v1089 = vsub.f32 %v1073, %v814
        %v1090 = vsub.f32 %v1074, %v815
        %v1091 = vsub.f32 %v1075, %v816
        %v1092 = vsub.f32 %v1076, %v817
        %v1093 = vsub.f32 %v1077, %v818
        %v1094 = vsub.f32 %v1078, %v819
        %v1095 = vsub.f32 %v1079, %v820
        %v1096 = vsub.f32 %v1080, %v821
        %v1097 = vsub.f32 %v1081, %v822
        %v1098 = vsub.f32 %v1082, %v823
        %v1099 = vsub.f32 %v1083, %v824
        %v1100 = vsub.f32 %v1084, %v825
        %v1101 = vsub.f32 %v1085, %v826
        %v1102 = vsub.f32 %v1086, %v827
        %v1103 = vsub.f32 %v1087, %v828
        %vm1104 = vcmp.ge.f32.partialorder %v1088, 0.0
        %vm1105 = vcmp.ge.f32.partialorder %v1089, 0.0
        %vm1106 = vcmp.ge.f32.partialorder %v1090, 0.0
        %vm1107 = vcmp.ge.f32.partialorder %v1091, 0.0
        %vm1108 = vcmp.ge.f32.partialorder %v1092, 0.0
        %vm1109 = vcmp.ge.f32.partialorder %v1093, 0.0
        %vm1110 = vcmp.ge.f32.partialorder %v1094, 0.0
        %vm1111 = vcmp.ge.f32.partialorder %v1095, 0.0
        %vm1112 = vcmp.ge.f32.partialorder %v1096, 0.0
        %vm1113 = vcmp.ge.f32.partialorder %v1097, 0.0
        %vm1114 = vcmp.ge.f32.partialorder %v1098, 0.0
        %vm1115 = vcmp.ge.f32.partialorder %v1099, 0.0
        %vm1116 = vcmp.ge.f32.partialorder %v1100, 0.0
        %vm1117 = vcmp.ge.f32.partialorder %v1101, 0.0
        %vm1118 = vcmp.ge.f32.partialorder %v1102, 0.0
        %vm1119 = vcmp.ge.f32.partialorder %v1103, 0.0
        %vm1120 = vcmp.ge.f32.partialorder %v1056, 0.0
        %vm1121 = vcmp.ge.f32.partialorder %v1057, 0.0
        %vm1122 = vcmp.ge.f32.partialorder %v1058, 0.0
        %vm1123 = vcmp.ge.f32.partialorder %v1059, 0.0
        %vm1124 = vcmp.ge.f32.partialorder %v1060, 0.0
        %vm1125 = vcmp.ge.f32.partialorder %v1061, 0.0
        %vm1126 = vcmp.ge.f32.partialorder %v1062, 0.0
        %vm1127 = vcmp.ge.f32.partialorder %v1063, 0.0
        %vm1128 = vcmp.ge.f32.partialorder %v1064, 0.0
        %vm1129 = vcmp.ge.f32.partialorder %v1065, 0.0
        %vm1130 = vcmp.ge.f32.partialorder %v1066, 0.0
        %vm1131 = vcmp.ge.f32.partialorder %v1067, 0.0
        %vm1132 = vcmp.ge.f32.partialorder %v1068, 0.0
        %vm1133 = vcmp.ge.f32.partialorder %v1069, 0.0
        %vm1134 = vcmp.ge.f32.partialorder %v1070, 0.0
        %vm1135 = vcmp.ge.f32.partialorder %v1071, 0.0
        %vm1136 = vmand %vm1104, %vm1120
        %vm1137 = vmand %vm1105, %vm1121
        %vm1138 = vmand %vm1106, %vm1122
        %vm1139 = vmand %vm1107, %vm1123
        %vm1140 = vmand %vm1108, %vm1124
        %vm1141 = vmand %vm1109, %vm1125
        %vm1142 = vmand %vm1110, %vm1126
        %vm1143 = vmand %vm1111, %vm1127
        %vm1144 = vmand %vm1112, %vm1128
        %vm1145 = vmand %vm1113, %vm1129
        %vm1146 = vmand %vm1114, %vm1130
        %vm1147 = vmand %vm1115, %vm1131
        %vm1148 = vmand %vm1116, %vm1132
        %vm1149 = vmand %vm1117, %vm1133
        %vm1150 = vmand %vm1118, %vm1134
        %vm1151 = vmand %vm1119, %vm1135
        %vm1152 = vcmp.ge.f32.partialorder %v813, 0.0
        %vm1153 = vcmp.ge.f32.partialorder %v814, 0.0
        %vm1154 = vcmp.ge.f32.partialorder %v815, 0.0
        %vm1155 = vcmp.ge.f32.partialorder %v816, 0.0
        %vm1156 = vcmp.ge.f32.partialorder %v817, 0.0
        %vm1157 = vcmp.ge.f32.partialorder %v818, 0.0
        %vm1158 = vcmp.ge.f32.partialorder %v819, 0.0
        %vm1159 = vcmp.ge.f32.partialorder %v820, 0.0
        %vm1160 = vcmp.ge.f32.partialorder %v821, 0.0
        %vm1161 = vcmp.ge.f32.partialorder %v822, 0.0
        %vm1162 = vcmp.ge.f32.partialorder %v823, 0.0
        %vm1163 = vcmp.ge.f32.partialorder %v824, 0.0
        %vm1164 = vcmp.ge.f32.partialorder %v825, 0.0
        %vm1165 = vcmp.ge.f32.partialorder %v826, 0.0
        %vm1166 = vcmp.ge.f32.partialorder %v827, 0.0
        %vm1167 = vcmp.ge.f32.partialorder %v828, 0.0
        %vm1168 = vmand %vm1136, %vm1152
        %vm1169 = vmand %vm1137, %vm1153
        %vm1170 = vmand %vm1138, %vm1154
        %vm1171 = vmand %vm1139, %vm1155
        %vm1172 = vmand %vm1140, %vm1156
        %vm1173 = vmand %vm1141, %vm1157
        %vm1174 = vmand %vm1142, %vm1158
        %vm1175 = vmand %vm1143, %vm1159
        %vm1176 = vmand %vm1144, %vm1160
        %vm1177 = vmand %vm1145, %vm1161
        %vm1178 = vmand %vm1146, %vm1162
        %vm1179 = vmand %vm1147, %vm1163
        %vm1180 = vmand %vm1148, %vm1164
        %vm1181 = vmand %vm1149, %vm1165
        %vm1182 = vmand %vm1150, %vm1166
        %vm1183 = vmand %vm1151, %vm1167
        %v1184 = vmul.f32 %v404, %v729
        %v1185 = vmul.f32 %v405, %v729
        %v1186 = vmul.f32 %v406, %v729
        %v1187 = vmul.f32 %v407, %v729
        %v1188 = vmul.f32 %v408, %v729
        %v1189 = vmul.f32 %v409, %v729
        %v1190 = vmul.f32 %v410, %v729
        %v1191 = vmul.f32 %v411, %v729
        %v1192 = vmul.f32 %v412, %v729
        %v1193 = vmul.f32 %v413, %v729
        %v1194 = vmul.f32 %v414, %v729
        %v1195 = vmul.f32 %v415, %v729
        %v1196 = vmul.f32 %v416, %v729
        %v1197 = vmul.f32 %v417, %v729
        %v1198 = vmul.f32 %v418, %v729
        %v1199 = vmul.f32 %v419, %v729
        %v1200 = vmul.f32 %v485, %v746
        %v1201 = vmul.f32 %v486, %v746
        %v1202 = vmul.f32 %v487, %v746
        %v1203 = vmul.f32 %v488, %v746
        %v1204 = vmul.f32 %v489, %v746
        %v1205 = vmul.f32 %v490, %v746
        %v1206 = vmul.f32 %v491, %v746
        %v1207 = vmul.f32 %v492, %v746
        %v1208 = vmul.f32 %v493, %v746
        %v1209 = vmul.f32 %v494, %v746
        %v1210 = vmul.f32 %v495, %v746
        %v1211 = vmul.f32 %v496, %v746
        %v1212 = vmul.f32 %v497, %v746
        %v1213 = vmul.f32 %v498, %v746
        %v1214 = vmul.f32 %v499, %v746
        %v1215 = vmul.f32 %v500, %v746
        %v1216 = vadd.f32 %v1184, %v1200
        %v1217 = vadd.f32 %v1185, %v1201
        %v1218 = vadd.f32 %v1186, %v1202
        %v1219 = vadd.f32 %v1187, %v1203
        %v1220 = vadd.f32 %v1188, %v1204
        %v1221 = vadd.f32 %v1189, %v1205
        %v1222 = vadd.f32 %v1190, %v1206
        %v1223 = vadd.f32 %v1191, %v1207
        %v1224 = vadd.f32 %v1192, %v1208
        %v1225 = vadd.f32 %v1193, %v1209
        %v1226 = vadd.f32 %v1194, %v1210
        %v1227 = vadd.f32 %v1195, %v1211
        %v1228 = vadd.f32 %v1196, %v1212
        %v1229 = vadd.f32 %v1197, %v1213
        %v1230 = vadd.f32 %v1198, %v1214
        %v1231 = vadd.f32 %v1199, %v1215
        %v1232 = vmul.f32 %v566, %v779
        %v1233 = vmul.f32 %v567, %v779
        %v1234 = vmul.f32 %v568, %v779
        %v1235 = vmul.f32 %v569, %v779
        %v1236 = vmul.f32 %v570, %v779
        %v1237 = vmul.f32 %v571, %v779
        %v1238 = vmul.f32 %v572, %v779
        %v1239 = vmul.f32 %v573, %v779
        %v1240 = vmul.f32 %v574, %v779
        %v1241 = vmul.f32 %v575, %v779
        %v1242 = vmul.f32 %v576, %v779
        %v1243 = vmul.f32 %v577, %v779
        %v1244 = vmul.f32 %v578, %v779
        %v1245 = vmul.f32 %v579, %v779
        %v1246 = vmul.f32 %v580, %v779
        %v1247 = vmul.f32 %v581, %v779
        %v1248 = vadd.f32 %v1216, %v1232
        %v1249 = vadd.f32 %v1217, %v1233
        %v1250 = vadd.f32 %v1218, %v1234
        %v1251 = vadd.f32 %v1219, %v1235
        %v1252 = vadd.f32 %v1220, %v1236
        %v1253 = vadd.f32 %v1221, %v1237
        %v1254 = vadd.f32 %v1222, %v1238
        %v1255 = vadd.f32 %v1223, %v1239
        %v1256 = vadd.f32 %v1224, %v1240
        %v1257 = vadd.f32 %v1225, %v1241
        %v1258 = vadd.f32 %v1226, %v1242
        %v1259 = vadd.f32 %v1227, %v1243
        %v1260 = vadd.f32 %v1228, %v1244
        %v1261 = vadd.f32 %v1229, %v1245
        %v1262 = vadd.f32 %v1230, %v1246
        %v1263 = vadd.f32 %v1231, %v1247
        %v1264 = vmul.f32 %v1248, %v1248
        %v1265 = vmul.f32 %v1249, %v1249
        %v1266 = vmul.f32 %v1250, %v1250
        %v1267 = vmul.f32 %v1251, %v1251
        %v1268 = vmul.f32 %v1252, %v1252
        %v1269 = vmul.f32 %v1253, %v1253
        %v1270 = vmul.f32 %v1254, %v1254
        %v1271 = vmul.f32 %v1255, %v1255
        %v1272 = vmul.f32 %v1256, %v1256
        %v1273 = vmul.f32 %v1257, %v1257
        %v1274 = vmul.f32 %v1258, %v1258
        %v1275 = vmul.f32 %v1259, %v1259
        %v1276 = vmul.f32 %v1260, %v1260
        %v1277 = vmul.f32 %v1261, %v1261
        %v1278 = vmul.f32 %v1262, %v1262
        %v1279 = vmul.f32 %v1263, %v1263
        %v1280 = vmul.f32 %v1264, %v812
        %v1281 = vmul.f32 %v1265, %v812
        %v1282 = vmul.f32 %v1266, %v812
        %v1283 = vmul.f32 %v1267, %v812
        %v1284 = vmul.f32 %v1268, %v812
        %v1285 = vmul.f32 %v1269, %v812
        %v1286 = vmul.f32 %v1270, %v812
        %v1287 = vmul.f32 %v1271, %v812
        %v1288 = vmul.f32 %v1272, %v812
        %v1289 = vmul.f32 %v1273, %v812
        %v1290 = vmul.f32 %v1274, %v812
        %v1291 = vmul.f32 %v1275, %v812
        %v1292 = vmul.f32 %v1276, %v812
        %v1293 = vmul.f32 %v1277, %v812
        %v1294 = vmul.f32 %v1278, %v812
        %v1295 = vmul.f32 %v1279, %v812
        %v1296 = vmul.f32 %v404, %v648
        %v1297 = vmul.f32 %v405, %v648
        %v1298 = vmul.f32 %v406, %v648
        %v1299 = vmul.f32 %v407, %v648
        %v1300 = vmul.f32 %v408, %v648
        %v1301 = vmul.f32 %v409, %v648
        %v1302 = vmul.f32 %v410, %v648
        %v1303 = vmul.f32 %v411, %v648
        %v1304 = vmul.f32 %v412, %v648
        %v1305 = vmul.f32 %v413, %v648
        %v1306 = vmul.f32 %v414, %v648
        %v1307 = vmul.f32 %v415, %v648
        %v1308 = vmul.f32 %v416, %v648
        %v1309 = vmul.f32 %v417, %v648
        %v1310 = vmul.f32 %v418, %v648
        %v1311 = vmul.f32 %v419, %v648
        %v1312 = vmul.f32 %v485, %v582
        %v1313 = vmul.f32 %v486, %v582
        %v1314 = vmul.f32 %v487, %v582
        %v1315 = vmul.f32 %v488, %v582
        %v1316 = vmul.f32 %v489, %v582
        %v1317 = vmul.f32 %v490, %v582
        %v1318 = vmul.f32 %v491, %v582
        %v1319 = vmul.f32 %v492, %v582
        %v1320 = vmul.f32 %v493, %v582
        %v1321 = vmul.f32 %v494, %v582
        %v1322 = vmul.f32 %v495, %v582
        %v1323 = vmul.f32 %v496, %v582
        %v1324 = vmul.f32 %v497, %v582
        %v1325 = vmul.f32 %v498, %v582
        %v1326 = vmul.f32 %v499, %v582
        %v1327 = vmul.f32 %v500, %v582
        %v1328 = vadd.f32 %v1296, %v1312
        %v1329 = vadd.f32 %v1297, %v1313
        %v1330 = vadd.f32 %v1298, %v1314
        %v1331 = vadd.f32 %v1299, %v1315
        %v1332 = vadd.f32 %v1300, %v1316
        %v1333 = vadd.f32 %v1301, %v1317
        %v1334 = vadd.f32 %v1302, %v1318
        %v1335 = vadd.f32 %v1303, %v1319
        %v1336 = vadd.f32 %v1304, %v1320
        %v1337 = vadd.f32 %v1305, %v1321
        %v1338 = vadd.f32 %v1306, %v1322
        %v1339 = vadd.f32 %v1307, %v1323
        %v1340 = vadd.f32 %v1308, %v1324
        %v1341 = vadd.f32 %v1309, %v1325
        %v1342 = vadd.f32 %v1310, %v1326
        %v1343 = vadd.f32 %v1311, %v1327
        %v1344 = vmul.f32 %v566, %v599
        %v1345 = vmul.f32 %v567, %v599
        %v1346 = vmul.f32 %v568, %v599
        %v1347 = vmul.f32 %v569, %v599
        %v1348 = vmul.f32 %v570, %v599
        %v1349 = vmul.f32 %v571, %v599
        %v1350 = vmul.f32 %v572, %v599
        %v1351 = vmul.f32 %v573, %v599
        %v1352 = vmul.f32 %v574, %v599
        %v1353 = vmul.f32 %v575, %v599
        %v1354 = vmul.f32 %v576, %v599
        %v1355 = vmul.f32 %v577, %v599
        %v1356 = vmul.f32 %v578, %v599
        %v1357 = vmul.f32 %v579, %v599
        %v1358 = vmul.f32 %v580, %v599
        %v1359 = vmul.f32 %v581, %v599
        %v1360 = vadd.f32 %v1328, %v1344
        %v1361 = vadd.f32 %v1329, %v1345
        %v1362 = vadd.f32 %v1330, %v1346
        %v1363 = vadd.f32 %v1331, %v1347
        %v1364 = vadd.f32 %v1332, %v1348
        %v1365 = vadd.f32 %v1333, %v1349
        %v1366 = vadd.f32 %v1334, %v1350
        %v1367 = vadd.f32 %v1335, %v1351
        %v1368 = vadd.f32 %v1336, %v1352
        %v1369 = vadd.f32 %v1337, %v1353
        %v1370 = vadd.f32 %v1338, %v1354
        %v1371 = vadd.f32 %v1339, %v1355
        %v1372 = vadd.f32 %v1340, %v1356
        %v1373 = vadd.f32 %v1341, %v1357
        %v1374 = vadd.f32 %v1342, %v1358
        %v1375 = vadd.f32 %v1343, %v1359
        %v1376 = vperm.slane %v322, 5
        %v1377 = vmul.f32 %v1360, %v1376
        %v1378 = vmul.f32 %v1361, %v1376
        %v1379 = vmul.f32 %v1362, %v1376
        %v1380 = vmul.f32 %v1363, %v1376
        %v1381 = vmul.f32 %v1364, %v1376
        %v1382 = vmul.f32 %v1365, %v1376
        %v1383 = vmul.f32 %v1366, %v1376
        %v1384 = vmul.f32 %v1367, %v1376
        %v1385 = vmul.f32 %v1368, %v1376
        %v1386 = vmul.f32 %v1369, %v1376
        %v1387 = vmul.f32 %v1370, %v1376
        %v1388 = vmul.f32 %v1371, %v1376
        %v1389 = vmul.f32 %v1372, %v1376
        %v1390 = vmul.f32 %v1373, %v1376
        %v1391 = vmul.f32 %v1374, %v1376
        %v1392 = vmul.f32 %v1375, %v1376
        %v1393 = vmax.f32 %v1377, 0.0
        %v1394 = vmax.f32 %v1378, 0.0
        %v1395 = vmax.f32 %v1379, 0.0
        %v1396 = vmax.f32 %v1380, 0.0
        %v1397 = vmax.f32 %v1381, 0.0
        %v1398 = vmax.f32 %v1382, 0.0
        %v1399 = vmax.f32 %v1383, 0.0
        %v1400 = vmax.f32 %v1384, 0.0
        %v1401 = vmax.f32 %v1385, 0.0
        %v1402 = vmax.f32 %v1386, 0.0
        %v1403 = vmax.f32 %v1387, 0.0
        %v1404 = vmax.f32 %v1388, 0.0
        %v1405 = vmax.f32 %v1389, 0.0
        %v1406 = vmax.f32 %v1390, 0.0
        %v1407 = vmax.f32 %v1391, 0.0
        %v1408 = vmax.f32 %v1392, 0.0
        %v1409 = vmin.f32 %v1393, 1.0
        %v1410 = vmin.f32 %v1394, 1.0
        %v1411 = vmin.f32 %v1395, 1.0
        %v1412 = vmin.f32 %v1396, 1.0
        %v1413 = vmin.f32 %v1397, 1.0
        %v1414 = vmin.f32 %v1398, 1.0
        %v1415 = vmin.f32 %v1399, 1.0
        %v1416 = vmin.f32 %v1400, 1.0
        %v1417 = vmin.f32 %v1401, 1.0
        %v1418 = vmin.f32 %v1402, 1.0
        %v1419 = vmin.f32 %v1403, 1.0
        %v1420 = vmin.f32 %v1404, 1.0
        %v1421 = vmin.f32 %v1405, 1.0
        %v1422 = vmin.f32 %v1406, 1.0
        %v1423 = vmin.f32 %v1407, 1.0
        %v1424 = vmin.f32 %v1408, 1.0
        %v1425 = vmul.f32 %v1409, %v648
        %v1426 = vmul.f32 %v1410, %v648
        %v1427 = vmul.f32 %v1411, %v648
        %v1428 = vmul.f32 %v1412, %v648
        %v1429 = vmul.f32 %v1413, %v648
        %v1430 = vmul.f32 %v1414, %v648
        %v1431 = vmul.f32 %v1415, %v648
        %v1432 = vmul.f32 %v1416, %v648
        %v1433 = vmul.f32 %v1417, %v648
        %v1434 = vmul.f32 %v1418, %v648
        %v1435 = vmul.f32 %v1419, %v648
        %v1436 = vmul.f32 %v1420, %v648
        %v1437 = vmul.f32 %v1421, %v648
        %v1438 = vmul.f32 %v1422, %v648
        %v1439 = vmul.f32 %v1423, %v648
        %v1440 = vmul.f32 %v1424, %v648
        %v1441 = vsub.f32 %v404, %v1425
        %v1442 = vsub.f32 %v405, %v1426
        %v1443 = vsub.f32 %v406, %v1427
        %v1444 = vsub.f32 %v407, %v1428
        %v1445 = vsub.f32 %v408, %v1429
        %v1446 = vsub.f32 %v409, %v1430
        %v1447 = vsub.f32 %v410, %v1431
        %v1448 = vsub.f32 %v411, %v1432
        %v1449 = vsub.f32 %v412, %v1433
        %v1450 = vsub.f32 %v413, %v1434
        %v1451 = vsub.f32 %v414, %v1435
        %v1452 = vsub.f32 %v415, %v1436
        %v1453 = vsub.f32 %v416, %v1437
        %v1454 = vsub.f32 %v417, %v1438
        %v1455 = vsub.f32 %v418, %v1439
        %v1456 = vsub.f32 %v419, %v1440
        %v1457 = vmul.f32 %v1409, %v582
        %v1458 = vmul.f32 %v1410, %v582
        %v1459 = vmul.f32 %v1411, %v582
        %v1460 = vmul.f32 %v1412, %v582
        %v1461 = vmul.f32 %v1413, %v582
        %v1462 = vmul.f32 %v1414, %v582
        %v1463 = vmul.f32 %v1415, %v582
        %v1464 = vmul.f32 %v1416, %v582
        %v1465 = vmul.f32 %v1417, %v582
        %v1466 = vmul.f32 %v1418, %v582
        %v1467 = vmul.f32 %v1419, %v582
        %v1468 = vmul.f32 %v1420, %v582
        %v1469 = vmul.f32 %v1421, %v582
        %v1470 = vmul.f32 %v1422, %v582
        %v1471 = vmul.f32 %v1423, %v582
        %v1472 = vmul.f32 %v1424, %v582
        %v1473 = vsub.f32 %v485, %v1457
        %v1474 = vsub.f32 %v486, %v1458
        %v1475 = vsub.f32 %v487, %v1459
        %v1476 = vsub.f32 %v488, %v1460
        %v1477 = vsub.f32 %v489, %v1461
        %v1478 = vsub.f32 %v490, %v1462
        %v1479 = vsub.f32 %v491, %v1463
        %v1480 = vsub.f32 %v492, %v1464
        %v1481 = vsub.f32 %v493, %v1465
        %v1482 = vsub.f32 %v494, %v1466
        %v1483 = vsub.f32 %v495, %v1467
        %v1484 = vsub.f32 %v496, %v1468
        %v1485 = vsub.f32 %v497, %v1469
        %v1486 = vsub.f32 %v498, %v1470
        %v1487 = vsub.f32 %v499, %v1471
        %v1488 = vsub.f32 %v500, %v1472
        %v1489 = vmul.f32 %v1409, %v599
        %v1490 = vmul.f32 %v1410, %v599
        %v1491 = vmul.f32 %v1411, %v599
        %v1492 = vmul.f32 %v1412, %v599
        %v1493 = vmul.f32 %v1413, %v599
        %v1494 = vmul.f32 %v1414, %v599
        %v1495 = vmul.f32 %v1415, %v599
        %v1496 = vmul.f32 %v1416, %v599
        %v1497 = vmul.f32 %v1417, %v599
        %v1498 = vmul.f32 %v1418, %v599
        %v1499 = vmul.f32 %v1419, %v599
        %v1500 = vmul.f32 %v1420, %v599
        %v1501 = vmul.f32 %v1421, %v599
        %v1502 = vmul.f32 %v1422, %v599
        %v1503 = vmul.f32 %v1423, %v599
        %v1504 = vmul.f32 %v1424, %v599
        %v1505 = vsub.f32 %v566, %v1489
        %v1506 = vsub.f32 %v567, %v1490
        %v1507 = vsub.f32 %v568, %v1491
        %v1508 = vsub.f32 %v569, %v1492
        %v1509 = vsub.f32 %v570, %v1493
        %v1510 = vsub.f32 %v571, %v1494
        %v1511 = vsub.f32 %v572, %v1495
        %v1512 = vsub.f32 %v573, %v1496
        %v1513 = vsub.f32 %v574, %v1497
        %v1514 = vsub.f32 %v575, %v1498
        %v1515 = vsub.f32 %v576, %v1499
        %v1516 = vsub.f32 %v577, %v1500
        %v1517 = vsub.f32 %v578, %v1501
        %v1518 = vsub.f32 %v579, %v1502
        %v1519 = vsub.f32 %v580, %v1503
        %v1520 = vsub.f32 %v581, %v1504
        %v1521 = vmul.f32 %v1441, %v1441
        %v1522 = vmul.f32 %v1442, %v1442
        %v1523 = vmul.f32 %v1443, %v1443
        %v1524 = vmul.f32 %v1444, %v1444
        %v1525 = vmul.f32 %v1445, %v1445
        %v1526 = vmul.f32 %v1446, %v1446
        %v1527 = vmul.f32 %v1447, %v1447
        %v1528 = vmul.f32 %v1448, %v1448
        %v1529 = vmul.f32 %v1449, %v1449
        %v1530 = vmul.f32 %v1450, %v1450
        %v1531 = vmul.f32 %v1451, %v1451
        %v1532 = vmul.f32 %v1452, %v1452
        %v1533 = vmul.f32 %v1453, %v1453
        %v1534 = vmul.f32 %v1454, %v1454
        %v1535 = vmul.f32 %v1455, %v1455
        %v1536 = vmul.f32 %v1456, %v1456
        %v1537 = vmul.f32 %v1473, %v1473
        %v1538 = vmul.f32 %v1474, %v1474
        %v1539 = vmul.f32 %v1475, %v1475
        %v1540 = vmul.f32 %v1476, %v1476
        %v1541 = vmul.f32 %v1477, %v1477
        %v1542 = vmul.f32 %v1478, %v1478
        %v1543 = vmul.f32 %v1479, %v1479
        %v1544 = vmul.f32 %v1480, %v1480
        %v1545 = vmul.f32 %v1481, %v1481
        %v1546 = vmul.f32 %v1482, %v1482
        %v1547 = vmul.f32 %v1483, %v1483
        %v1548 = vmul.f32 %v1484, %v1484
        %v1549 = vmul.f32 %v1485, %v1485
        %v1550 = vmul.f32 %v1486, %v1486
        %v1551 = vmul.f32 %v1487, %v1487
        %v1552 = vmul.f32 %v1488, %v1488
        %v1553 = vadd.f32 %v1521, %v1537
        %v1554 = vadd.f32 %v1522, %v1538
        %v1555 = vadd.f32 %v1523, %v1539
        %v1556 = vadd.f32 %v1524, %v1540
        %v1557 = vadd.f32 %v1525, %v1541
        %v1558 = vadd.f32 %v1526, %v1542
        %v1559 = vadd.f32 %v1527, %v1543
        %v1560 = vadd.f32 %v1528, %v1544
        %v1561 = vadd.f32 %v1529, %v1545
        %v1562 = vadd.f32 %v1530, %v1546
        %v1563 = vadd.f32 %v1531, %v1547
        %v1564 = vadd.f32 %v1532, %v1548
        %v1565 = vadd.f32 %v1533, %v1549
        %v1566 = vadd.f32 %v1534, %v1550
        %v1567 = vadd.f32 %v1535, %v1551
        %v1568 = vadd.f32 %v1536, %v1552
        %v1569 = vmul.f32 %v1505, %v1505
        %v1570 = vmul.f32 %v1506, %v1506
        %v1571 = vmul.f32 %v1507, %v1507
        %v1572 = vmul.f32 %v1508, %v1508
        %v1573 = vmul.f32 %v1509, %v1509
        %v1574 = vmul.f32 %v1510, %v1510
        %v1575 = vmul.f32 %v1511, %v1511
        %v1576 = vmul.f32 %v1512, %v1512
        %v1577 = vmul.f32 %v1513, %v1513
        %v1578 = vmul.f32 %v1514, %v1514
        %v1579 = vmul.f32 %v1515, %v1515
        %v1580 = vmul.f32 %v1516, %v1516
        %v1581 = vmul.f32 %v1517, %v1517
        %v1582 = vmul.f32 %v1518, %v1518
        %v1583 = vmul.f32 %v1519, %v1519
        %v1584 = vmul.f32 %v1520, %v1520
        %v1585 = vadd.f32 %v1553, %v1569
        %v1586 = vadd.f32 %v1554, %v1570
        %v1587 = vadd.f32 %v1555, %v1571
        %v1588 = vadd.f32 %v1556, %v1572
        %v1589 = vadd.f32 %v1557, %v1573
        %v1590 = vadd.f32 %v1558, %v1574
        %v1591 = vadd.f32 %v1559, %v1575
        %v1592 = vadd.f32 %v1560, %v1576
        %v1593 = vadd.f32 %v1561, %v1577
        %v1594 = vadd.f32 %v1562, %v1578
        %v1595 = vadd.f32 %v1563, %v1579
        %v1596 = vadd.f32 %v1564, %v1580
        %v1597 = vadd.f32 %v1565, %v1581
        %v1598 = vadd.f32 %v1566, %v1582
        %v1599 = vadd.f32 %v1567, %v1583
        %v1600 = vadd.f32 %v1568, %v1584
        %v1601 = vmul.f32 %v404, %v879
        %v1602 = vmul.f32 %v405, %v879
        %v1603 = vmul.f32 %v406, %v879
        %v1604 = vmul.f32 %v407, %v879
        %v1605 = vmul.f32 %v408, %v879
        %v1606 = vmul.f32 %v409, %v879
        %v1607 = vmul.f32 %v410, %v879
        %v1608 = vmul.f32 %v411, %v879
        %v1609 = vmul.f32 %v412, %v879
        %v1610 = vmul.f32 %v413, %v879
        %v1611 = vmul.f32 %v414, %v879
        %v1612 = vmul.f32 %v415, %v879
        %v1613 = vmul.f32 %v416, %v879
        %v1614 = vmul.f32 %v417, %v879
        %v1615 = vmul.f32 %v418, %v879
        %v1616 = vmul.f32 %v419, %v879
        %v1617 = vmul.f32 %v485, %v846
        %v1618 = vmul.f32 %v486, %v846
        %v1619 = vmul.f32 %v487, %v846
        %v1620 = vmul.f32 %v488, %v846
        %v1621 = vmul.f32 %v489, %v846
        %v1622 = vmul.f32 %v490, %v846
        %v1623 = vmul.f32 %v491, %v846
        %v1624 = vmul.f32 %v492, %v846
        %v1625 = vmul.f32 %v493, %v846
        %v1626 = vmul.f32 %v494, %v846
        %v1627 = vmul.f32 %v495, %v846
        %v1628 = vmul.f32 %v496, %v846
        %v1629 = vmul.f32 %v497, %v846
        %v1630 = vmul.f32 %v498, %v846
        %v1631 = vmul.f32 %v499, %v846
        %v1632 = vmul.f32 %v500, %v846
        %v1633 = vadd.f32 %v1601, %v1617
        %v1634 = vadd.f32 %v1602, %v1618
        %v1635 = vadd.f32 %v1603, %v1619
        %v1636 = vadd.f32 %v1604, %v1620
        %v1637 = vadd.f32 %v1605, %v1621
        %v1638 = vadd.f32 %v1606, %v1622
        %v1639 = vadd.f32 %v1607, %v1623
        %v1640 = vadd.f32 %v1608, %v1624
        %v1641 = vadd.f32 %v1609, %v1625
        %v1642 = vadd.f32 %v1610, %v1626
        %v1643 = vadd.f32 %v1611, %v1627
        %v1644 = vadd.f32 %v1612, %v1628
        %v1645 = vadd.f32 %v1613, %v1629
        %v1646 = vadd.f32 %v1614, %v1630
        %v1647 = vadd.f32 %v1615, %v1631
        %v1648 = vadd.f32 %v1616, %v1632
        %v1649 = vmul.f32 %v566, %v829
        %v1650 = vmul.f32 %v567, %v829
        %v1651 = vmul.f32 %v568, %v829
        %v1652 = vmul.f32 %v569, %v829
        %v1653 = vmul.f32 %v570, %v829
        %v1654 = vmul.f32 %v571, %v829
        %v1655 = vmul.f32 %v572, %v829
        %v1656 = vmul.f32 %v573, %v829
        %v1657 = vmul.f32 %v574, %v829
        %v1658 = vmul.f32 %v575, %v829
        %v1659 = vmul.f32 %v576, %v829
        %v1660 = vmul.f32 %v577, %v829
        %v1661 = vmul.f32 %v578, %v829
        %v1662 = vmul.f32 %v579, %v829
        %v1663 = vmul.f32 %v580, %v829
        %v1664 = vmul.f32 %v581, %v829
        %v1665 = vadd.f32 %v1633, %v1649
        %v1666 = vadd.f32 %v1634, %v1650
        %v1667 = vadd.f32 %v1635, %v1651
        %v1668 = vadd.f32 %v1636, %v1652
        %v1669 = vadd.f32 %v1637, %v1653
        %v1670 = vadd.f32 %v1638, %v1654
        %v1671 = vadd.f32 %v1639, %v1655
        %v1672 = vadd.f32 %v1640, %v1656
        %v1673 = vadd.f32 %v1641, %v1657
        %v1674 = vadd.f32 %v1642, %v1658
        %v1675 = vadd.f32 %v1643, %v1659
        %v1676 = vadd.f32 %v1644, %v1660
        %v1677 = vadd.f32 %v1645, %v1661
        %v1678 = vadd.f32 %v1646, %v1662
        %v1679 = vadd.f32 %v1647, %v1663
        %v1680 = vadd.f32 %v1648, %v1664
        %v1681 = vperm.slane %v322, 6
        %v1682 = vmul.f32 %v1665, %v1681
        %v1683 = vmul.f32 %v1666, %v1681
        %v1684 = vmul.f32 %v1667, %v1681
        %v1685 = vmul.f32 %v1668, %v1681
        %v1686 = vmul.f32 %v1669, %v1681
        %v1687 = vmul.f32 %v1670, %v1681
        %v1688 = vmul.f32 %v1671, %v1681
        %v1689 = vmul.f32 %v1672, %v1681
        %v1690 = vmul.f32 %v1673, %v1681
        %v1691 = vmul.f32 %v1674, %v1681
        %v1692 = vmul.f32 %v1675, %v1681
        %v1693 = vmul.f32 %v1676, %v1681
        %v1694 = vmul.f32 %v1677, %v1681
        %v1695 = vmul.f32 %v1678, %v1681
        %v1696 = vmul.f32 %v1679, %v1681
        %v1697 = vmul.f32 %v1680, %v1681
        %v1698 = vmax.f32 %v1682, 0.0
        %v1699 = vmax.f32 %v1683, 0.0
        %v1700 = vmax.f32 %v1684, 0.0
        %v1701 = vmax.f32 %v1685, 0.0
        %v1702 = vmax.f32 %v1686, 0.0
        %v1703 = vmax.f32 %v1687, 0.0
        %v1704 = vmax.f32 %v1688, 0.0
        %v1705 = vmax.f32 %v1689, 0.0
        %v1706 = vmax.f32 %v1690, 0.0
        %v1707 = vmax.f32 %v1691, 0.0
        %v1708 = vmax.f32 %v1692, 0.0
        %v1709 = vmax.f32 %v1693, 0.0
        %v1710 = vmax.f32 %v1694, 0.0
        %v1711 = vmax.f32 %v1695, 0.0
        %v1712 = vmax.f32 %v1696, 0.0
        %v1713 = vmax.f32 %v1697, 0.0
        %v1714 = vmin.f32 %v1698, 1.0
        %v1715 = vmin.f32 %v1699, 1.0
        %v1716 = vmin.f32 %v1700, 1.0
        %v1717 = vmin.f32 %v1701, 1.0
        %v1718 = vmin.f32 %v1702, 1.0
        %v1719 = vmin.f32 %v1703, 1.0
        %v1720 = vmin.f32 %v1704, 1.0
        %v1721 = vmin.f32 %v1705, 1.0
        %v1722 = vmin.f32 %v1706, 1.0
        %v1723 = vmin.f32 %v1707, 1.0
        %v1724 = vmin.f32 %v1708, 1.0
        %v1725 = vmin.f32 %v1709, 1.0
        %v1726 = vmin.f32 %v1710, 1.0
        %v1727 = vmin.f32 %v1711, 1.0
        %v1728 = vmin.f32 %v1712, 1.0
        %v1729 = vmin.f32 %v1713, 1.0
        %v1730 = vmul.f32 %v1714, %v879
        %v1731 = vmul.f32 %v1715, %v879
        %v1732 = vmul.f32 %v1716, %v879
        %v1733 = vmul.f32 %v1717, %v879
        %v1734 = vmul.f32 %v1718, %v879
        %v1735 = vmul.f32 %v1719, %v879
        %v1736 = vmul.f32 %v1720, %v879
        %v1737 = vmul.f32 %v1721, %v879
        %v1738 = vmul.f32 %v1722, %v879
        %v1739 = vmul.f32 %v1723, %v879
        %v1740 = vmul.f32 %v1724, %v879
        %v1741 = vmul.f32 %v1725, %v879
        %v1742 = vmul.f32 %v1726, %v879
        %v1743 = vmul.f32 %v1727, %v879
        %v1744 = vmul.f32 %v1728, %v879
        %v1745 = vmul.f32 %v1729, %v879
        %v1746 = vsub.f32 %v404, %v1730
        %v1747 = vsub.f32 %v405, %v1731
        %v1748 = vsub.f32 %v406, %v1732
        %v1749 = vsub.f32 %v407, %v1733
        %v1750 = vsub.f32 %v408, %v1734
        %v1751 = vsub.f32 %v409, %v1735
        %v1752 = vsub.f32 %v410, %v1736
        %v1753 = vsub.f32 %v411, %v1737
        %v1754 = vsub.f32 %v412, %v1738
        %v1755 = vsub.f32 %v413, %v1739
        %v1756 = vsub.f32 %v414, %v1740
        %v1757 = vsub.f32 %v415, %v1741
        %v1758 = vsub.f32 %v416, %v1742
        %v1759 = vsub.f32 %v417, %v1743
        %v1760 = vsub.f32 %v418, %v1744
        %v1761 = vsub.f32 %v419, %v1745
        %v1762 = vmul.f32 %v1714, %v846
        %v1763 = vmul.f32 %v1715, %v846
        %v1764 = vmul.f32 %v1716, %v846
        %v1765 = vmul.f32 %v1717, %v846
        %v1766 = vmul.f32 %v1718, %v846
        %v1767 = vmul.f32 %v1719, %v846
        %v1768 = vmul.f32 %v1720, %v846
        %v1769 = vmul.f32 %v1721, %v846
        %v1770 = vmul.f32 %v1722, %v846
        %v1771 = vmul.f32 %v1723, %v846
        %v1772 = vmul.f32 %v1724, %v846
        %v1773 = vmul.f32 %v1725, %v846
        %v1774 = vmul.f32 %v1726, %v846
        %v1775 = vmul.f32 %v1727, %v846
        %v1776 = vmul.f32 %v1728, %v846
        %v1777 = vmul.f32 %v1729, %v846
        %v1778 = vsub.f32 %v485, %v1762
        %v1779 = vsub.f32 %v486, %v1763
        %v1780 = vsub.f32 %v487, %v1764
        %v1781 = vsub.f32 %v488, %v1765
        %v1782 = vsub.f32 %v489, %v1766
        %v1783 = vsub.f32 %v490, %v1767
        %v1784 = vsub.f32 %v491, %v1768
        %v1785 = vsub.f32 %v492, %v1769
        %v1786 = vsub.f32 %v493, %v1770
        %v1787 = vsub.f32 %v494, %v1771
        %v1788 = vsub.f32 %v495, %v1772
        %v1789 = vsub.f32 %v496, %v1773
        %v1790 = vsub.f32 %v497, %v1774
        %v1791 = vsub.f32 %v498, %v1775
        %v1792 = vsub.f32 %v499, %v1776
        %v1793 = vsub.f32 %v500, %v1777
        %v1794 = vmul.f32 %v1714, %v829
        %v1795 = vmul.f32 %v1715, %v829
        %v1796 = vmul.f32 %v1716, %v829
        %v1797 = vmul.f32 %v1717, %v829
        %v1798 = vmul.f32 %v1718, %v829
        %v1799 = vmul.f32 %v1719, %v829
        %v1800 = vmul.f32 %v1720, %v829
        %v1801 = vmul.f32 %v1721, %v829
        %v1802 = vmul.f32 %v1722, %v829
        %v1803 = vmul.f32 %v1723, %v829
        %v1804 = vmul.f32 %v1724, %v829
        %v1805 = vmul.f32 %v1725, %v829
        %v1806 = vmul.f32 %v1726, %v829
        %v1807 = vmul.f32 %v1727, %v829
        %v1808 = vmul.f32 %v1728, %v829
        %v1809 = vmul.f32 %v1729, %v829
        %v1810 = vsub.f32 %v566, %v1794
        %v1811 = vsub.f32 %v567, %v1795
        %v1812 = vsub.f32 %v568, %v1796
        %v1813 = vsub.f32 %v569, %v1797
        %v1814 = vsub.f32 %v570, %v1798
        %v1815 = vsub.f32 %v571, %v1799
        %v1816 = vsub.f32 %v572, %v1800
        %v1817 = vsub.f32 %v573, %v1801
        %v1818 = vsub.f32 %v574, %v1802
        %v1819 = vsub.f32 %v575, %v1803
        %v1820 = vsub.f32 %v576, %v1804
        %v1821 = vsub.f32 %v577, %v1805
        %v1822 = vsub.f32 %v578, %v1806
        %v1823 = vsub.f32 %v579, %v1807
        %v1824 = vsub.f32 %v580, %v1808
        %v1825 = vsub.f32 %v581, %v1809
        %v1826 = vmul.f32 %v1746, %v1746
        %v1827 = vmul.f32 %v1747, %v1747
        %v1828 = vmul.f32 %v1748, %v1748
        %v1829 = vmul.f32 %v1749, %v1749
        %v1830 = vmul.f32 %v1750, %v1750
        %v1831 = vmul.f32 %v1751, %v1751
        %v1832 = vmul.f32 %v1752, %v1752
        %v1833 = vmul.f32 %v1753, %v1753
        %v1834 = vmul.f32 %v1754, %v1754
        %v1835 = vmul.f32 %v1755, %v1755
        %v1836 = vmul.f32 %v1756, %v1756
        %v1837 = vmul.f32 %v1757, %v1757
        %v1838 = vmul.f32 %v1758, %v1758
        %v1839 = vmul.f32 %v1759, %v1759
        %v1840 = vmul.f32 %v1760, %v1760
        %v1841 = vmul.f32 %v1761, %v1761
        %v1842 = vmul.f32 %v1778, %v1778
        %v1843 = vmul.f32 %v1779, %v1779
        %v1844 = vmul.f32 %v1780, %v1780
        %v1845 = vmul.f32 %v1781, %v1781
        %v1846 = vmul.f32 %v1782, %v1782
        %v1847 = vmul.f32 %v1783, %v1783
        %v1848 = vmul.f32 %v1784, %v1784
        %v1849 = vmul.f32 %v1785, %v1785
        %v1850 = vmul.f32 %v1786, %v1786
        %v1851 = vmul.f32 %v1787, %v1787
        %v1852 = vmul.f32 %v1788, %v1788
        %v1853 = vmul.f32 %v1789, %v1789
        %v1854 = vmul.f32 %v1790, %v1790
        %v1855 = vmul.f32 %v1791, %v1791
        %v1856 = vmul.f32 %v1792, %v1792
        %v1857 = vmul.f32 %v1793, %v1793
        %v1858 = vadd.f32 %v1826, %v1842
        %v1859 = vadd.f32 %v1827, %v1843
        %v1860 = vadd.f32 %v1828, %v1844
        %v1861 = vadd.f32 %v1829, %v1845
        %v1862 = vadd.f32 %v1830, %v1846
        %v1863 = vadd.f32 %v1831, %v1847
        %v1864 = vadd.f32 %v1832, %v1848
        %v1865 = vadd.f32 %v1833, %v1849
        %v1866 = vadd.f32 %v1834, %v1850
        %v1867 = vadd.f32 %v1835, %v1851
        %v1868 = vadd.f32 %v1836, %v1852
        %v1869 = vadd.f32 %v1837, %v1853
        %v1870 = vadd.f32 %v1838, %v1854
        %v1871 = vadd.f32 %v1839, %v1855
        %v1872 = vadd.f32 %v1840, %v1856
        %v1873 = vadd.f32 %v1841, %v1857
        %v1874 = vmul.f32 %v1810, %v1810
        %v1875 = vmul.f32 %v1811, %v1811
        %v1876 = vmul.f32 %v1812, %v1812
        %v1877 = vmul.f32 %v1813, %v1813
        %v1878 = vmul.f32 %v1814, %v1814
        %v1879 = vmul.f32 %v1815, %v1815
        %v1880 = vmul.f32 %v1816, %v1816
        %v1881 = vmul.f32 %v1817, %v1817
        %v1882 = vmul.f32 %v1818, %v1818
        %v1883 = vmul.f32 %v1819, %v1819
        %v1884 = vmul.f32 %v1820, %v1820
        %v1885 = vmul.f32 %v1821, %v1821
        %v1886 = vmul.f32 %v1822, %v1822
        %v1887 = vmul.f32 %v1823, %v1823
        %v1888 = vmul.f32 %v1824, %v1824
        %v1889 = vmul.f32 %v1825, %v1825
        %v1890 = vadd.f32 %v1858, %v1874
        %v1891 = vadd.f32 %v1859, %v1875
        %v1892 = vadd.f32 %v1860, %v1876
        %v1893 = vadd.f32 %v1861, %v1877
        %v1894 = vadd.f32 %v1862, %v1878
        %v1895 = vadd.f32 %v1863, %v1879
        %v1896 = vadd.f32 %v1864, %v1880
        %v1897 = vadd.f32 %v1865, %v1881
        %v1898 = vadd.f32 %v1866, %v1882
        %v1899 = vadd.f32 %v1867, %v1883
        %v1900 = vadd.f32 %v1868, %v1884
        %v1901 = vadd.f32 %v1869, %v1885
        %v1902 = vadd.f32 %v1870, %v1886
        %v1903 = vadd.f32 %v1871, %v1887
        %v1904 = vadd.f32 %v1872, %v1888
        %v1905 = vadd.f32 %v1873, %v1889
        %v1906 = vsub.f32 %v404, %v648
        %v1907 = vsub.f32 %v405, %v648
        %v1908 = vsub.f32 %v406, %v648
        %v1909 = vsub.f32 %v407, %v648
        %v1910 = vsub.f32 %v408, %v648
        %v1911 = vsub.f32 %v409, %v648
        %v1912 = vsub.f32 %v410, %v648
        %v1913 = vsub.f32 %v411, %v648
        %v1914 = vsub.f32 %v412, %v648
        %v1915 = vsub.f32 %v413, %v648
        %v1916 = vsub.f32 %v414, %v648
        %v1917 = vsub.f32 %v415, %v648
        %v1918 = vsub.f32 %v416, %v648
        %v1919 = vsub.f32 %v417, %v648
        %v1920 = vsub.f32 %v418, %v648
        %v1921 = vsub.f32 %v419, %v648
        %v1922 = vsub.f32 %v485, %v582
        %v1923 = vsub.f32 %v486, %v582
        %v1924 = vsub.f32 %v487, %v582
        %v1925 = vsub.f32 %v488, %v582
        %v1926 = vsub.f32 %v489, %v582
        %v1927 = vsub.f32 %v490, %v582
        %v1928 = vsub.f32 %v491, %v582
        %v1929 = vsub.f32 %v492, %v582
        %v1930 = vsub.f32 %v493, %v582
        %v1931 = vsub.f32 %v494, %v582
        %v1932 = vsub.f32 %v495, %v582
        %v1933 = vsub.f32 %v496, %v582
        %v1934 = vsub.f32 %v497, %v582
        %v1935 = vsub.f32 %v498, %v582
        %v1936 = vsub.f32 %v499, %v582
        %v1937 = vsub.f32 %v500, %v582
        %v1938 = vsub.f32 %v566, %v599
        %v1939 = vsub.f32 %v567, %v599
        %v1940 = vsub.f32 %v568, %v599
        %v1941 = vsub.f32 %v569, %v599
        %v1942 = vsub.f32 %v570, %v599
        %v1943 = vsub.f32 %v571, %v599
        %v1944 = vsub.f32 %v572, %v599
        %v1945 = vsub.f32 %v573, %v599
        %v1946 = vsub.f32 %v574, %v599
        %v1947 = vsub.f32 %v575, %v599
        %v1948 = vsub.f32 %v576, %v599
        %v1949 = vsub.f32 %v577, %v599
        %v1950 = vsub.f32 %v578, %v599
        %v1951 = vsub.f32 %v579, %v599
        %v1952 = vsub.f32 %v580, %v599
        %v1953 = vsub.f32 %v581, %v599
        %v1955 = vrot.slane %v321, 5
        %v1957 = vsub.f32 %v321, %v1955
        %v1958 = vsub.f32 %v322, %v1955
        %v1959 = vperm.slane %v1957, 6
        %v1960 = vmul.f32 %v1906, %v1959
        %v1961 = vmul.f32 %v1907, %v1959
        %v1962 = vmul.f32 %v1908, %v1959
        %v1963 = vmul.f32 %v1909, %v1959
        %v1964 = vmul.f32 %v1910, %v1959
        %v1965 = vmul.f32 %v1911, %v1959
        %v1966 = vmul.f32 %v1912, %v1959
        %v1967 = vmul.f32 %v1913, %v1959
        %v1968 = vmul.f32 %v1914, %v1959
        %v1969 = vmul.f32 %v1915, %v1959
        %v1970 = vmul.f32 %v1916, %v1959
        %v1971 = vmul.f32 %v1917, %v1959
        %v1972 = vmul.f32 %v1918, %v1959
        %v1973 = vmul.f32 %v1919, %v1959
        %v1974 = vmul.f32 %v1920, %v1959
        %v1975 = vmul.f32 %v1921, %v1959
        %v1976 = vperm.slane %v1957, 7
        %v1977 = vmul.f32 %v1922, %v1976
        %v1978 = vmul.f32 %v1923, %v1976
        %v1979 = vmul.f32 %v1924, %v1976
        %v1980 = vmul.f32 %v1925, %v1976
        %v1981 = vmul.f32 %v1926, %v1976
        %v1982 = vmul.f32 %v1927, %v1976
        %v1983 = vmul.f32 %v1928, %v1976
        %v1984 = vmul.f32 %v1929, %v1976
        %v1985 = vmul.f32 %v1930, %v1976
        %v1986 = vmul.f32 %v1931, %v1976
        %v1987 = vmul.f32 %v1932, %v1976
        %v1988 = vmul.f32 %v1933, %v1976
        %v1989 = vmul.f32 %v1934, %v1976
        %v1990 = vmul.f32 %v1935, %v1976
        %v1991 = vmul.f32 %v1936, %v1976
        %v1992 = vmul.f32 %v1937, %v1976
        %v1993 = vadd.f32 %v1960, %v1977
        %v1994 = vadd.f32 %v1961, %v1978
        %v1995 = vadd.f32 %v1962, %v1979
        %v1996 = vadd.f32 %v1963, %v1980
        %v1997 = vadd.f32 %v1964, %v1981
        %v1998 = vadd.f32 %v1965, %v1982
        %v1999 = vadd.f32 %v1966, %v1983
        %v2000 = vadd.f32 %v1967, %v1984
        %v2001 = vadd.f32 %v1968, %v1985
        %v2002 = vadd.f32 %v1969, %v1986
        %v2003 = vadd.f32 %v1970, %v1987
        %v2004 = vadd.f32 %v1971, %v1988
        %v2005 = vadd.f32 %v1972, %v1989
        %v2006 = vadd.f32 %v1973, %v1990
        %v2007 = vadd.f32 %v1974, %v1991
        %v2008 = vadd.f32 %v1975, %v1992
        %v2009 = vperm.slane %v1958, 0
        %v2010 = vmul.f32 %v1938, %v2009
        %v2011 = vmul.f32 %v1939, %v2009
        %v2012 = vmul.f32 %v1940, %v2009
        %v2013 = vmul.f32 %v1941, %v2009
        %v2014 = vmul.f32 %v1942, %v2009
        %v2015 = vmul.f32 %v1943, %v2009
        %v2016 = vmul.f32 %v1944, %v2009
        %v2017 = vmul.f32 %v1945, %v2009
        %v2018 = vmul.f32 %v1946, %v2009
        %v2019 = vmul.f32 %v1947, %v2009
        %v2020 = vmul.f32 %v1948, %v2009
        %v2021 = vmul.f32 %v1949, %v2009
        %v2022 = vmul.f32 %v1950, %v2009
        %v2023 = vmul.f32 %v1951, %v2009
        %v2024 = vmul.f32 %v1952, %v2009
        %v2025 = vmul.f32 %v1953, %v2009
        %v2026 = vadd.f32 %v1993, %v2010
        %v2027 = vadd.f32 %v1994, %v2011
        %v2028 = vadd.f32 %v1995, %v2012
        %v2029 = vadd.f32 %v1996, %v2013
        %v2030 = vadd.f32 %v1997, %v2014
        %v2031 = vadd.f32 %v1998, %v2015
        %v2032 = vadd.f32 %v1999, %v2016
        %v2033 = vadd.f32 %v2000, %v2017
        %v2034 = vadd.f32 %v2001, %v2018
        %v2035 = vadd.f32 %v2002, %v2019
        %v2036 = vadd.f32 %v2003, %v2020
        %v2037 = vadd.f32 %v2004, %v2021
        %v2038 = vadd.f32 %v2005, %v2022
        %v2039 = vadd.f32 %v2006, %v2023
        %v2040 = vadd.f32 %v2007, %v2024
        %v2041 = vadd.f32 %v2008, %v2025
        %v2042 = vperm.slane %v322, 7
        %v2043 = vmul.f32 %v2026, %v2042
        %v2044 = vmul.f32 %v2027, %v2042
        %v2045 = vmul.f32 %v2028, %v2042
        %v2046 = vmul.f32 %v2029, %v2042
        %v2047 = vmul.f32 %v2030, %v2042
        %v2048 = vmul.f32 %v2031, %v2042
        %v2049 = vmul.f32 %v2032, %v2042
        %v2050 = vmul.f32 %v2033, %v2042
        %v2051 = vmul.f32 %v2034, %v2042
        %v2052 = vmul.f32 %v2035, %v2042
        %v2053 = vmul.f32 %v2036, %v2042
        %v2054 = vmul.f32 %v2037, %v2042
        %v2055 = vmul.f32 %v2038, %v2042
        %v2056 = vmul.f32 %v2039, %v2042
        %v2057 = vmul.f32 %v2040, %v2042
        %v2058 = vmul.f32 %v2041, %v2042
        %v2059 = vmax.f32 %v2043, 0.0
        %v2060 = vmax.f32 %v2044, 0.0
        %v2061 = vmax.f32 %v2045, 0.0
        %v2062 = vmax.f32 %v2046, 0.0
        %v2063 = vmax.f32 %v2047, 0.0
        %v2064 = vmax.f32 %v2048, 0.0
        %v2065 = vmax.f32 %v2049, 0.0
        %v2066 = vmax.f32 %v2050, 0.0
        %v2067 = vmax.f32 %v2051, 0.0
        %v2068 = vmax.f32 %v2052, 0.0
        %v2069 = vmax.f32 %v2053, 0.0
        %v2070 = vmax.f32 %v2054, 0.0
        %v2071 = vmax.f32 %v2055, 0.0
        %v2072 = vmax.f32 %v2056, 0.0
        %v2073 = vmax.f32 %v2057, 0.0
        %v2074 = vmax.f32 %v2058, 0.0
        %v2075 = vmin.f32 %v2059, 1.0
        %v2076 = vmin.f32 %v2060, 1.0
        %v2077 = vmin.f32 %v2061, 1.0
        %v2078 = vmin.f32 %v2062, 1.0
        %v2079 = vmin.f32 %v2063, 1.0
        %v2080 = vmin.f32 %v2064, 1.0
        %v2081 = vmin.f32 %v2065, 1.0
        %v2082 = vmin.f32 %v2066, 1.0
        %v2083 = vmin.f32 %v2067, 1.0
        %v2084 = vmin.f32 %v2068, 1.0
        %v2085 = vmin.f32 %v2069, 1.0
        %v2086 = vmin.f32 %v2070, 1.0
        %v2087 = vmin.f32 %v2071, 1.0
        %v2088 = vmin.f32 %v2072, 1.0
        %v2089 = vmin.f32 %v2073, 1.0
        %v2090 = vmin.f32 %v2074, 1.0
        %v2091 = vmul.f32 %v2075, %v1959
        %v2092 = vmul.f32 %v2076, %v1959
        %v2093 = vmul.f32 %v2077, %v1959
        %v2094 = vmul.f32 %v2078, %v1959
        %v2095 = vmul.f32 %v2079, %v1959
        %v2096 = vmul.f32 %v2080, %v1959
        %v2097 = vmul.f32 %v2081, %v1959
        %v2098 = vmul.f32 %v2082, %v1959
        %v2099 = vmul.f32 %v2083, %v1959
        %v2100 = vmul.f32 %v2084, %v1959
        %v2101 = vmul.f32 %v2085, %v1959
        %v2102 = vmul.f32 %v2086, %v1959
        %v2103 = vmul.f32 %v2087, %v1959
        %v2104 = vmul.f32 %v2088, %v1959
        %v2105 = vmul.f32 %v2089, %v1959
        %v2106 = vmul.f32 %v2090, %v1959
        %v2107 = vsub.f32 %v1906, %v2091
        %v2108 = vsub.f32 %v1907, %v2092
        %v2109 = vsub.f32 %v1908, %v2093
        %v2110 = vsub.f32 %v1909, %v2094
        %v2111 = vsub.f32 %v1910, %v2095
        %v2112 = vsub.f32 %v1911, %v2096
        %v2113 = vsub.f32 %v1912, %v2097
        %v2114 = vsub.f32 %v1913, %v2098
        %v2115 = vsub.f32 %v1914, %v2099
        %v2116 = vsub.f32 %v1915, %v2100
        %v2117 = vsub.f32 %v1916, %v2101
        %v2118 = vsub.f32 %v1917, %v2102
        %v2119 = vsub.f32 %v1918, %v2103
        %v2120 = vsub.f32 %v1919, %v2104
        %v2121 = vsub.f32 %v1920, %v2105
        %v2122 = vsub.f32 %v1921, %v2106
        %v2123 = vmul.f32 %v2075, %v1976
        %v2124 = vmul.f32 %v2076, %v1976
        %v2125 = vmul.f32 %v2077, %v1976
        %v2126 = vmul.f32 %v2078, %v1976
        %v2127 = vmul.f32 %v2079, %v1976
        %v2128 = vmul.f32 %v2080, %v1976
        %v2129 = vmul.f32 %v2081, %v1976
        %v2130 = vmul.f32 %v2082, %v1976
        %v2131 = vmul.f32 %v2083, %v1976
        %v2132 = vmul.f32 %v2084, %v1976
        %v2133 = vmul.f32 %v2085, %v1976
        %v2134 = vmul.f32 %v2086, %v1976
        %v2135 = vmul.f32 %v2087, %v1976
        %v2136 = vmul.f32 %v2088, %v1976
        %v2137 = vmul.f32 %v2089, %v1976
        %v2138 = vmul.f32 %v2090, %v1976
        %v2139 = vsub.f32 %v1922, %v2123
        %v2140 = vsub.f32 %v1923, %v2124
        %v2141 = vsub.f32 %v1924, %v2125
        %v2142 = vsub.f32 %v1925, %v2126
        %v2143 = vsub.f32 %v1926, %v2127
        %v2144 = vsub.f32 %v1927, %v2128
        %v2145 = vsub.f32 %v1928, %v2129
        %v2146 = vsub.f32 %v1929, %v2130
        %v2147 = vsub.f32 %v1930, %v2131
        %v2148 = vsub.f32 %v1931, %v2132
        %v2149 = vsub.f32 %v1932, %v2133
        %v2150 = vsub.f32 %v1933, %v2134
        %v2151 = vsub.f32 %v1934, %v2135
        %v2152 = vsub.f32 %v1935, %v2136
        %v2153 = vsub.f32 %v1936, %v2137
        %v2154 = vsub.f32 %v1937, %v2138
        %v2155 = vmul.f32 %v2075, %v2009
        %v2156 = vmul.f32 %v2076, %v2009
        %v2157 = vmul.f32 %v2077, %v2009
        %v2158 = vmul.f32 %v2078, %v2009
        %v2159 = vmul.f32 %v2079, %v2009
        %v2160 = vmul.f32 %v2080, %v2009
        %v2161 = vmul.f32 %v2081, %v2009
        %v2162 = vmul.f32 %v2082, %v2009
        %v2163 = vmul.f32 %v2083, %v2009
        %v2164 = vmul.f32 %v2084, %v2009
        %v2165 = vmul.f32 %v2085, %v2009
        %v2166 = vmul.f32 %v2086, %v2009
        %v2167 = vmul.f32 %v2087, %v2009
        %v2168 = vmul.f32 %v2088, %v2009
        %v2169 = vmul.f32 %v2089, %v2009
        %v2170 = vmul.f32 %v2090, %v2009
        %v2171 = vsub.f32 %v1938, %v2155
        %v2172 = vsub.f32 %v1939, %v2156
        %v2173 = vsub.f32 %v1940, %v2157
        %v2174 = vsub.f32 %v1941, %v2158
        %v2175 = vsub.f32 %v1942, %v2159
        %v2176 = vsub.f32 %v1943, %v2160
        %v2177 = vsub.f32 %v1944, %v2161
        %v2178 = vsub.f32 %v1945, %v2162
        %v2179 = vsub.f32 %v1946, %v2163
        %v2180 = vsub.f32 %v1947, %v2164
        %v2181 = vsub.f32 %v1948, %v2165
        %v2182 = vsub.f32 %v1949, %v2166
        %v2183 = vsub.f32 %v1950, %v2167
        %v2184 = vsub.f32 %v1951, %v2168
        %v2185 = vsub.f32 %v1952, %v2169
        %v2186 = vsub.f32 %v1953, %v2170
        %v2187 = vmul.f32 %v2107, %v2107
        %v2188 = vmul.f32 %v2108, %v2108
        %v2189 = vmul.f32 %v2109, %v2109
        %v2190 = vmul.f32 %v2110, %v2110
        %v2191 = vmul.f32 %v2111, %v2111
        %v2192 = vmul.f32 %v2112, %v2112
        %v2193 = vmul.f32 %v2113, %v2113
        %v2194 = vmul.f32 %v2114, %v2114
        %v2195 = vmul.f32 %v2115, %v2115
        %v2196 = vmul.f32 %v2116, %v2116
        %v2197 = vmul.f32 %v2117, %v2117
        %v2198 = vmul.f32 %v2118, %v2118
        %v2199 = vmul.f32 %v2119, %v2119
        %v2200 = vmul.f32 %v2120, %v2120
        %v2201 = vmul.f32 %v2121, %v2121
        %v2202 = vmul.f32 %v2122, %v2122
        %v2203 = vmul.f32 %v2139, %v2139
        %v2204 = vmul.f32 %v2140, %v2140
        %v2205 = vmul.f32 %v2141, %v2141
        %v2206 = vmul.f32 %v2142, %v2142
        %v2207 = vmul.f32 %v2143, %v2143
        %v2208 = vmul.f32 %v2144, %v2144
        %v2209 = vmul.f32 %v2145, %v2145
        %v2210 = vmul.f32 %v2146, %v2146
        %v2211 = vmul.f32 %v2147, %v2147
        %v2212 = vmul.f32 %v2148, %v2148
        %v2213 = vmul.f32 %v2149, %v2149
        %v2214 = vmul.f32 %v2150, %v2150
        %v2215 = vmul.f32 %v2151, %v2151
        %v2216 = vmul.f32 %v2152, %v2152
        %v2217 = vmul.f32 %v2153, %v2153
        %v2218 = vmul.f32 %v2154, %v2154
        %v2219 = vadd.f32 %v2187, %v2203
        %v2220 = vadd.f32 %v2188, %v2204
        %v2221 = vadd.f32 %v2189, %v2205
        %v2222 = vadd.f32 %v2190, %v2206
        %v2223 = vadd.f32 %v2191, %v2207
        %v2224 = vadd.f32 %v2192, %v2208
        %v2225 = vadd.f32 %v2193, %v2209
        %v2226 = vadd.f32 %v2194, %v2210
        %v2227 = vadd.f32 %v2195, %v2211
        %v2228 = vadd.f32 %v2196, %v2212
        %v2229 = vadd.f32 %v2197, %v2213
        %v2230 = vadd.f32 %v2198, %v2214
        %v2231 = vadd.f32 %v2199, %v2215
        %v2232 = vadd.f32 %v2200, %v2216
        %v2233 = vadd.f32 %v2201, %v2217
        %v2234 = vadd.f32 %v2202, %v2218
        %v2235 = vmul.f32 %v2171, %v2171
        %v2236 = vmul.f32 %v2172, %v2172
        %v2237 = vmul.f32 %v2173, %v2173
        %v2238 = vmul.f32 %v2174, %v2174
        %v2239 = vmul.f32 %v2175, %v2175
        %v2240 = vmul.f32 %v2176, %v2176
        %v2241 = vmul.f32 %v2177, %v2177
        %v2242 = vmul.f32 %v2178, %v2178
        %v2243 = vmul.f32 %v2179, %v2179
        %v2244 = vmul.f32 %v2180, %v2180
        %v2245 = vmul.f32 %v2181, %v2181
        %v2246 = vmul.f32 %v2182, %v2182
        %v2247 = vmul.f32 %v2183, %v2183
        %v2248 = vmul.f32 %v2184, %v2184
        %v2249 = vmul.f32 %v2185, %v2185
        %v2250 = vmul.f32 %v2186, %v2186
        %v2251 = vadd.f32 %v2219, %v2235
        %v2252 = vadd.f32 %v2220, %v2236
        %v2253 = vadd.f32 %v2221, %v2237
        %v2254 = vadd.f32 %v2222, %v2238
        %v2255 = vadd.f32 %v2223, %v2239
        %v2256 = vadd.f32 %v2224, %v2240
        %v2257 = vadd.f32 %v2225, %v2241
        %v2258 = vadd.f32 %v2226, %v2242
        %v2259 = vadd.f32 %v2227, %v2243
        %v2260 = vadd.f32 %v2228, %v2244
        %v2261 = vadd.f32 %v2229, %v2245
        %v2262 = vadd.f32 %v2230, %v2246
        %v2263 = vadd.f32 %v2231, %v2247
        %v2264 = vadd.f32 %v2232, %v2248
        %v2265 = vadd.f32 %v2233, %v2249
        %v2266 = vadd.f32 %v2234, %v2250
        %v2267 = vmin.f32 %v1585, %v1890
        %v2268 = vmin.f32 %v1586, %v1891
        %v2269 = vmin.f32 %v1587, %v1892
        %v2270 = vmin.f32 %v1588, %v1893
        %v2271 = vmin.f32 %v1589, %v1894
        %v2272 = vmin.f32 %v1590, %v1895
        %v2273 = vmin.f32 %v1591, %v1896
        %v2274 = vmin.f32 %v1592, %v1897
        %v2275 = vmin.f32 %v1593, %v1898
        %v2276 = vmin.f32 %v1594, %v1899
        %v2277 = vmin.f32 %v1595, %v1900
        %v2278 = vmin.f32 %v1596, %v1901
        %v2279 = vmin.f32 %v1597, %v1902
        %v2280 = vmin.f32 %v1598, %v1903
        %v2281 = vmin.f32 %v1599, %v1904
        %v2282 = vmin.f32 %v1600, %v1905
        %v2283 = vmin.f32 %v2267, %v2251
        %v2284 = vmin.f32 %v2268, %v2252
        %v2285 = vmin.f32 %v2269, %v2253
        %v2286 = vmin.f32 %v2270, %v2254
        %v2287 = vmin.f32 %v2271, %v2255
        %v2288 = vmin.f32 %v2272, %v2256
        %v2289 = vmin.f32 %v2273, %v2257
        %v2290 = vmin.f32 %v2274, %v2258
        %v2291 = vmin.f32 %v2275, %v2259
        %v2292 = vmin.f32 %v2276, %v2260
        %v2293 = vmin.f32 %v2277, %v2261
        %v2294 = vmin.f32 %v2278, %v2262
        %v2295 = vmin.f32 %v2279, %v2263
        %v2296 = vmin.f32 %v2280, %v2264
        %v2297 = vmin.f32 %v2281, %v2265
        %v2298 = vmin.f32 %v2282, %v2266
        %v2299 = vsel %vm1168, %v1280, %v2283
        %v2300 = vsel %vm1169, %v1281, %v2284
        %v2301 = vsel %vm1170, %v1282, %v2285
        %v2302 = vsel %vm1171, %v1283, %v2286
        %v2303 = vsel %vm1172, %v1284, %v2287
        %v2304 = vsel %vm1173, %v1285, %v2288
        %v2305 = vsel %vm1174, %v1286, %v2289
        %v2306 = vsel %vm1175, %v1287, %v2290
        %v2307 = vsel %vm1176, %v1288, %v2291
        %v2308 = vsel %vm1177, %v1289, %v2292
        %v2309 = vsel %vm1178, %v1290, %v2293
        %v2310 = vsel %vm1179, %v1291, %v2294
        %v2311 = vsel %vm1180, %v1292, %v2295
        %v2312 = vsel %vm1181, %v1293, %v2296
        %v2313 = vsel %vm1182, %v1294, %v2297
        %v2314 = vsel %vm1183, %v1295, %v2298
        %2315 = vmin.xlane.f32.xlu0 %v2299
        %v2316 = vpop.xlane.xlu0 %2315
        %2317 = vmin.xlane.f32.xlu0 %v2300
        %v2318 = vpop.xlane.xlu0 %2317
        %2319 = vmin.xlane.f32.xlu0 %v2301
        %v2320 = vpop.xlane.xlu0 %2319
        %2321 = vmin.xlane.f32.xlu0 %v2302
        %v2322 = vpop.xlane.xlu0 %2321
        %2323 = vmin.xlane.f32.xlu0 %v2303
        %v2324 = vpop.xlane.xlu0 %2323
        %2325 = vmin.xlane.f32.xlu0 %v2304
        %v2326 = vpop.xlane.xlu0 %2325
        %2327 = vmin.xlane.f32.xlu0 %v2305
        %v2328 = vpop.xlane.xlu0 %2327
        %2329 = vmin.xlane.f32.xlu0 %v2306
        %v2330 = vpop.xlane.xlu0 %2329
        %2331 = vmin.xlane.f32.xlu0 %v2307
        %v2332 = vpop.xlane.xlu0 %2331
        %2333 = vmin.xlane.f32.xlu0 %v2308
        %v2334 = vpop.xlane.xlu0 %2333
        %2335 = vmin.xlane.f32.xlu0 %v2309
        %v2336 = vpop.xlane.xlu0 %2335
        %2337 = vmin.xlane.f32.xlu0 %v2310
        %v2338 = vpop.xlane.xlu0 %2337
        %2339 = vmin.xlane.f32.xlu0 %v2311
        %v2340 = vpop.xlane.xlu0 %2339
        %2341 = vmin.xlane.f32.xlu0 %v2312
        %v2342 = vpop.xlane.xlu0 %2341
        %2343 = vmin.xlane.f32.xlu0 %v2313
        %v2344 = vpop.xlane.xlu0 %2343
        %2345 = vmin.xlane.f32.xlu0 %v2314
        %v2346 = vpop.xlane.xlu0 %2345
        %v2347 = vlaneseq
        %v2348 = vand.u32 %v2347, 127
        %vm2349 = vcmp.eq.f32.partialorder %v2299, %v2316
        %vm2350 = vcmp.eq.f32.partialorder %v2300, %v2318
        %vm2351 = vcmp.eq.f32.partialorder %v2301, %v2320
        %vm2352 = vcmp.eq.f32.partialorder %v2302, %v2322
        %vm2353 = vcmp.eq.f32.partialorder %v2303, %v2324
        %vm2354 = vcmp.eq.f32.partialorder %v2304, %v2326
        %vm2355 = vcmp.eq.f32.partialorder %v2305, %v2328
        %vm2356 = vcmp.eq.f32.partialorder %v2306, %v2330
        %vm2357 = vcmp.eq.f32.partialorder %v2307, %v2332
        %vm2358 = vcmp.eq.f32.partialorder %v2308, %v2334
        %vm2359 = vcmp.eq.f32.partialorder %v2309, %v2336
        %vm2360 = vcmp.eq.f32.partialorder %v2310, %v2338
        %vm2361 = vcmp.eq.f32.partialorder %v2311, %v2340
        %vm2362 = vcmp.eq.f32.partialorder %v2312, %v2342
        %vm2363 = vcmp.eq.f32.partialorder %v2313, %v2344
        %vm2364 = vcmp.eq.f32.partialorder %v2314, %v2346
        %v2365 = vsel %vm2349, %v2348, 128
        %v2366 = vsel %vm2350, %v2348, 128
        %v2367 = vsel %vm2351, %v2348, 128
        %v2368 = vsel %vm2352, %v2348, 128
        %v2369 = vsel %vm2353, %v2348, 128
        %v2370 = vsel %vm2354, %v2348, 128
        %v2371 = vsel %vm2355, %v2348, 128
        %v2372 = vsel %vm2356, %v2348, 128
        %v2373 = vsel %vm2357, %v2348, 128
        %v2374 = vsel %vm2358, %v2348, 128
        %v2375 = vsel %vm2359, %v2348, 128
        %v2376 = vsel %vm2360, %v2348, 128
        %v2377 = vsel %vm2361, %v2348, 128
        %v2378 = vsel %vm2362, %v2348, 128
        %v2379 = vsel %vm2363, %v2348, 128
        %v2380 = vsel %vm2364, %v2348, 128
        %v2381 = vand.u32 %v2365, 65535
        %v2382 = vshra.s32 %v2365, 16
        %v2383 = vcvt.s32.f32 %v2381
        %v2384 = vcvt.s32.f32 %v2382
        %2385 = vmin.xlane.f32.xlu0 %v2384
        %v2386 = vpop.xlane.xlu0 %2385
        %vm2387 = vcmp.eq.f32.partialorder %v2384, %v2386
        %v2388 = vsel %vm2387, %v2383, inf
        %2389 = vmin.xlane.f32.xlu0 %v2388
        %v2390 = vpop.xlane.xlu0 %2389
        %v2391 = vcvt.f32.s32 %v2390
        %v2392 = vcvt.f32.s32 %v2386
        %v2393 = vshll.u32 %v2392, 16
        %v2394 = vadd.s32 %v2393, %v2391
        %v2395 = vand.u32 %v2366, 65535
        %v2396 = vshra.s32 %v2366, 16
        %v2397 = vcvt.s32.f32 %v2395
        %v2398 = vcvt.s32.f32 %v2396
        %2399 = vmin.xlane.f32.xlu0 %v2398
        %v2400 = vpop.xlane.xlu0 %2399
        %vm2401 = vcmp.eq.f32.partialorder %v2398, %v2400
        %v2402 = vsel %vm2401, %v2397, inf
        %2403 = vmin.xlane.f32.xlu0 %v2402
        %v2404 = vpop.xlane.xlu0 %2403
        %v2405 = vcvt.f32.s32 %v2404
        %v2406 = vcvt.f32.s32 %v2400
        %v2407 = vshll.u32 %v2406, 16
        %v2408 = vadd.s32 %v2407, %v2405
        %v2409 = vand.u32 %v2367, 65535
        %v2410 = vshra.s32 %v2367, 16
        %v2411 = vcvt.s32.f32 %v2409
        %v2412 = vcvt.s32.f32 %v2410
        %2413 = vmin.xlane.f32.xlu0 %v2412
        %v2414 = vpop.xlane.xlu0 %2413
        %vm2415 = vcmp.eq.f32.partialorder %v2412, %v2414
        %v2416 = vsel %vm2415, %v2411, inf
        %2417 = vmin.xlane.f32.xlu0 %v2416
        %v2418 = vpop.xlane.xlu0 %2417
        %v2419 = vcvt.f32.s32 %v2418
        %v2420 = vcvt.f32.s32 %v2414
        %v2421 = vshll.u32 %v2420, 16
        %v2422 = vadd.s32 %v2421, %v2419
        %v2423 = vand.u32 %v2368, 65535
        %v2424 = vshra.s32 %v2368, 16
        %v2425 = vcvt.s32.f32 %v2423
        %v2426 = vcvt.s32.f32 %v2424
        %2427 = vmin.xlane.f32.xlu0 %v2426
        %v2428 = vpop.xlane.xlu0 %2427
        %vm2429 = vcmp.eq.f32.partialorder %v2426, %v2428
        %v2430 = vsel %vm2429, %v2425, inf
        %2431 = vmin.xlane.f32.xlu0 %v2430
        %v2432 = vpop.xlane.xlu0 %2431
        %v2433 = vcvt.f32.s32 %v2432
        %v2434 = vcvt.f32.s32 %v2428
        %v2435 = vshll.u32 %v2434, 16
        %v2436 = vadd.s32 %v2435, %v2433
        %v2437 = vand.u32 %v2369, 65535
        %v2438 = vshra.s32 %v2369, 16
        %v2439 = vcvt.s32.f32 %v2437
        %v2440 = vcvt.s32.f32 %v2438
        %2441 = vmin.xlane.f32.xlu0 %v2440
        %v2442 = vpop.xlane.xlu0 %2441
        %vm2443 = vcmp.eq.f32.partialorder %v2440, %v2442
        %v2444 = vsel %vm2443, %v2439, inf
        %2445 = vmin.xlane.f32.xlu0 %v2444
        %v2446 = vpop.xlane.xlu0 %2445
        %v2447 = vcvt.f32.s32 %v2446
        %v2448 = vcvt.f32.s32 %v2442
        %v2449 = vshll.u32 %v2448, 16
        %v2450 = vadd.s32 %v2449, %v2447
        %v2451 = vand.u32 %v2370, 65535
        %v2452 = vshra.s32 %v2370, 16
        %v2453 = vcvt.s32.f32 %v2451
        %v2454 = vcvt.s32.f32 %v2452
        %2455 = vmin.xlane.f32.xlu0 %v2454
        %v2456 = vpop.xlane.xlu0 %2455
        %vm2457 = vcmp.eq.f32.partialorder %v2454, %v2456
        %v2458 = vsel %vm2457, %v2453, inf
        %2459 = vmin.xlane.f32.xlu0 %v2458
        %v2460 = vpop.xlane.xlu0 %2459
        %v2461 = vcvt.f32.s32 %v2460
        %v2462 = vcvt.f32.s32 %v2456
        %v2463 = vshll.u32 %v2462, 16
        %v2464 = vadd.s32 %v2463, %v2461
        %v2465 = vand.u32 %v2371, 65535
        %v2466 = vshra.s32 %v2371, 16
        %v2467 = vcvt.s32.f32 %v2465
        %v2468 = vcvt.s32.f32 %v2466
        %2469 = vmin.xlane.f32.xlu0 %v2468
        %v2470 = vpop.xlane.xlu0 %2469
        %vm2471 = vcmp.eq.f32.partialorder %v2468, %v2470
        %v2472 = vsel %vm2471, %v2467, inf
        %2473 = vmin.xlane.f32.xlu0 %v2472
        %v2474 = vpop.xlane.xlu0 %2473
        %v2475 = vcvt.f32.s32 %v2474
        %v2476 = vcvt.f32.s32 %v2470
        %v2477 = vshll.u32 %v2476, 16
        %v2478 = vadd.s32 %v2477, %v2475
        %v2479 = vand.u32 %v2372, 65535
        %v2480 = vshra.s32 %v2372, 16
        %v2481 = vcvt.s32.f32 %v2479
        %v2482 = vcvt.s32.f32 %v2480
        %2483 = vmin.xlane.f32.xlu0 %v2482
        %v2484 = vpop.xlane.xlu0 %2483
        %vm2485 = vcmp.eq.f32.partialorder %v2482, %v2484
        %v2486 = vsel %vm2485, %v2481, inf
        %2487 = vmin.xlane.f32.xlu0 %v2486
        %v2488 = vpop.xlane.xlu0 %2487
        %v2489 = vcvt.f32.s32 %v2488
        %v2490 = vcvt.f32.s32 %v2484
        %v2491 = vshll.u32 %v2490, 16
        %v2492 = vadd.s32 %v2491, %v2489
        %v2493 = vand.u32 %v2373, 65535
        %v2494 = vshra.s32 %v2373, 16
        %v2495 = vcvt.s32.f32 %v2493
        %v2496 = vcvt.s32.f32 %v2494
        %2497 = vmin.xlane.f32.xlu0 %v2496
        %v2498 = vpop.xlane.xlu0 %2497
        %vm2499 = vcmp.eq.f32.partialorder %v2496, %v2498
        %v2500 = vsel %vm2499, %v2495, inf
        %2501 = vmin.xlane.f32.xlu0 %v2500
        %v2502 = vpop.xlane.xlu0 %2501
        %v2503 = vcvt.f32.s32 %v2502
        %v2504 = vcvt.f32.s32 %v2498
        %v2505 = vshll.u32 %v2504, 16
        %v2506 = vadd.s32 %v2505, %v2503
        %v2507 = vand.u32 %v2374, 65535
        %v2508 = vshra.s32 %v2374, 16
        %v2509 = vcvt.s32.f32 %v2507
        %v2510 = vcvt.s32.f32 %v2508
        %2511 = vmin.xlane.f32.xlu0 %v2510
        %v2512 = vpop.xlane.xlu0 %2511
        %vm2513 = vcmp.eq.f32.partialorder %v2510, %v2512
        %v2514 = vsel %vm2513, %v2509, inf
        %2515 = vmin.xlane.f32.xlu0 %v2514
        %v2516 = vpop.xlane.xlu0 %2515
        %v2517 = vcvt.f32.s32 %v2516
        %v2518 = vcvt.f32.s32 %v2512
        %v2519 = vshll.u32 %v2518, 16
        %v2520 = vadd.s32 %v2519, %v2517
        %v2521 = vand.u32 %v2375, 65535
        %v2522 = vshra.s32 %v2375, 16
        %v2523 = vcvt.s32.f32 %v2521
        %v2524 = vcvt.s32.f32 %v2522
        %2525 = vmin.xlane.f32.xlu0 %v2524
        %v2526 = vpop.xlane.xlu0 %2525
        %vm2527 = vcmp.eq.f32.partialorder %v2524, %v2526
        %v2528 = vsel %vm2527, %v2523, inf
        %2529 = vmin.xlane.f32.xlu0 %v2528
        %v2530 = vpop.xlane.xlu0 %2529
        %v2531 = vcvt.f32.s32 %v2530
        %v2532 = vcvt.f32.s32 %v2526
        %v2533 = vshll.u32 %v2532, 16
        %v2534 = vadd.s32 %v2533, %v2531
        %v2535 = vand.u32 %v2376, 65535
        %v2536 = vshra.s32 %v2376, 16
        %v2537 = vcvt.s32.f32 %v2535
        %v2538 = vcvt.s32.f32 %v2536
        %2539 = vmin.xlane.f32.xlu0 %v2538
        %v2540 = vpop.xlane.xlu0 %2539
        %vm2541 = vcmp.eq.f32.partialorder %v2538, %v2540
        %v2542 = vsel %vm2541, %v2537, inf
        %2543 = vmin.xlane.f32.xlu0 %v2542
        %v2544 = vpop.xlane.xlu0 %2543
        %v2545 = vcvt.f32.s32 %v2544
        %v2546 = vcvt.f32.s32 %v2540
        %v2547 = vshll.u32 %v2546, 16
        %v2548 = vadd.s32 %v2547, %v2545
        %v2549 = vand.u32 %v2377, 65535
        %v2550 = vshra.s32 %v2377, 16
        %v2551 = vcvt.s32.f32 %v2549
        %v2552 = vcvt.s32.f32 %v2550
        %2553 = vmin.xlane.f32.xlu0 %v2552
        %v2554 = vpop.xlane.xlu0 %2553
        %vm2555 = vcmp.eq.f32.partialorder %v2552, %v2554
        %v2556 = vsel %vm2555, %v2551, inf
        %2557 = vmin.xlane.f32.xlu0 %v2556
        %v2558 = vpop.xlane.xlu0 %2557
        %v2559 = vcvt.f32.s32 %v2558
        %v2560 = vcvt.f32.s32 %v2554
        %v2561 = vshll.u32 %v2560, 16
        %v2562 = vadd.s32 %v2561, %v2559
        %v2563 = vand.u32 %v2378, 65535
        %v2564 = vshra.s32 %v2378, 16
        %v2565 = vcvt.s32.f32 %v2563
        %v2566 = vcvt.s32.f32 %v2564
        %2567 = vmin.xlane.f32.xlu0 %v2566
        %v2568 = vpop.xlane.xlu0 %2567
        %vm2569 = vcmp.eq.f32.partialorder %v2566, %v2568
        %v2570 = vsel %vm2569, %v2565, inf
        %2571 = vmin.xlane.f32.xlu0 %v2570
        %v2572 = vpop.xlane.xlu0 %2571
        %v2573 = vcvt.f32.s32 %v2572
        %v2574 = vcvt.f32.s32 %v2568
        %v2575 = vshll.u32 %v2574, 16
        %v2576 = vadd.s32 %v2575, %v2573
        %v2577 = vand.u32 %v2379, 65535
        %v2578 = vshra.s32 %v2379, 16
        %v2579 = vcvt.s32.f32 %v2577
        %v2580 = vcvt.s32.f32 %v2578
        %2581 = vmin.xlane.f32.xlu0 %v2580
        %v2582 = vpop.xlane.xlu0 %2581
        %vm2583 = vcmp.eq.f32.partialorder %v2580, %v2582
        %v2584 = vsel %vm2583, %v2579, inf
        %2585 = vmin.xlane.f32.xlu0 %v2584
        %v2586 = vpop.xlane.xlu0 %2585
        %v2587 = vcvt.f32.s32 %v2586
        %v2588 = vcvt.f32.s32 %v2582
        %v2589 = vshll.u32 %v2588, 16
        %v2590 = vadd.s32 %v2589, %v2587
        %v2591 = vand.u32 %v2380, 65535
        %v2592 = vshra.s32 %v2380, 16
        %v2593 = vcvt.s32.f32 %v2591
        %v2594 = vcvt.s32.f32 %v2592
        %2595 = vmin.xlane.f32.xlu0 %v2594
        %v2596 = vpop.xlane.xlu0 %2595
        %vm2597 = vcmp.eq.f32.partialorder %v2594, %v2596
        %v2598 = vsel %vm2597, %v2593, inf
        %2599 = vmin.xlane.f32.xlu0 %v2598
        %v2600 = vpop.xlane.xlu0 %2599
        %v2601 = vcvt.f32.s32 %v2600
        %v2602 = vcvt.f32.s32 %v2596
        %v2603 = vshll.u32 %v2602, 16
        %v2604 = vadd.s32 %v2603, %v2601
        %vm2605 = vcmp.eq.s32.totalorder %v2348, %v2394
        %vm2606 = vcmp.eq.s32.totalorder %v2348, %v2408
        %vm2607 = vcmp.eq.s32.totalorder %v2348, %v2422
        %vm2608 = vcmp.eq.s32.totalorder %v2348, %v2436
        %vm2609 = vcmp.eq.s32.totalorder %v2348, %v2450
        %vm2610 = vcmp.eq.s32.totalorder %v2348, %v2464
        %vm2611 = vcmp.eq.s32.totalorder %v2348, %v2478
        %vm2612 = vcmp.eq.s32.totalorder %v2348, %v2492
        %vm2613 = vcmp.eq.s32.totalorder %v2348, %v2506
        %vm2614 = vcmp.eq.s32.totalorder %v2348, %v2520
        %vm2615 = vcmp.eq.s32.totalorder %v2348, %v2534
        %vm2616 = vcmp.eq.s32.totalorder %v2348, %v2548
        %vm2617 = vcmp.eq.s32.totalorder %v2348, %v2562
        %vm2618 = vcmp.eq.s32.totalorder %v2348, %v2576
        %vm2619 = vcmp.eq.s32.totalorder %v2348, %v2590
        %vm2620 = vcmp.eq.s32.totalorder %v2348, %v2604
        %v2621 = vsel %vm2605, 1, 0
        %v2622 = vsel %vm2606, 1, 0
        %v2623 = vsel %vm2607, 1, 0
        %v2624 = vsel %vm2608, 1, 0
        %v2625 = vsel %vm2609, 1, 0
        %v2626 = vsel %vm2610, 1, 0
        %v2627 = vsel %vm2611, 1, 0
        %v2628 = vsel %vm2612, 1, 0
        %v2629 = vsel %vm2613, 1, 0
        %v2630 = vsel %vm2614, 1, 0
        %v2631 = vsel %vm2615, 1, 0
        %v2632 = vsel %vm2616, 1, 0
        %v2633 = vsel %vm2617, 1, 0
        %v2634 = vsel %vm2618, 1, 0
        %v2635 = vsel %vm2619, 1, 0
        %v2636 = vsel %vm2620, 1, 0
        %v2637 = vcvt.s32.f32 %v2621
        %v2638 = vcvt.s32.f32 %v2622
        %v2639 = vcvt.s32.f32 %v2623
        %v2640 = vcvt.s32.f32 %v2624
        %v2641 = vcvt.s32.f32 %v2625
        %v2642 = vcvt.s32.f32 %v2626
        %v2643 = vcvt.s32.f32 %v2627
        %v2644 = vcvt.s32.f32 %v2628
        %v2645 = vcvt.s32.f32 %v2629
        %v2646 = vcvt.s32.f32 %v2630
        %v2647 = vcvt.s32.f32 %v2631
        %v2648 = vcvt.s32.f32 %v2632
        %v2649 = vcvt.s32.f32 %v2633
        %v2650 = vcvt.s32.f32 %v2634
        %v2651 = vcvt.s32.f32 %v2635
        %v2652 = vcvt.s32.f32 %v2636
        %v2653 = vld [vmem:[%s303] sm:$0xff]
        %v2654 = vld [vmem:[%s303 + $0x8] sm:$0xff]
        %v2655 = vld [vmem:[%s303 + $0x10] sm:$0xff]
        %v2656 = vld [vmem:[%s303 + $0x18] sm:$0xff]
        %v2657 = vld [vmem:[%s303 + $0x20] sm:$0xff]
        %v2658 = vld [vmem:[%s303 + $0x28] sm:$0xff]
        %v2659 = vld [vmem:[%s303 + $0x30] sm:$0xff]
        %v2660 = vld [vmem:[%s303 + $0x38] sm:$0xff]
        %v2661 = vld [vmem:[%s303 + $0x40] sm:$0xff]
        %v2662 = vld [vmem:[%s303 + $0x48] sm:$0xff]
        %v2663 = vld [vmem:[%s303 + $0x50] sm:$0xff]
        %v2664 = vld [vmem:[%s303 + $0x58] sm:$0xff]
        %v2665 = vld [vmem:[%s303 + $0x60] sm:$0xff]
        %v2666 = vld [vmem:[%s303 + $0x68] sm:$0xff]
        %v2667 = vld [vmem:[%s303 + $0x70] sm:$0xff]
        %v2668 = vld [vmem:[%s303 + $0x78] sm:$0xff]
        %v2669 = vand.u32 %v2668, 4294901760
        %2670 = vmatpush.msra.mxu0 %v2669
        %v2671 = vand.u32 %v2667, 4294901760
        %2672 = vmatpush.msra.mxu0 %v2671
        %v2673 = vand.u32 %v2666, 4294901760
        %2674 = vmatpush.msra.mxu0 %v2673
        %v2675 = vand.u32 %v2665, 4294901760
        %2676 = vmatpush.msra.mxu0 %v2675
        %v2677 = vand.u32 %v2664, 4294901760
        %2678 = vmatpush.msra.mxu0 %v2677
        %v2679 = vand.u32 %v2663, 4294901760
        %2680 = vmatpush.msra.mxu0 %v2679
        %v2681 = vand.u32 %v2662, 4294901760
        %2682 = vmatpush.msra.mxu0 %v2681
        %v2683 = vand.u32 %v2661, 4294901760
        %2684 = vmatpush.msra.mxu0 %v2683
        %v2685 = vand.u32 %v2660, 4294901760
        %2686 = vmatpush.msra.mxu0 %v2685
        %v2687 = vand.u32 %v2659, 4294901760
        %2688 = vmatpush.msra.mxu0 %v2687
        %v2689 = vand.u32 %v2658, 4294901760
        %2690 = vmatpush.msra.mxu0 %v2689
        %v2691 = vand.u32 %v2657, 4294901760
        %2692 = vmatpush.msra.mxu0 %v2691
        %v2693 = vand.u32 %v2656, 4294901760
        %2694 = vmatpush.msra.mxu0 %v2693
        %v2695 = vand.u32 %v2655, 4294901760
        %2696 = vmatpush.msra.mxu0 %v2695
        %v2697 = vand.u32 %v2654, 4294901760
        %2698 = vmatpush.msra.mxu0 %v2697
        %v2699 = vand.u32 %v2653, 4294901760
        %2700 = vmatpush.msra.mxu0 %v2699
        %v2701 = vand.u32 %v2637, 4294901760
        %v2702 = vsub.f32 %v2637, %v2701
        %v2703 = vand.u32 %v2702, 4294901760
        %v2704 = vsub.f32 %v2702, %v2703
        %v2705 = vand.u32 %v2704, 4294901760
        %2706 = vmatmul.f32.gmra.mxu0 %v2705
        %v2707 = vpop.f32.mrf.mxu0
        %v2708 = vadd.f32 0.0, %v2707
        %v2709 = vand.u32 %v2638, 4294901760
        %v2710 = vsub.f32 %v2638, %v2709
        %v2711 = vand.u32 %v2710, 4294901760
        %v2712 = vsub.f32 %v2710, %v2711
        %v2713 = vand.u32 %v2712, 4294901760
        %2714 = vmatmul.f32.gmra.mxu0 %v2713
        %v2715 = vpop.f32.mrf.mxu0
        %v2716 = vadd.f32 0.0, %v2715
        %v2717 = vand.u32 %v2639, 4294901760
        %v2718 = vsub.f32 %v2639, %v2717
        %v2719 = vand.u32 %v2718, 4294901760
        %v2720 = vsub.f32 %v2718, %v2719
        %v2721 = vand.u32 %v2720, 4294901760
        %2722 = vmatmul.f32.gmra.mxu0 %v2721
        %v2723 = vpop.f32.mrf.mxu0
        %v2724 = vadd.f32 0.0, %v2723
        %v2725 = vand.u32 %v2640, 4294901760
        %v2726 = vsub.f32 %v2640, %v2725
        %v2727 = vand.u32 %v2726, 4294901760
        %v2728 = vsub.f32 %v2726, %v2727
        %v2729 = vand.u32 %v2728, 4294901760
        %2730 = vmatmul.f32.gmra.mxu0 %v2729
        %v2731 = vpop.f32.mrf.mxu0
        %v2732 = vadd.f32 0.0, %v2731
        %v2733 = vand.u32 %v2641, 4294901760
        %v2734 = vsub.f32 %v2641, %v2733
        %v2735 = vand.u32 %v2734, 4294901760
        %v2736 = vsub.f32 %v2734, %v2735
        %v2737 = vand.u32 %v2736, 4294901760
        %2738 = vmatmul.f32.gmra.mxu0 %v2737
        %v2739 = vpop.f32.mrf.mxu0
        %v2740 = vadd.f32 0.0, %v2739
        %v2741 = vand.u32 %v2642, 4294901760
        %v2742 = vsub.f32 %v2642, %v2741
        %v2743 = vand.u32 %v2742, 4294901760
        %v2744 = vsub.f32 %v2742, %v2743
        %v2745 = vand.u32 %v2744, 4294901760
        %2746 = vmatmul.f32.gmra.mxu0 %v2745
        %v2747 = vpop.f32.mrf.mxu0
        %v2748 = vadd.f32 0.0, %v2747
        %v2749 = vand.u32 %v2643, 4294901760
        %v2750 = vsub.f32 %v2643, %v2749
        %v2751 = vand.u32 %v2750, 4294901760
        %v2752 = vsub.f32 %v2750, %v2751
        %v2753 = vand.u32 %v2752, 4294901760
        %2754 = vmatmul.f32.gmra.mxu0 %v2753
        %v2755 = vpop.f32.mrf.mxu0
        %v2756 = vadd.f32 0.0, %v2755
        %v2757 = vand.u32 %v2644, 4294901760
        %v2758 = vsub.f32 %v2644, %v2757
        %v2759 = vand.u32 %v2758, 4294901760
        %v2760 = vsub.f32 %v2758, %v2759
        %v2761 = vand.u32 %v2760, 4294901760
        %2762 = vmatmul.f32.gmra.mxu0 %v2761
        %v2763 = vpop.f32.mrf.mxu0
        %v2764 = vadd.f32 0.0, %v2763
        %v2765 = vand.u32 %v2645, 4294901760
        %v2766 = vsub.f32 %v2645, %v2765
        %v2767 = vand.u32 %v2766, 4294901760
        %v2768 = vsub.f32 %v2766, %v2767
        %v2769 = vand.u32 %v2768, 4294901760
        %2770 = vmatmul.f32.gmra.mxu0 %v2769
        %v2771 = vpop.f32.mrf.mxu0
        %v2772 = vadd.f32 0.0, %v2771
        %v2773 = vand.u32 %v2646, 4294901760
        %v2774 = vsub.f32 %v2646, %v2773
        %v2775 = vand.u32 %v2774, 4294901760
        %v2776 = vsub.f32 %v2774, %v2775
        %v2777 = vand.u32 %v2776, 4294901760
        %2778 = vmatmul.f32.gmra.mxu0 %v2777
        %v2779 = vpop.f32.mrf.mxu0
        %v2780 = vadd.f32 0.0, %v2779
        %v2781 = vand.u32 %v2647, 4294901760
        %v2782 = vsub.f32 %v2647, %v2781
        %v2783 = vand.u32 %v2782, 4294901760
        %v2784 = vsub.f32 %v2782, %v2783
        %v2785 = vand.u32 %v2784, 4294901760
        %2786 = vmatmul.f32.gmra.mxu0 %v2785
        %v2787 = vpop.f32.mrf.mxu0
        %v2788 = vadd.f32 0.0, %v2787
        %v2789 = vand.u32 %v2648, 4294901760
        %v2790 = vsub.f32 %v2648, %v2789
        %v2791 = vand.u32 %v2790, 4294901760
        %v2792 = vsub.f32 %v2790, %v2791
        %v2793 = vand.u32 %v2792, 4294901760
        %2794 = vmatmul.f32.gmra.mxu0 %v2793
        %v2795 = vpop.f32.mrf.mxu0
        %v2796 = vadd.f32 0.0, %v2795
        %v2797 = vand.u32 %v2649, 4294901760
        %v2798 = vsub.f32 %v2649, %v2797
        %v2799 = vand.u32 %v2798, 4294901760
        %v2800 = vsub.f32 %v2798, %v2799
        %v2801 = vand.u32 %v2800, 4294901760
        %2802 = vmatmul.f32.gmra.mxu0 %v2801
        %v2803 = vpop.f32.mrf.mxu0
        %v2804 = vadd.f32 0.0, %v2803
        %v2805 = vand.u32 %v2650, 4294901760
        %v2806 = vsub.f32 %v2650, %v2805
        %v2807 = vand.u32 %v2806, 4294901760
        %v2808 = vsub.f32 %v2806, %v2807
        %v2809 = vand.u32 %v2808, 4294901760
        %2810 = vmatmul.f32.gmra.mxu0 %v2809
        %v2811 = vpop.f32.mrf.mxu0
        %v2812 = vadd.f32 0.0, %v2811
        %v2813 = vand.u32 %v2651, 4294901760
        %v2814 = vsub.f32 %v2651, %v2813
        %v2815 = vand.u32 %v2814, 4294901760
        %v2816 = vsub.f32 %v2814, %v2815
        %v2817 = vand.u32 %v2816, 4294901760
        %2818 = vmatmul.f32.gmra.mxu0 %v2817
        %v2819 = vpop.f32.mrf.mxu0
        %v2820 = vadd.f32 0.0, %v2819
        %v2821 = vand.u32 %v2652, 4294901760
        %v2822 = vsub.f32 %v2652, %v2821
        %v2823 = vand.u32 %v2822, 4294901760
        %v2824 = vsub.f32 %v2822, %v2823
        %v2825 = vand.u32 %v2824, 4294901760
        %2826 = vmatmul.f32.gmra.mxu0 %v2825
        %v2827 = vpop.f32.mrf.mxu0
        %v2828 = vadd.f32 0.0, %v2827
        %2829 = vdwg.mxu0
        %v2830 = vand.u32 %v2668, 4294901760
        %v2831 = vsub.f32 %v2668, %v2830
        %v2832 = vand.u32 %v2831, 4294901760
        %v2833 = vsub.f32 %v2831, %v2832
        %v2834 = vand.u32 %v2833, 4294901760
        %2835 = vmatpush.msra.mxu0 %v2834
        %v2836 = vand.u32 %v2667, 4294901760
        %v2837 = vsub.f32 %v2667, %v2836
        %v2838 = vand.u32 %v2837, 4294901760
        %v2839 = vsub.f32 %v2837, %v2838
        %v2840 = vand.u32 %v2839, 4294901760
        %2841 = vmatpush.msra.mxu0 %v2840
        %v2842 = vand.u32 %v2666, 4294901760
        %v2843 = vsub.f32 %v2666, %v2842
        %v2844 = vand.u32 %v2843, 4294901760
        %v2845 = vsub.f32 %v2843, %v2844
        %v2846 = vand.u32 %v2845, 4294901760
        %2847 = vmatpush.msra.mxu0 %v2846
        %v2848 = vand.u32 %v2665, 4294901760
        %v2849 = vsub.f32 %v2665, %v2848
        %v2850 = vand.u32 %v2849, 4294901760
        %v2851 = vsub.f32 %v2849, %v2850
        %v2852 = vand.u32 %v2851, 4294901760
        %2853 = vmatpush.msra.mxu0 %v2852
        %v2854 = vand.u32 %v2664, 4294901760
        %v2855 = vsub.f32 %v2664, %v2854
        %v2856 = vand.u32 %v2855, 4294901760
        %v2857 = vsub.f32 %v2855, %v2856
        %v2858 = vand.u32 %v2857, 4294901760
        %2859 = vmatpush.msra.mxu0 %v2858
        %v2860 = vand.u32 %v2663, 4294901760
        %v2861 = vsub.f32 %v2663, %v2860
        %v2862 = vand.u32 %v2861, 4294901760
        %v2863 = vsub.f32 %v2861, %v2862
        %v2864 = vand.u32 %v2863, 4294901760
        %2865 = vmatpush.msra.mxu0 %v2864
        %v2866 = vand.u32 %v2662, 4294901760
        %v2867 = vsub.f32 %v2662, %v2866
        %v2868 = vand.u32 %v2867, 4294901760
        %v2869 = vsub.f32 %v2867, %v2868
        %v2870 = vand.u32 %v2869, 4294901760
        %2871 = vmatpush.msra.mxu0 %v2870
        %v2872 = vand.u32 %v2661, 4294901760
        %v2873 = vsub.f32 %v2661, %v2872
        %v2874 = vand.u32 %v2873, 4294901760
        %v2875 = vsub.f32 %v2873, %v2874
        %v2876 = vand.u32 %v2875, 4294901760
        %2877 = vmatpush.msra.mxu0 %v2876
        %v2878 = vand.u32 %v2660, 4294901760
        %v2879 = vsub.f32 %v2660, %v2878
        %v2880 = vand.u32 %v2879, 4294901760
        %v2881 = vsub.f32 %v2879, %v2880
        %v2882 = vand.u32 %v2881, 4294901760
        %2883 = vmatpush.msra.mxu0 %v2882
        %v2884 = vand.u32 %v2659, 4294901760
        %v2885 = vsub.f32 %v2659, %v2884
        %v2886 = vand.u32 %v2885, 4294901760
        %v2887 = vsub.f32 %v2885, %v2886
        %v2888 = vand.u32 %v2887, 4294901760
        %2889 = vmatpush.msra.mxu0 %v2888
        %v2890 = vand.u32 %v2658, 4294901760
        %v2891 = vsub.f32 %v2658, %v2890
        %v2892 = vand.u32 %v2891, 4294901760
        %v2893 = vsub.f32 %v2891, %v2892
        %v2894 = vand.u32 %v2893, 4294901760
        %2895 = vmatpush.msra.mxu0 %v2894
        %v2896 = vand.u32 %v2657, 4294901760
        %v2897 = vsub.f32 %v2657, %v2896
        %v2898 = vand.u32 %v2897, 4294901760
        %v2899 = vsub.f32 %v2897, %v2898
        %v2900 = vand.u32 %v2899, 4294901760
        %2901 = vmatpush.msra.mxu0 %v2900
        %v2902 = vand.u32 %v2656, 4294901760
        %v2903 = vsub.f32 %v2656, %v2902
        %v2904 = vand.u32 %v2903, 4294901760
        %v2905 = vsub.f32 %v2903, %v2904
        %v2906 = vand.u32 %v2905, 4294901760
        %2907 = vmatpush.msra.mxu0 %v2906
        %v2908 = vand.u32 %v2655, 4294901760
        %v2909 = vsub.f32 %v2655, %v2908
        %v2910 = vand.u32 %v2909, 4294901760
        %v2911 = vsub.f32 %v2909, %v2910
        %v2912 = vand.u32 %v2911, 4294901760
        %2913 = vmatpush.msra.mxu0 %v2912
        %v2914 = vand.u32 %v2654, 4294901760
        %v2915 = vsub.f32 %v2654, %v2914
        %v2916 = vand.u32 %v2915, 4294901760
        %v2917 = vsub.f32 %v2915, %v2916
        %v2918 = vand.u32 %v2917, 4294901760
        %2919 = vmatpush.msra.mxu0 %v2918
        %v2920 = vand.u32 %v2653, 4294901760
        %v2921 = vsub.f32 %v2653, %v2920
        %v2922 = vand.u32 %v2921, 4294901760
        %v2923 = vsub.f32 %v2921, %v2922
        %v2924 = vand.u32 %v2923, 4294901760
        %2925 = vmatpush.msra.mxu0 %v2924
        %v2926 = vand.u32 %v2637, 4294901760
        %2927 = vmatmul.f32.gmra.mxu0 %v2926
        %v2928 = vpop.f32.mrf.mxu0
        %v2929 = vadd.f32 %v2708, %v2928
        %v2930 = vand.u32 %v2638, 4294901760
        %2931 = vmatmul.f32.gmra.mxu0 %v2930
        %v2932 = vpop.f32.mrf.mxu0
        %v2933 = vadd.f32 %v2716, %v2932
        %v2934 = vand.u32 %v2639, 4294901760
        %2935 = vmatmul.f32.gmra.mxu0 %v2934
        %v2936 = vpop.f32.mrf.mxu0
        %v2937 = vadd.f32 %v2724, %v2936
        %v2938 = vand.u32 %v2640, 4294901760
        %2939 = vmatmul.f32.gmra.mxu0 %v2938
        %v2940 = vpop.f32.mrf.mxu0
        %v2941 = vadd.f32 %v2732, %v2940
        %v2942 = vand.u32 %v2641, 4294901760
        %2943 = vmatmul.f32.gmra.mxu0 %v2942
        %v2944 = vpop.f32.mrf.mxu0
        %v2945 = vadd.f32 %v2740, %v2944
        %v2946 = vand.u32 %v2642, 4294901760
        %2947 = vmatmul.f32.gmra.mxu0 %v2946
        %v2948 = vpop.f32.mrf.mxu0
        %v2949 = vadd.f32 %v2748, %v2948
        %v2950 = vand.u32 %v2643, 4294901760
        %2951 = vmatmul.f32.gmra.mxu0 %v2950
        %v2952 = vpop.f32.mrf.mxu0
        %v2953 = vadd.f32 %v2756, %v2952
        %v2954 = vand.u32 %v2644, 4294901760
        %2955 = vmatmul.f32.gmra.mxu0 %v2954
        %v2956 = vpop.f32.mrf.mxu0
        %v2957 = vadd.f32 %v2764, %v2956
        %v2958 = vand.u32 %v2645, 4294901760
        %2959 = vmatmul.f32.gmra.mxu0 %v2958
        %v2960 = vpop.f32.mrf.mxu0
        %v2961 = vadd.f32 %v2772, %v2960
        %v2962 = vand.u32 %v2646, 4294901760
        %2963 = vmatmul.f32.gmra.mxu0 %v2962
        %v2964 = vpop.f32.mrf.mxu0
        %v2965 = vadd.f32 %v2780, %v2964
        %v2966 = vand.u32 %v2647, 4294901760
        %2967 = vmatmul.f32.gmra.mxu0 %v2966
        %v2968 = vpop.f32.mrf.mxu0
        %v2969 = vadd.f32 %v2788, %v2968
        %v2970 = vand.u32 %v2648, 4294901760
        %2971 = vmatmul.f32.gmra.mxu0 %v2970
        %v2972 = vpop.f32.mrf.mxu0
        %v2973 = vadd.f32 %v2796, %v2972
        %v2974 = vand.u32 %v2649, 4294901760
        %2975 = vmatmul.f32.gmra.mxu0 %v2974
        %v2976 = vpop.f32.mrf.mxu0
        %v2977 = vadd.f32 %v2804, %v2976
        %v2978 = vand.u32 %v2650, 4294901760
        %2979 = vmatmul.f32.gmra.mxu0 %v2978
        %v2980 = vpop.f32.mrf.mxu0
        %v2981 = vadd.f32 %v2812, %v2980
        %v2982 = vand.u32 %v2651, 4294901760
        %2983 = vmatmul.f32.gmra.mxu0 %v2982
        %v2984 = vpop.f32.mrf.mxu0
        %v2985 = vadd.f32 %v2820, %v2984
        %v2986 = vand.u32 %v2652, 4294901760
        %2987 = vmatmul.f32.gmra.mxu0 %v2986
        %v2988 = vpop.f32.mrf.mxu0
        %v2989 = vadd.f32 %v2828, %v2988
        %2990 = vdwg.mxu0
        %v2991 = vand.u32 %v2668, 4294901760
        %v2992 = vsub.f32 %v2668, %v2991
        %2993 = vmatpush.msra.mxu0 %v2992
        %v2994 = vand.u32 %v2667, 4294901760
        %v2995 = vsub.f32 %v2667, %v2994
        %2996 = vmatpush.msra.mxu0 %v2995
        %v2997 = vand.u32 %v2666, 4294901760
        %v2998 = vsub.f32 %v2666, %v2997
        %2999 = vmatpush.msra.mxu0 %v2998
        %v3000 = vand.u32 %v2665, 4294901760
        %v3001 = vsub.f32 %v2665, %v3000
        %3002 = vmatpush.msra.mxu0 %v3001
        %v3003 = vand.u32 %v2664, 4294901760
        %v3004 = vsub.f32 %v2664, %v3003
        %3005 = vmatpush.msra.mxu0 %v3004
        %v3006 = vand.u32 %v2663, 4294901760
        %v3007 = vsub.f32 %v2663, %v3006
        %3008 = vmatpush.msra.mxu0 %v3007
        %v3009 = vand.u32 %v2662, 4294901760
        %v3010 = vsub.f32 %v2662, %v3009
        %3011 = vmatpush.msra.mxu0 %v3010
        %v3012 = vand.u32 %v2661, 4294901760
        %v3013 = vsub.f32 %v2661, %v3012
        %3014 = vmatpush.msra.mxu0 %v3013
        %v3015 = vand.u32 %v2660, 4294901760
        %v3016 = vsub.f32 %v2660, %v3015
        %3017 = vmatpush.msra.mxu0 %v3016
        %v3018 = vand.u32 %v2659, 4294901760
        %v3019 = vsub.f32 %v2659, %v3018
        %3020 = vmatpush.msra.mxu0 %v3019
        %v3021 = vand.u32 %v2658, 4294901760
        %v3022 = vsub.f32 %v2658, %v3021
        %3023 = vmatpush.msra.mxu0 %v3022
        %v3024 = vand.u32 %v2657, 4294901760
        %v3025 = vsub.f32 %v2657, %v3024
        %3026 = vmatpush.msra.mxu0 %v3025
        %v3027 = vand.u32 %v2656, 4294901760
        %v3028 = vsub.f32 %v2656, %v3027
        %3029 = vmatpush.msra.mxu0 %v3028
        %v3030 = vand.u32 %v2655, 4294901760
        %v3031 = vsub.f32 %v2655, %v3030
        %3032 = vmatpush.msra.mxu0 %v3031
        %v3033 = vand.u32 %v2654, 4294901760
        %v3034 = vsub.f32 %v2654, %v3033
        %3035 = vmatpush.msra.mxu0 %v3034
        %v3036 = vand.u32 %v2653, 4294901760
        %v3037 = vsub.f32 %v2653, %v3036
        %3038 = vmatpush.msra.mxu0 %v3037
        %v3039 = vand.u32 %v2637, 4294901760
        %v3040 = vsub.f32 %v2637, %v3039
        %3041 = vmatmul.f32.gmra.mxu0 %v3040
        %v3042 = vpop.f32.mrf.mxu0
        %v3043 = vadd.f32 %v2929, %v3042
        %v3044 = vand.u32 %v2638, 4294901760
        %v3045 = vsub.f32 %v2638, %v3044
        %3046 = vmatmul.f32.gmra.mxu0 %v3045
        %v3047 = vpop.f32.mrf.mxu0
        %v3048 = vadd.f32 %v2933, %v3047
        %v3049 = vand.u32 %v2639, 4294901760
        %v3050 = vsub.f32 %v2639, %v3049
        %3051 = vmatmul.f32.gmra.mxu0 %v3050
        %v3052 = vpop.f32.mrf.mxu0
        %v3053 = vadd.f32 %v2937, %v3052
        %v3054 = vand.u32 %v2640, 4294901760
        %v3055 = vsub.f32 %v2640, %v3054
        %3056 = vmatmul.f32.gmra.mxu0 %v3055
        %v3057 = vpop.f32.mrf.mxu0
        %v3058 = vadd.f32 %v2941, %v3057
        %v3059 = vand.u32 %v2641, 4294901760
        %v3060 = vsub.f32 %v2641, %v3059
        %3061 = vmatmul.f32.gmra.mxu0 %v3060
        %v3062 = vpop.f32.mrf.mxu0
        %v3063 = vadd.f32 %v2945, %v3062
        %v3064 = vand.u32 %v2642, 4294901760
        %v3065 = vsub.f32 %v2642, %v3064
        %3066 = vmatmul.f32.gmra.mxu0 %v3065
        %v3067 = vpop.f32.mrf.mxu0
        %v3068 = vadd.f32 %v2949, %v3067
        %v3069 = vand.u32 %v2643, 4294901760
        %v3070 = vsub.f32 %v2643, %v3069
        %3071 = vmatmul.f32.gmra.mxu0 %v3070
        %v3072 = vpop.f32.mrf.mxu0
        %v3073 = vadd.f32 %v2953, %v3072
        %v3074 = vand.u32 %v2644, 4294901760
        %v3075 = vsub.f32 %v2644, %v3074
        %3076 = vmatmul.f32.gmra.mxu0 %v3075
        %v3077 = vpop.f32.mrf.mxu0
        %v3078 = vadd.f32 %v2957, %v3077
        %v3079 = vand.u32 %v2645, 4294901760
        %v3080 = vsub.f32 %v2645, %v3079
        %3081 = vmatmul.f32.gmra.mxu0 %v3080
        %v3082 = vpop.f32.mrf.mxu0
        %v3083 = vadd.f32 %v2961, %v3082
        %v3084 = vand.u32 %v2646, 4294901760
        %v3085 = vsub.f32 %v2646, %v3084
        %3086 = vmatmul.f32.gmra.mxu0 %v3085
        %v3087 = vpop.f32.mrf.mxu0
        %v3088 = vadd.f32 %v2965, %v3087
        %v3089 = vand.u32 %v2647, 4294901760
        %v3090 = vsub.f32 %v2647, %v3089
        %3091 = vmatmul.f32.gmra.mxu0 %v3090
        %v3092 = vpop.f32.mrf.mxu0
        %v3093 = vadd.f32 %v2969, %v3092
        %v3094 = vand.u32 %v2648, 4294901760
        %v3095 = vsub.f32 %v2648, %v3094
        %3096 = vmatmul.f32.gmra.mxu0 %v3095
        %v3097 = vpop.f32.mrf.mxu0
        %v3098 = vadd.f32 %v2973, %v3097
        %v3099 = vand.u32 %v2649, 4294901760
        %v3100 = vsub.f32 %v2649, %v3099
        %3101 = vmatmul.f32.gmra.mxu0 %v3100
        %v3102 = vpop.f32.mrf.mxu0
        %v3103 = vadd.f32 %v2977, %v3102
        %v3104 = vand.u32 %v2650, 4294901760
        %v3105 = vsub.f32 %v2650, %v3104
        %3106 = vmatmul.f32.gmra.mxu0 %v3105
        %v3107 = vpop.f32.mrf.mxu0
        %v3108 = vadd.f32 %v2981, %v3107
        %v3109 = vand.u32 %v2651, 4294901760
        %v3110 = vsub.f32 %v2651, %v3109
        %3111 = vmatmul.f32.gmra.mxu0 %v3110
        %v3112 = vpop.f32.mrf.mxu0
        %v3113 = vadd.f32 %v2985, %v3112
        %v3114 = vand.u32 %v2652, 4294901760
        %v3115 = vsub.f32 %v2652, %v3114
        %3116 = vmatmul.f32.gmra.mxu0 %v3115
        %v3117 = vpop.f32.mrf.mxu0
        %v3118 = vadd.f32 %v2989, %v3117
        %3119 = vdwg.mxu0
        %v3120 = vand.u32 %v2668, 4294901760
        %3121 = vmatpush.msra.mxu0 %v3120
        %v3122 = vand.u32 %v2667, 4294901760
        %3123 = vmatpush.msra.mxu0 %v3122
        %v3124 = vand.u32 %v2666, 4294901760
        %3125 = vmatpush.msra.mxu0 %v3124
        %v3126 = vand.u32 %v2665, 4294901760
        %3127 = vmatpush.msra.mxu0 %v3126
        %v3128 = vand.u32 %v2664, 4294901760
        %3129 = vmatpush.msra.mxu0 %v3128
        %v3130 = vand.u32 %v2663, 4294901760
        %3131 = vmatpush.msra.mxu0 %v3130
        %v3132 = vand.u32 %v2662, 4294901760
        %3133 = vmatpush.msra.mxu0 %v3132
        %v3134 = vand.u32 %v2661, 4294901760
        %3135 = vmatpush.msra.mxu0 %v3134
        %v3136 = vand.u32 %v2660, 4294901760
        %3137 = vmatpush.msra.mxu0 %v3136
        %v3138 = vand.u32 %v2659, 4294901760
        %3139 = vmatpush.msra.mxu0 %v3138
        %v3140 = vand.u32 %v2658, 4294901760
        %3141 = vmatpush.msra.mxu0 %v3140
        %v3142 = vand.u32 %v2657, 4294901760
        %3143 = vmatpush.msra.mxu0 %v3142
        %v3144 = vand.u32 %v2656, 4294901760
        %3145 = vmatpush.msra.mxu0 %v3144
        %v3146 = vand.u32 %v2655, 4294901760
        %3147 = vmatpush.msra.mxu0 %v3146
        %v3148 = vand.u32 %v2654, 4294901760
        %3149 = vmatpush.msra.mxu0 %v3148
        %v3150 = vand.u32 %v2653, 4294901760
        %3151 = vmatpush.msra.mxu0 %v3150
        %v3152 = vand.u32 %v2637, 4294901760
        %v3153 = vsub.f32 %v2637, %v3152
        %v3154 = vand.u32 %v3153, 4294901760
        %3155 = vmatmul.f32.gmra.mxu0 %v3154
        %v3156 = vpop.f32.mrf.mxu0
        %v3157 = vadd.f32 %v3043, %v3156
        %v3158 = vand.u32 %v2638, 4294901760
        %v3159 = vsub.f32 %v2638, %v3158
        %v3160 = vand.u32 %v3159, 4294901760
        %3161 = vmatmul.f32.gmra.mxu0 %v3160
        %v3162 = vpop.f32.mrf.mxu0
        %v3163 = vadd.f32 %v3048, %v3162
        %v3164 = vand.u32 %v2639, 4294901760
        %v3165 = vsub.f32 %v2639, %v3164
        %v3166 = vand.u32 %v3165, 4294901760
        %3167 = vmatmul.f32.gmra.mxu0 %v3166
        %v3168 = vpop.f32.mrf.mxu0
        %v3169 = vadd.f32 %v3053, %v3168
        %v3170 = vand.u32 %v2640, 4294901760
        %v3171 = vsub.f32 %v2640, %v3170
        %v3172 = vand.u32 %v3171, 4294901760
        %3173 = vmatmul.f32.gmra.mxu0 %v3172
        %v3174 = vpop.f32.mrf.mxu0
        %v3175 = vadd.f32 %v3058, %v3174
        %v3176 = vand.u32 %v2641, 4294901760
        %v3177 = vsub.f32 %v2641, %v3176
        %v3178 = vand.u32 %v3177, 4294901760
        %3179 = vmatmul.f32.gmra.mxu0 %v3178
        %v3180 = vpop.f32.mrf.mxu0
        %v3181 = vadd.f32 %v3063, %v3180
        %v3182 = vand.u32 %v2642, 4294901760
        %v3183 = vsub.f32 %v2642, %v3182
        %v3184 = vand.u32 %v3183, 4294901760
        %3185 = vmatmul.f32.gmra.mxu0 %v3184
        %v3186 = vpop.f32.mrf.mxu0
        %v3187 = vadd.f32 %v3068, %v3186
        %v3188 = vand.u32 %v2643, 4294901760
        %v3189 = vsub.f32 %v2643, %v3188
        %v3190 = vand.u32 %v3189, 4294901760
        %3191 = vmatmul.f32.gmra.mxu0 %v3190
        %v3192 = vpop.f32.mrf.mxu0
        %v3193 = vadd.f32 %v3073, %v3192
        %v3194 = vand.u32 %v2644, 4294901760
        %v3195 = vsub.f32 %v2644, %v3194
        %v3196 = vand.u32 %v3195, 4294901760
        %3197 = vmatmul.f32.gmra.mxu0 %v3196
        %v3198 = vpop.f32.mrf.mxu0
        %v3199 = vadd.f32 %v3078, %v3198
        %v3200 = vand.u32 %v2645, 4294901760
        %v3201 = vsub.f32 %v2645, %v3200
        %v3202 = vand.u32 %v3201, 4294901760
        %3203 = vmatmul.f32.gmra.mxu0 %v3202
        %v3204 = vpop.f32.mrf.mxu0
        %v3205 = vadd.f32 %v3083, %v3204
        %v3206 = vand.u32 %v2646, 4294901760
        %v3207 = vsub.f32 %v2646, %v3206
        %v3208 = vand.u32 %v3207, 4294901760
        %3209 = vmatmul.f32.gmra.mxu0 %v3208
        %v3210 = vpop.f32.mrf.mxu0
        %v3211 = vadd.f32 %v3088, %v3210
        %v3212 = vand.u32 %v2647, 4294901760
        %v3213 = vsub.f32 %v2647, %v3212
        %v3214 = vand.u32 %v3213, 4294901760
        %3215 = vmatmul.f32.gmra.mxu0 %v3214
        %v3216 = vpop.f32.mrf.mxu0
        %v3217 = vadd.f32 %v3093, %v3216
        %v3218 = vand.u32 %v2648, 4294901760
        %v3219 = vsub.f32 %v2648, %v3218
        %v3220 = vand.u32 %v3219, 4294901760
        %3221 = vmatmul.f32.gmra.mxu0 %v3220
        %v3222 = vpop.f32.mrf.mxu0
        %v3223 = vadd.f32 %v3098, %v3222
        %v3224 = vand.u32 %v2649, 4294901760
        %v3225 = vsub.f32 %v2649, %v3224
        %v3226 = vand.u32 %v3225, 4294901760
        %3227 = vmatmul.f32.gmra.mxu0 %v3226
        %v3228 = vpop.f32.mrf.mxu0
        %v3229 = vadd.f32 %v3103, %v3228
        %v3230 = vand.u32 %v2650, 4294901760
        %v3231 = vsub.f32 %v2650, %v3230
        %v3232 = vand.u32 %v3231, 4294901760
        %3233 = vmatmul.f32.gmra.mxu0 %v3232
        %v3234 = vpop.f32.mrf.mxu0
        %v3235 = vadd.f32 %v3108, %v3234
        %v3236 = vand.u32 %v2651, 4294901760
        %v3237 = vsub.f32 %v2651, %v3236
        %v3238 = vand.u32 %v3237, 4294901760
        %3239 = vmatmul.f32.gmra.mxu0 %v3238
        %v3240 = vpop.f32.mrf.mxu0
        %v3241 = vadd.f32 %v3113, %v3240
        %v3242 = vand.u32 %v2652, 4294901760
        %v3243 = vsub.f32 %v2652, %v3242
        %v3244 = vand.u32 %v3243, 4294901760
        %3245 = vmatmul.f32.gmra.mxu0 %v3244
        %v3246 = vpop.f32.mrf.mxu0
        %v3247 = vadd.f32 %v3118, %v3246
        %3248 = vdwg.mxu0
        %v3249 = vand.u32 %v2668, 4294901760
        %v3250 = vsub.f32 %v2668, %v3249
        %v3251 = vand.u32 %v3250, 4294901760
        %3252 = vmatpush.msra.mxu0 %v3251
        %v3253 = vand.u32 %v2667, 4294901760
        %v3254 = vsub.f32 %v2667, %v3253
        %v3255 = vand.u32 %v3254, 4294901760
        %3256 = vmatpush.msra.mxu0 %v3255
        %v3257 = vand.u32 %v2666, 4294901760
        %v3258 = vsub.f32 %v2666, %v3257
        %v3259 = vand.u32 %v3258, 4294901760
        %3260 = vmatpush.msra.mxu0 %v3259
        %v3261 = vand.u32 %v2665, 4294901760
        %v3262 = vsub.f32 %v2665, %v3261
        %v3263 = vand.u32 %v3262, 4294901760
        %3264 = vmatpush.msra.mxu0 %v3263
        %v3265 = vand.u32 %v2664, 4294901760
        %v3266 = vsub.f32 %v2664, %v3265
        %v3267 = vand.u32 %v3266, 4294901760
        %3268 = vmatpush.msra.mxu0 %v3267
        %v3269 = vand.u32 %v2663, 4294901760
        %v3270 = vsub.f32 %v2663, %v3269
        %v3271 = vand.u32 %v3270, 4294901760
        %3272 = vmatpush.msra.mxu0 %v3271
        %v3273 = vand.u32 %v2662, 4294901760
        %v3274 = vsub.f32 %v2662, %v3273
        %v3275 = vand.u32 %v3274, 4294901760
        %3276 = vmatpush.msra.mxu0 %v3275
        %v3277 = vand.u32 %v2661, 4294901760
        %v3278 = vsub.f32 %v2661, %v3277
        %v3279 = vand.u32 %v3278, 4294901760
        %3280 = vmatpush.msra.mxu0 %v3279
        %v3281 = vand.u32 %v2660, 4294901760
        %v3282 = vsub.f32 %v2660, %v3281
        %v3283 = vand.u32 %v3282, 4294901760
        %3284 = vmatpush.msra.mxu0 %v3283
        %v3285 = vand.u32 %v2659, 4294901760
        %v3286 = vsub.f32 %v2659, %v3285
        %v3287 = vand.u32 %v3286, 4294901760
        %3288 = vmatpush.msra.mxu0 %v3287
        %v3289 = vand.u32 %v2658, 4294901760
        %v3290 = vsub.f32 %v2658, %v3289
        %v3291 = vand.u32 %v3290, 4294901760
        %3292 = vmatpush.msra.mxu0 %v3291
        %v3293 = vand.u32 %v2657, 4294901760
        %v3294 = vsub.f32 %v2657, %v3293
        %v3295 = vand.u32 %v3294, 4294901760
        %3296 = vmatpush.msra.mxu0 %v3295
        %v3297 = vand.u32 %v2656, 4294901760
        %v3298 = vsub.f32 %v2656, %v3297
        %v3299 = vand.u32 %v3298, 4294901760
        %3300 = vmatpush.msra.mxu0 %v3299
        %v3301 = vand.u32 %v2655, 4294901760
        %v3302 = vsub.f32 %v2655, %v3301
        %v3303 = vand.u32 %v3302, 4294901760
        %3304 = vmatpush.msra.mxu0 %v3303
        %v3305 = vand.u32 %v2654, 4294901760
        %v3306 = vsub.f32 %v2654, %v3305
        %v3307 = vand.u32 %v3306, 4294901760
        %3308 = vmatpush.msra.mxu0 %v3307
        %v3309 = vand.u32 %v2653, 4294901760
        %v3310 = vsub.f32 %v2653, %v3309
        %v3311 = vand.u32 %v3310, 4294901760
        %3312 = vmatpush.msra.mxu0 %v3311
        %v3313 = vand.u32 %v2637, 4294901760
        %3314 = vmatmul.f32.gmra.mxu0 %v3313
        %v3315 = vpop.f32.mrf.mxu0
        %v3316 = vadd.f32 %v3157, %v3315
        %v3317 = vand.u32 %v2638, 4294901760
        %3318 = vmatmul.f32.gmra.mxu0 %v3317
        %v3319 = vpop.f32.mrf.mxu0
        %v3320 = vadd.f32 %v3163, %v3319
        %v3321 = vand.u32 %v2639, 4294901760
        %3322 = vmatmul.f32.gmra.mxu0 %v3321
        %v3323 = vpop.f32.mrf.mxu0
        %v3324 = vadd.f32 %v3169, %v3323
        %v3325 = vand.u32 %v2640, 4294901760
        %3326 = vmatmul.f32.gmra.mxu0 %v3325
        %v3327 = vpop.f32.mrf.mxu0
        %v3328 = vadd.f32 %v3175, %v3327
        %v3329 = vand.u32 %v2641, 4294901760
        %3330 = vmatmul.f32.gmra.mxu0 %v3329
        %v3331 = vpop.f32.mrf.mxu0
        %v3332 = vadd.f32 %v3181, %v3331
        %v3333 = vand.u32 %v2642, 4294901760
        %3334 = vmatmul.f32.gmra.mxu0 %v3333
        %v3335 = vpop.f32.mrf.mxu0
        %v3336 = vadd.f32 %v3187, %v3335
        %v3337 = vand.u32 %v2643, 4294901760
        %3338 = vmatmul.f32.gmra.mxu0 %v3337
        %v3339 = vpop.f32.mrf.mxu0
        %v3340 = vadd.f32 %v3193, %v3339
        %v3341 = vand.u32 %v2644, 4294901760
        %3342 = vmatmul.f32.gmra.mxu0 %v3341
        %v3343 = vpop.f32.mrf.mxu0
        %v3344 = vadd.f32 %v3199, %v3343
        %v3345 = vand.u32 %v2645, 4294901760
        %3346 = vmatmul.f32.gmra.mxu0 %v3345
        %v3347 = vpop.f32.mrf.mxu0
        %v3348 = vadd.f32 %v3205, %v3347
        %v3349 = vand.u32 %v2646, 4294901760
        %3350 = vmatmul.f32.gmra.mxu0 %v3349
        %v3351 = vpop.f32.mrf.mxu0
        %v3352 = vadd.f32 %v3211, %v3351
        %v3353 = vand.u32 %v2647, 4294901760
        %3354 = vmatmul.f32.gmra.mxu0 %v3353
        %v3355 = vpop.f32.mrf.mxu0
        %v3356 = vadd.f32 %v3217, %v3355
        %v3357 = vand.u32 %v2648, 4294901760
        %3358 = vmatmul.f32.gmra.mxu0 %v3357
        %v3359 = vpop.f32.mrf.mxu0
        %v3360 = vadd.f32 %v3223, %v3359
        %v3361 = vand.u32 %v2649, 4294901760
        %3362 = vmatmul.f32.gmra.mxu0 %v3361
        %v3363 = vpop.f32.mrf.mxu0
        %v3364 = vadd.f32 %v3229, %v3363
        %v3365 = vand.u32 %v2650, 4294901760
        %3366 = vmatmul.f32.gmra.mxu0 %v3365
        %v3367 = vpop.f32.mrf.mxu0
        %v3368 = vadd.f32 %v3235, %v3367
        %v3369 = vand.u32 %v2651, 4294901760
        %3370 = vmatmul.f32.gmra.mxu0 %v3369
        %v3371 = vpop.f32.mrf.mxu0
        %v3372 = vadd.f32 %v3241, %v3371
        %v3373 = vand.u32 %v2652, 4294901760
        %3374 = vmatmul.f32.gmra.mxu0 %v3373
        %v3375 = vpop.f32.mrf.mxu0
        %v3376 = vadd.f32 %v3247, %v3375
        %3377 = vdwg.mxu0
        %v3378 = vand.u32 %v2668, 4294901760
        %3379 = vmatpush.msra.mxu0 %v3378
        %v3380 = vand.u32 %v2667, 4294901760
        %3381 = vmatpush.msra.mxu0 %v3380
        %v3382 = vand.u32 %v2666, 4294901760
        %3383 = vmatpush.msra.mxu0 %v3382
        %v3384 = vand.u32 %v2665, 4294901760
        %3385 = vmatpush.msra.mxu0 %v3384
        %v3386 = vand.u32 %v2664, 4294901760
        %3387 = vmatpush.msra.mxu0 %v3386
        %v3388 = vand.u32 %v2663, 4294901760
        %3389 = vmatpush.msra.mxu0 %v3388
        %v3390 = vand.u32 %v2662, 4294901760
        %3391 = vmatpush.msra.mxu0 %v3390
        %v3392 = vand.u32 %v2661, 4294901760
        %3393 = vmatpush.msra.mxu0 %v3392
        %v3394 = vand.u32 %v2660, 4294901760
        %3395 = vmatpush.msra.mxu0 %v3394
        %v3396 = vand.u32 %v2659, 4294901760
        %3397 = vmatpush.msra.mxu0 %v3396
        %v3398 = vand.u32 %v2658, 4294901760
        %3399 = vmatpush.msra.mxu0 %v3398
        %v3400 = vand.u32 %v2657, 4294901760
        %3401 = vmatpush.msra.mxu0 %v3400
        %v3402 = vand.u32 %v2656, 4294901760
        %3403 = vmatpush.msra.mxu0 %v3402
        %v3404 = vand.u32 %v2655, 4294901760
        %3405 = vmatpush.msra.mxu0 %v3404
        %v3406 = vand.u32 %v2654, 4294901760
        %3407 = vmatpush.msra.mxu0 %v3406
        %v3408 = vand.u32 %v2653, 4294901760
        %3409 = vmatpush.msra.mxu0 %v3408
        %v3410 = vand.u32 %v2637, 4294901760
        %3411 = vmatmul.f32.gmra.mxu0 %v3410
        %v3412 = vpop.f32.mrf.mxu0
        %v3413 = vadd.f32 %v3316, %v3412
        %v3414 = vand.u32 %v2638, 4294901760
        %3415 = vmatmul.f32.gmra.mxu0 %v3414
        %v3416 = vpop.f32.mrf.mxu0
        %v3417 = vadd.f32 %v3320, %v3416
        %v3418 = vand.u32 %v2639, 4294901760
        %3419 = vmatmul.f32.gmra.mxu0 %v3418
        %v3420 = vpop.f32.mrf.mxu0
        %v3421 = vadd.f32 %v3324, %v3420
        %v3422 = vand.u32 %v2640, 4294901760
        %3423 = vmatmul.f32.gmra.mxu0 %v3422
        %v3424 = vpop.f32.mrf.mxu0
        %v3425 = vadd.f32 %v3328, %v3424
        %v3426 = vand.u32 %v2641, 4294901760
        %3427 = vmatmul.f32.gmra.mxu0 %v3426
        %v3428 = vpop.f32.mrf.mxu0
        %v3429 = vadd.f32 %v3332, %v3428
        %v3430 = vand.u32 %v2642, 4294901760
        %3431 = vmatmul.f32.gmra.mxu0 %v3430
        %v3432 = vpop.f32.mrf.mxu0
        %v3433 = vadd.f32 %v3336, %v3432
        %v3434 = vand.u32 %v2643, 4294901760
        %3435 = vmatmul.f32.gmra.mxu0 %v3434
        %v3436 = vpop.f32.mrf.mxu0
        %v3437 = vadd.f32 %v3340, %v3436
        %v3438 = vand.u32 %v2644, 4294901760
        %3439 = vmatmul.f32.gmra.mxu0 %v3438
        %v3440 = vpop.f32.mrf.mxu0
        %v3441 = vadd.f32 %v3344, %v3440
        %v3442 = vand.u32 %v2645, 4294901760
        %3443 = vmatmul.f32.gmra.mxu0 %v3442
        %v3444 = vpop.f32.mrf.mxu0
        %v3445 = vadd.f32 %v3348, %v3444
        %v3446 = vand.u32 %v2646, 4294901760
        %3447 = vmatmul.f32.gmra.mxu0 %v3446
        %v3448 = vpop.f32.mrf.mxu0
        %v3449 = vadd.f32 %v3352, %v3448
        %v3450 = vand.u32 %v2647, 4294901760
        %3451 = vmatmul.f32.gmra.mxu0 %v3450
        %v3452 = vpop.f32.mrf.mxu0
        %v3453 = vadd.f32 %v3356, %v3452
        %v3454 = vand.u32 %v2648, 4294901760
        %3455 = vmatmul.f32.gmra.mxu0 %v3454
        %v3456 = vpop.f32.mrf.mxu0
        %v3457 = vadd.f32 %v3360, %v3456
        %v3458 = vand.u32 %v2649, 4294901760
        %3459 = vmatmul.f32.gmra.mxu0 %v3458
        %v3460 = vpop.f32.mrf.mxu0
        %v3461 = vadd.f32 %v3364, %v3460
        %v3462 = vand.u32 %v2650, 4294901760
        %3463 = vmatmul.f32.gmra.mxu0 %v3462
        %v3464 = vpop.f32.mrf.mxu0
        %v3465 = vadd.f32 %v3368, %v3464
        %v3466 = vand.u32 %v2651, 4294901760
        %3467 = vmatmul.f32.gmra.mxu0 %v3466
        %v3468 = vpop.f32.mrf.mxu0
        %v3469 = vadd.f32 %v3372, %v3468
        %v3470 = vand.u32 %v2652, 4294901760
        %3471 = vmatmul.f32.gmra.mxu0 %v3470
        %v3472 = vpop.f32.mrf.mxu0
        %v3473 = vadd.f32 %v3376, %v3472
        %3474 = vdwg.mxu0
        %p3475 = scmp.eq.s32.totalorder %s24, 0
        // Predicated region
        $region71: #{tpu_custom_call.1} parent=65 // pred_check
          %p3476 = pneg %p3475
        $region72: #{tpu_custom_call.1} parent=65 // pred_check_branch
          %3478 = sbr.rel (%p3476) target = $region74
        $region73: #{tpu_custom_call.1} parent=65 // pred_region
          %vm3479 = vcmask 7168
          %3480 = vst.msk [vmem:[#allocation2] sm:$0xff] %vm3479, inf
          %3481 = vst.msk [vmem:[#allocation2 + $0x8] sm:$0xff] %vm3479, inf
          %3482 = vst.msk [vmem:[#allocation2 + $0x10] sm:$0xff] %vm3479, inf
          %3483 = vst.msk [vmem:[#allocation2 + $0x18] sm:$0xff] %vm3479, inf
          %3484 = vst.msk [vmem:[#allocation2 + $0x20] sm:$0xff] %vm3479, inf
          %3485 = vst.msk [vmem:[#allocation2 + $0x28] sm:$0xff] %vm3479, inf
          %3486 = vst.msk [vmem:[#allocation2 + $0x30] sm:$0xff] %vm3479, inf
          %3487 = vst.msk [vmem:[#allocation2 + $0x38] sm:$0xff] %vm3479, inf
          %3488 = vst.msk [vmem:[#allocation2 + $0x40] sm:$0xff] %vm3479, inf
          %3489 = vst.msk [vmem:[#allocation2 + $0x48] sm:$0xff] %vm3479, inf
          %3490 = vst.msk [vmem:[#allocation2 + $0x50] sm:$0xff] %vm3479, inf
          %3491 = vst.msk [vmem:[#allocation2 + $0x58] sm:$0xff] %vm3479, inf
          %3492 = vst.msk [vmem:[#allocation2 + $0x60] sm:$0xff] %vm3479, inf
          %3493 = vst.msk [vmem:[#allocation2 + $0x68] sm:$0xff] %vm3479, inf
          %3494 = vst.msk [vmem:[#allocation2 + $0x70] sm:$0xff] %vm3479, inf
          %3495 = vst.msk [vmem:[#allocation2 + $0x78] sm:$0xff] %vm3479, inf
          %vm3496 = vcmask 523264
          %3497 = vst.msk [vmem:[#allocation3] sm:$0xff] %vm3496, 0.0
          %3498 = vst.msk [vmem:[#allocation3 + $0x8] sm:$0xff] %vm3496, 0.0
          %3499 = vst.msk [vmem:[#allocation3 + $0x10] sm:$0xff] %vm3496, 0.0
          %3500 = vst.msk [vmem:[#allocation3 + $0x18] sm:$0xff] %vm3496, 0.0
          %3501 = vst.msk [vmem:[#allocation3 + $0x20] sm:$0xff] %vm3496, 0.0
          %3502 = vst.msk [vmem:[#allocation3 + $0x28] sm:$0xff] %vm3496, 0.0
          %3503 = vst.msk [vmem:[#allocation3 + $0x30] sm:$0xff] %vm3496, 0.0
          %3504 = vst.msk [vmem:[#allocation3 + $0x38] sm:$0xff] %vm3496, 0.0
          %3505 = vst.msk [vmem:[#allocation3 + $0x40] sm:$0xff] %vm3496, 0.0
          %3506 = vst.msk [vmem:[#allocation3 + $0x48] sm:$0xff] %vm3496, 0.0
          %3507 = vst.msk [vmem:[#allocation3 + $0x50] sm:$0xff] %vm3496, 0.0
          %3508 = vst.msk [vmem:[#allocation3 + $0x58] sm:$0xff] %vm3496, 0.0
          %3509 = vst.msk [vmem:[#allocation3 + $0x60] sm:$0xff] %vm3496, 0.0
          %3510 = vst.msk [vmem:[#allocation3 + $0x68] sm:$0xff] %vm3496, 0.0
          %3511 = vst.msk [vmem:[#allocation3 + $0x70] sm:$0xff] %vm3496, 0.0
          %3512 = vst.msk [vmem:[#allocation3 + $0x78] sm:$0xff] %vm3496, 0.0
        $region74: #{tpu_custom_call.1} parent=65 // pred_fallthru
          _
        %v3513 = vld [vmem:[#allocation2] sm:$0xff]
        %v3514 = vld [vmem:[#allocation2 + $0x8] sm:$0xff]
        %v3515 = vld [vmem:[#allocation2 + $0x10] sm:$0xff]
        %v3516 = vld [vmem:[#allocation2 + $0x18] sm:$0xff]
        %v3517 = vld [vmem:[#allocation2 + $0x20] sm:$0xff]
        %v3518 = vld [vmem:[#allocation2 + $0x28] sm:$0xff]
        %v3519 = vld [vmem:[#allocation2 + $0x30] sm:$0xff]
        %v3520 = vld [vmem:[#allocation2 + $0x38] sm:$0xff]
        %v3521 = vld [vmem:[#allocation2 + $0x40] sm:$0xff]
        %v3522 = vld [vmem:[#allocation2 + $0x48] sm:$0xff]
        %v3523 = vld [vmem:[#allocation2 + $0x50] sm:$0xff]
        %v3524 = vld [vmem:[#allocation2 + $0x58] sm:$0xff]
        %v3525 = vld [vmem:[#allocation2 + $0x60] sm:$0xff]
        %v3526 = vld [vmem:[#allocation2 + $0x68] sm:$0xff]
        %v3527 = vld [vmem:[#allocation2 + $0x70] sm:$0xff]
        %v3528 = vld [vmem:[#allocation2 + $0x78] sm:$0xff]
        %vm3529 = vcmp.lt.f32.partialorder %v2316, %v3513
        %vm3530 = vcmp.lt.f32.partialorder %v2318, %v3514
        %vm3531 = vcmp.lt.f32.partialorder %v2320, %v3515
        %vm3532 = vcmp.lt.f32.partialorder %v2322, %v3516
        %vm3533 = vcmp.lt.f32.partialorder %v2324, %v3517
        %vm3534 = vcmp.lt.f32.partialorder %v2326, %v3518
        %vm3535 = vcmp.lt.f32.partialorder %v2328, %v3519
        %vm3536 = vcmp.lt.f32.partialorder %v2330, %v3520
        %vm3537 = vcmp.lt.f32.partialorder %v2332, %v3521
        %vm3538 = vcmp.lt.f32.partialorder %v2334, %v3522
        %vm3539 = vcmp.lt.f32.partialorder %v2336, %v3523
        %vm3540 = vcmp.lt.f32.partialorder %v2338, %v3524
        %vm3541 = vcmp.lt.f32.partialorder %v2340, %v3525
        %vm3542 = vcmp.lt.f32.partialorder %v2342, %v3526
        %vm3543 = vcmp.lt.f32.partialorder %v2344, %v3527
        %vm3544 = vcmp.lt.f32.partialorder %v2346, %v3528
        %v3545 = vsel %vm3529, %v2316, %v3513
        %v3546 = vsel %vm3530, %v2318, %v3514
        %v3547 = vsel %vm3531, %v2320, %v3515
        %v3548 = vsel %vm3532, %v2322, %v3516
        %v3549 = vsel %vm3533, %v2324, %v3517
        %v3550 = vsel %vm3534, %v2326, %v3518
        %v3551 = vsel %vm3535, %v2328, %v3519
        %v3552 = vsel %vm3536, %v2330, %v3520
        %v3553 = vsel %vm3537, %v2332, %v3521
        %v3554 = vsel %vm3538, %v2334, %v3522
        %v3555 = vsel %vm3539, %v2336, %v3523
        %v3556 = vsel %vm3540, %v2338, %v3524
        %v3557 = vsel %vm3541, %v2340, %v3525
        %v3558 = vsel %vm3542, %v2342, %v3526
        %v3559 = vsel %vm3543, %v2344, %v3527
        %v3560 = vsel %vm3544, %v2346, %v3528
        %vm3561 = vcmask 7168
        %3562 = vst.msk [vmem:[#allocation2] sm:$0xff] %vm3561, %v3545
        %3563 = vst.msk [vmem:[#allocation2 + $0x8] sm:$0xff] %vm3561, %v3546
        %3564 = vst.msk [vmem:[#allocation2 + $0x10] sm:$0xff] %vm3561, %v3547
        %3565 = vst.msk [vmem:[#allocation2 + $0x18] sm:$0xff] %vm3561, %v3548
        %3566 = vst.msk [vmem:[#allocation2 + $0x20] sm:$0xff] %vm3561, %v3549
        %3567 = vst.msk [vmem:[#allocation2 + $0x28] sm:$0xff] %vm3561, %v3550
        %3568 = vst.msk [vmem:[#allocation2 + $0x30] sm:$0xff] %vm3561, %v3551
        %3569 = vst.msk [vmem:[#allocation2 + $0x38] sm:$0xff] %vm3561, %v3552
        %3570 = vst.msk [vmem:[#allocation2 + $0x40] sm:$0xff] %vm3561, %v3553
        %3571 = vst.msk [vmem:[#allocation2 + $0x48] sm:$0xff] %vm3561, %v3554
        %3572 = vst.msk [vmem:[#allocation2 + $0x50] sm:$0xff] %vm3561, %v3555
        %3573 = vst.msk [vmem:[#allocation2 + $0x58] sm:$0xff] %vm3561, %v3556
        %3574 = vst.msk [vmem:[#allocation2 + $0x60] sm:$0xff] %vm3561, %v3557
        %3575 = vst.msk [vmem:[#allocation2 + $0x68] sm:$0xff] %vm3561, %v3558
        %3576 = vst.msk [vmem:[#allocation2 + $0x70] sm:$0xff] %vm3561, %v3559
        %3577 = vst.msk [vmem:[#allocation2 + $0x78] sm:$0xff] %vm3561, %v3560
        %v3578 = vld [vmem:[#allocation3] sm:$0xff]
        %v3579 = vld [vmem:[#allocation3 + $0x8] sm:$0xff]
        %v3580 = vld [vmem:[#allocation3 + $0x10] sm:$0xff]
        %v3581 = vld [vmem:[#allocation3 + $0x18] sm:$0xff]
        %v3582 = vld [vmem:[#allocation3 + $0x20] sm:$0xff]
        %v3583 = vld [vmem:[#allocation3 + $0x28] sm:$0xff]
        %v3584 = vld [vmem:[#allocation3 + $0x30] sm:$0xff]
        %v3585 = vld [vmem:[#allocation3 + $0x38] sm:$0xff]
        %v3586 = vld [vmem:[#allocation3 + $0x40] sm:$0xff]
        %v3587 = vld [vmem:[#allocation3 + $0x48] sm:$0xff]
        %v3588 = vld [vmem:[#allocation3 + $0x50] sm:$0xff]
        %v3589 = vld [vmem:[#allocation3 + $0x58] sm:$0xff]
        %v3590 = vld [vmem:[#allocation3 + $0x60] sm:$0xff]
        %v3591 = vld [vmem:[#allocation3 + $0x68] sm:$0xff]
        %v3592 = vld [vmem:[#allocation3 + $0x70] sm:$0xff]
        %v3593 = vld [vmem:[#allocation3 + $0x78] sm:$0xff]
        %v3594 = vsel %vm3529, 1, 0
        %v3595 = vsel %vm3530, 1, 0
        %v3596 = vsel %vm3531, 1, 0
        %v3597 = vsel %vm3532, 1, 0
        %v3598 = vsel %vm3533, 1, 0
        %v3599 = vsel %vm3534, 1, 0
        %v3600 = vsel %vm3535, 1, 0
        %v3601 = vsel %vm3536, 1, 0
        %v3602 = vsel %vm3537, 1, 0
        %v3603 = vsel %vm3538, 1, 0
        %v3604 = vsel %vm3539, 1, 0
        %v3605 = vsel %vm3540, 1, 0
        %v3606 = vsel %vm3541, 1, 0
        %v3607 = vsel %vm3542, 1, 0
        %v3608 = vsel %vm3543, 1, 0
        %v3609 = vsel %vm3544, 1, 0
        %3610 = vset.pattern.permute.xlu0 0
        %3611 = vperm.xlu0 %3610, %v3594
        %v3612 = vpop.permute.xlu0 %3611
        %3613 = vset.pattern.permute.xlu0 0
        %3614 = vperm.xlu0 %3613, %v3595
        %v3615 = vpop.permute.xlu0 %3614
        %3616 = vset.pattern.permute.xlu0 0
        %3617 = vperm.xlu0 %3616, %v3596
        %v3618 = vpop.permute.xlu0 %3617
        %3619 = vset.pattern.permute.xlu0 0
        %3620 = vperm.xlu0 %3619, %v3597
        %v3621 = vpop.permute.xlu0 %3620
        %3622 = vset.pattern.permute.xlu0 0
        %3623 = vperm.xlu0 %3622, %v3598
        %v3624 = vpop.permute.xlu0 %3623
        %3625 = vset.pattern.permute.xlu0 0
        %3626 = vperm.xlu0 %3625, %v3599
        %v3627 = vpop.permute.xlu0 %3626
        %3628 = vset.pattern.permute.xlu0 0
        %3629 = vperm.xlu0 %3628, %v3600
        %v3630 = vpop.permute.xlu0 %3629
        %3631 = vset.pattern.permute.xlu0 0
        %3632 = vperm.xlu0 %3631, %v3601
        %v3633 = vpop.permute.xlu0 %3632
        %3634 = vset.pattern.permute.xlu0 0
        %3635 = vperm.xlu0 %3634, %v3602
        %v3636 = vpop.permute.xlu0 %3635
        %3637 = vset.pattern.permute.xlu0 0
        %3638 = vperm.xlu0 %3637, %v3603
        %v3639 = vpop.permute.xlu0 %3638
        %3640 = vset.pattern.permute.xlu0 0
        %3641 = vperm.xlu0 %3640, %v3604
        %v3642 = vpop.permute.xlu0 %3641
        %3643 = vset.pattern.permute.xlu0 0
        %3644 = vperm.xlu0 %3643, %v3605
        %v3645 = vpop.permute.xlu0 %3644
        %3646 = vset.pattern.permute.xlu0 0
        %3647 = vperm.xlu0 %3646, %v3606
        %v3648 = vpop.permute.xlu0 %3647
        %3649 = vset.pattern.permute.xlu0 0
        %3650 = vperm.xlu0 %3649, %v3607
        %v3651 = vpop.permute.xlu0 %3650
        %3652 = vset.pattern.permute.xlu0 0
        %3653 = vperm.xlu0 %3652, %v3608
        %v3654 = vpop.permute.xlu0 %3653
        %3655 = vset.pattern.permute.xlu0 0
        %3656 = vperm.xlu0 %3655, %v3609
        %v3657 = vpop.permute.xlu0 %3656
        %vm3658 = vcmp.eq.s32.totalorder %v3612, 1
        %vm3659 = vcmp.eq.s32.totalorder %v3615, 1
        %vm3660 = vcmp.eq.s32.totalorder %v3618, 1
        %vm3661 = vcmp.eq.s32.totalorder %v3621, 1
        %vm3662 = vcmp.eq.s32.totalorder %v3624, 1
        %vm3663 = vcmp.eq.s32.totalorder %v3627, 1
        %vm3664 = vcmp.eq.s32.totalorder %v3630, 1
        %vm3665 = vcmp.eq.s32.totalorder %v3633, 1
        %vm3666 = vcmp.eq.s32.totalorder %v3636, 1
        %vm3667 = vcmp.eq.s32.totalorder %v3639, 1
        %vm3668 = vcmp.eq.s32.totalorder %v3642, 1
        %vm3669 = vcmp.eq.s32.totalorder %v3645, 1
        %vm3670 = vcmp.eq.s32.totalorder %v3648, 1
        %vm3671 = vcmp.eq.s32.totalorder %v3651, 1
        %vm3672 = vcmp.eq.s32.totalorder %v3654, 1
        %vm3673 = vcmp.eq.s32.totalorder %v3657, 1
        %v3674 = vsel %vm3658, %v3413, %v3578
        %v3675 = vsel %vm3659, %v3417, %v3579
        %v3676 = vsel %vm3660, %v3421, %v3580
        %v3677 = vsel %vm3661, %v3425, %v3581
        %v3678 = vsel %vm3662, %v3429, %v3582
        %v3679 = vsel %vm3663, %v3433, %v3583
        %v3680 = vsel %vm3664, %v3437, %v3584
        %v3681 = vsel %vm3665, %v3441, %v3585
        %v3682 = vsel %vm3666, %v3445, %v3586
        %v3683 = vsel %vm3667, %v3449, %v3587
        %v3684 = vsel %vm3668, %v3453, %v3588
        %v3685 = vsel %vm3669, %v3457, %v3589
        %v3686 = vsel %vm3670, %v3461, %v3590
        %v3687 = vsel %vm3671, %v3465, %v3591
        %v3688 = vsel %vm3672, %v3469, %v3592
        %v3689 = vsel %vm3673, %v3473, %v3593
        %vm3690 = vcmask 523264
        %3691 = vst.msk [vmem:[#allocation3] sm:$0xff] %vm3690, %v3674
        %3692 = vst.msk [vmem:[#allocation3 + $0x8] sm:$0xff] %vm3690, %v3675
        %3693 = vst.msk [vmem:[#allocation3 + $0x10] sm:$0xff] %vm3690, %v3676
        %3694 = vst.msk [vmem:[#allocation3 + $0x18] sm:$0xff] %vm3690, %v3677
        %3695 = vst.msk [vmem:[#allocation3 + $0x20] sm:$0xff] %vm3690, %v3678
        %3696 = vst.msk [vmem:[#allocation3 + $0x28] sm:$0xff] %vm3690, %v3679
        %3697 = vst.msk [vmem:[#allocation3 + $0x30] sm:$0xff] %vm3690, %v3680
        %3698 = vst.msk [vmem:[#allocation3 + $0x38] sm:$0xff] %vm3690, %v3681
        %3699 = vst.msk [vmem:[#allocation3 + $0x40] sm:$0xff] %vm3690, %v3682
        %3700 = vst.msk [vmem:[#allocation3 + $0x48] sm:$0xff] %vm3690, %v3683
        %3701 = vst.msk [vmem:[#allocation3 + $0x50] sm:$0xff] %vm3690, %v3684
        %3702 = vst.msk [vmem:[#allocation3 + $0x58] sm:$0xff] %vm3690, %v3685
        %3703 = vst.msk [vmem:[#allocation3 + $0x60] sm:$0xff] %vm3690, %v3686
        %3704 = vst.msk [vmem:[#allocation3 + $0x68] sm:$0xff] %vm3690, %v3687
        %3705 = vst.msk [vmem:[#allocation3 + $0x70] sm:$0xff] %vm3690, %v3688
        %3706 = vst.msk [vmem:[#allocation3 + $0x78] sm:$0xff] %vm3690, %v3689
        %p3707 = scmp.eq.s32.totalorder %s24, 1
        // Predicated region
        $region75: #{tpu_custom_call.1} parent=65 // pred_check
          %p3708 = pneg %p3707
        $region76: #{tpu_custom_call.1} parent=65 // pred_check_branch
          %3710 = sbr.rel (%p3708) target = $region78
        $region77: #{tpu_custom_call.1} parent=65 // pred_region
          %v3711 = vld [vmem:[#allocation3] sm:$0xff]
          %v3712 = vld [vmem:[#allocation3 + $0x8] sm:$0xff]
          %v3713 = vld [vmem:[#allocation3 + $0x10] sm:$0xff]
          %v3714 = vld [vmem:[#allocation3 + $0x18] sm:$0xff]
          %v3715 = vld [vmem:[#allocation3 + $0x20] sm:$0xff]
          %v3716 = vld [vmem:[#allocation3 + $0x28] sm:$0xff]
          %v3717 = vld [vmem:[#allocation3 + $0x30] sm:$0xff]
          %v3718 = vld [vmem:[#allocation3 + $0x38] sm:$0xff]
          %v3719 = vld [vmem:[#allocation3 + $0x40] sm:$0xff]
          %v3720 = vld [vmem:[#allocation3 + $0x48] sm:$0xff]
          %v3721 = vld [vmem:[#allocation3 + $0x50] sm:$0xff]
          %v3722 = vld [vmem:[#allocation3 + $0x58] sm:$0xff]
          %v3723 = vld [vmem:[#allocation3 + $0x60] sm:$0xff]
          %v3724 = vld [vmem:[#allocation3 + $0x68] sm:$0xff]
          %v3725 = vld [vmem:[#allocation3 + $0x70] sm:$0xff]
          %v3726 = vld [vmem:[#allocation3 + $0x78] sm:$0xff]
          %3743 = vrot.lane.b32.xlu0 %v3711, 3
          %v3744 = vpop.permute.xlu0 %3743
          %3745 = vrot.lane.b32.xlu0 %v3712, 3
          %v3746 = vpop.permute.xlu0 %3745
          %3747 = vrot.lane.b32.xlu0 %v3713, 3
          %v3748 = vpop.permute.xlu0 %3747
          %3749 = vrot.lane.b32.xlu0 %v3714, 3
          %v3750 = vpop.permute.xlu0 %3749
          %3751 = vrot.lane.b32.xlu0 %v3715, 3
          %v3752 = vpop.permute.xlu0 %3751
          %3753 = vrot.lane.b32.xlu0 %v3716, 3
          %v3754 = vpop.permute.xlu0 %3753
          %3755 = vrot.lane.b32.xlu0 %v3717, 3
          %v3756 = vpop.permute.xlu0 %3755
          %3757 = vrot.lane.b32.xlu0 %v3718, 3
          %v3758 = vpop.permute.xlu0 %3757
          %3759 = vrot.lane.b32.xlu0 %v3719, 3
          %v3760 = vpop.permute.xlu0 %3759
          %3761 = vrot.lane.b32.xlu0 %v3720, 3
          %v3762 = vpop.permute.xlu0 %3761
          %3763 = vrot.lane.b32.xlu0 %v3721, 3
          %v3764 = vpop.permute.xlu0 %3763
          %3765 = vrot.lane.b32.xlu0 %v3722, 3
          %v3766 = vpop.permute.xlu0 %3765
          %3767 = vrot.lane.b32.xlu0 %v3723, 3
          %v3768 = vpop.permute.xlu0 %3767
          %3769 = vrot.lane.b32.xlu0 %v3724, 3
          %v3770 = vpop.permute.xlu0 %3769
          %3771 = vrot.lane.b32.xlu0 %v3725, 3
          %v3772 = vpop.permute.xlu0 %3771
          %3773 = vrot.lane.b32.xlu0 %v3726, 3
          %v3774 = vpop.permute.xlu0 %3773
          %v3791 = vsub.f32 %v3711, %v3744
          %v3792 = vsub.f32 %v3712, %v3746
          %v3793 = vsub.f32 %v3713, %v3748
          %v3794 = vsub.f32 %v3714, %v3750
          %v3795 = vsub.f32 %v3715, %v3752
          %v3796 = vsub.f32 %v3716, %v3754
          %v3797 = vsub.f32 %v3717, %v3756
          %v3798 = vsub.f32 %v3718, %v3758
          %v3799 = vsub.f32 %v3719, %v3760
          %v3800 = vsub.f32 %v3720, %v3762
          %v3801 = vsub.f32 %v3721, %v3764
          %v3802 = vsub.f32 %v3722, %v3766
          %v3803 = vsub.f32 %v3723, %v3768
          %v3804 = vsub.f32 %v3724, %v3770
          %v3805 = vsub.f32 %v3725, %v3772
          %v3806 = vsub.f32 %v3726, %v3774
          %3807 = vrot.lane.b32.xlu0 %v3711, 6
          %v3808 = vpop.permute.xlu0 %3807
          %3809 = vrot.lane.b32.xlu0 %v3712, 6
          %v3810 = vpop.permute.xlu0 %3809
          %3811 = vrot.lane.b32.xlu0 %v3713, 6
          %v3812 = vpop.permute.xlu0 %3811
          %3813 = vrot.lane.b32.xlu0 %v3714, 6
          %v3814 = vpop.permute.xlu0 %3813
          %3815 = vrot.lane.b32.xlu0 %v3715, 6
          %v3816 = vpop.permute.xlu0 %3815
          %3817 = vrot.lane.b32.xlu0 %v3716, 6
          %v3818 = vpop.permute.xlu0 %3817
          %3819 = vrot.lane.b32.xlu0 %v3717, 6
          %v3820 = vpop.permute.xlu0 %3819
          %3821 = vrot.lane.b32.xlu0 %v3718, 6
          %v3822 = vpop.permute.xlu0 %3821
          %3823 = vrot.lane.b32.xlu0 %v3719, 6
          %v3824 = vpop.permute.xlu0 %3823
          %3825 = vrot.lane.b32.xlu0 %v3720, 6
          %v3826 = vpop.permute.xlu0 %3825
          %3827 = vrot.lane.b32.xlu0 %v3721, 6
          %v3828 = vpop.permute.xlu0 %3827
          %3829 = vrot.lane.b32.xlu0 %v3722, 6
          %v3830 = vpop.permute.xlu0 %3829
          %3831 = vrot.lane.b32.xlu0 %v3723, 6
          %v3832 = vpop.permute.xlu0 %3831
          %3833 = vrot.lane.b32.xlu0 %v3724, 6
          %v3834 = vpop.permute.xlu0 %3833
          %3835 = vrot.lane.b32.xlu0 %v3725, 6
          %v3836 = vpop.permute.xlu0 %3835
          %3837 = vrot.lane.b32.xlu0 %v3726, 6
          %v3838 = vpop.permute.xlu0 %3837
          %v3855 = vsub.f32 %v3711, %v3808
          %v3856 = vsub.f32 %v3712, %v3810
          %v3857 = vsub.f32 %v3713, %v3812
          %v3858 = vsub.f32 %v3714, %v3814
          %v3859 = vsub.f32 %v3715, %v3816
          %v3860 = vsub.f32 %v3716, %v3818
          %v3861 = vsub.f32 %v3717, %v3820
          %v3862 = vsub.f32 %v3718, %v3822
          %v3863 = vsub.f32 %v3719, %v3824
          %v3864 = vsub.f32 %v3720, %v3826
          %v3865 = vsub.f32 %v3721, %v3828
          %v3866 = vsub.f32 %v3722, %v3830
          %v3867 = vsub.f32 %v3723, %v3832
          %v3868 = vsub.f32 %v3724, %v3834
          %v3869 = vsub.f32 %v3725, %v3836
          %v3870 = vsub.f32 %v3726, %v3838
          %v3871 = vsub.f32 %v305, %v3711
          %v3872 = vsub.f32 %v306, %v3712
          %v3873 = vsub.f32 %v307, %v3713
          %v3874 = vsub.f32 %v308, %v3714
          %v3875 = vsub.f32 %v309, %v3715
          %v3876 = vsub.f32 %v310, %v3716
          %v3877 = vsub.f32 %v311, %v3717
          %v3878 = vsub.f32 %v312, %v3718
          %v3879 = vsub.f32 %v313, %v3719
          %v3880 = vsub.f32 %v314, %v3720
          %v3881 = vsub.f32 %v315, %v3721
          %v3882 = vsub.f32 %v316, %v3722
          %v3883 = vsub.f32 %v317, %v3723
          %v3884 = vsub.f32 %v318, %v3724
          %v3885 = vsub.f32 %v319, %v3725
          %v3886 = vsub.f32 %v320, %v3726
          %3903 = vrot.lane.b32.xlu0 %v3855, 124
          %v3904 = vpop.permute.xlu0 %3903
          %3905 = vrot.lane.b32.xlu0 %v3856, 124
          %v3906 = vpop.permute.xlu0 %3905
          %3907 = vrot.lane.b32.xlu0 %v3857, 124
          %v3908 = vpop.permute.xlu0 %3907
          %3909 = vrot.lane.b32.xlu0 %v3858, 124
          %v3910 = vpop.permute.xlu0 %3909
          %3911 = vrot.lane.b32.xlu0 %v3859, 124
          %v3912 = vpop.permute.xlu0 %3911
          %3913 = vrot.lane.b32.xlu0 %v3860, 124
          %v3914 = vpop.permute.xlu0 %3913
          %3915 = vrot.lane.b32.xlu0 %v3861, 124
          %v3916 = vpop.permute.xlu0 %3915
          %3917 = vrot.lane.b32.xlu0 %v3862, 124
          %v3918 = vpop.permute.xlu0 %3917
          %3919 = vrot.lane.b32.xlu0 %v3863, 124
          %v3920 = vpop.permute.xlu0 %3919
          %3921 = vrot.lane.b32.xlu0 %v3864, 124
          %v3922 = vpop.permute.xlu0 %3921
          %3923 = vrot.lane.b32.xlu0 %v3865, 124
          %v3924 = vpop.permute.xlu0 %3923
          %3925 = vrot.lane.b32.xlu0 %v3866, 124
          %v3926 = vpop.permute.xlu0 %3925
          %3927 = vrot.lane.b32.xlu0 %v3867, 124
          %v3928 = vpop.permute.xlu0 %3927
          %3929 = vrot.lane.b32.xlu0 %v3868, 124
          %v3930 = vpop.permute.xlu0 %3929
          %3931 = vrot.lane.b32.xlu0 %v3869, 124
          %v3932 = vpop.permute.xlu0 %3931
          %3933 = vrot.lane.b32.xlu0 %v3870, 124
          %v3934 = vpop.permute.xlu0 %3933
          %v3951 = vmul.f32 %v3791, %v3904
          %v3952 = vmul.f32 %v3792, %v3906
          %v3953 = vmul.f32 %v3793, %v3908
          %v3954 = vmul.f32 %v3794, %v3910
          %v3955 = vmul.f32 %v3795, %v3912
          %v3956 = vmul.f32 %v3796, %v3914
          %v3957 = vmul.f32 %v3797, %v3916
          %v3958 = vmul.f32 %v3798, %v3918
          %v3959 = vmul.f32 %v3799, %v3920
          %v3960 = vmul.f32 %v3800, %v3922
          %v3961 = vmul.f32 %v3801, %v3924
          %v3962 = vmul.f32 %v3802, %v3926
          %v3963 = vmul.f32 %v3803, %v3928
          %v3964 = vmul.f32 %v3804, %v3930
          %v3965 = vmul.f32 %v3805, %v3932
          %v3966 = vmul.f32 %v3806, %v3934
          %3967 = vrot.lane.b32.xlu0 %v3855, 126
          %v3968 = vpop.permute.xlu0 %3967
          %3969 = vrot.lane.b32.xlu0 %v3856, 126
          %v3970 = vpop.permute.xlu0 %3969
          %3971 = vrot.lane.b32.xlu0 %v3857, 126
          %v3972 = vpop.permute.xlu0 %3971
          %3973 = vrot.lane.b32.xlu0 %v3858, 126
          %v3974 = vpop.permute.xlu0 %3973
          %3975 = vrot.lane.b32.xlu0 %v3859, 126
          %v3976 = vpop.permute.xlu0 %3975
          %3977 = vrot.lane.b32.xlu0 %v3860, 126
          %v3978 = vpop.permute.xlu0 %3977
          %3979 = vrot.lane.b32.xlu0 %v3861, 126
          %v3980 = vpop.permute.xlu0 %3979
          %3981 = vrot.lane.b32.xlu0 %v3862, 126
          %v3982 = vpop.permute.xlu0 %3981
          %3983 = vrot.lane.b32.xlu0 %v3863, 126
          %v3984 = vpop.permute.xlu0 %3983
          %3985 = vrot.lane.b32.xlu0 %v3864, 126
          %v3986 = vpop.permute.xlu0 %3985
          %3987 = vrot.lane.b32.xlu0 %v3865, 126
          %v3988 = vpop.permute.xlu0 %3987
          %3989 = vrot.lane.b32.xlu0 %v3866, 126
          %v3990 = vpop.permute.xlu0 %3989
          %3991 = vrot.lane.b32.xlu0 %v3867, 126
          %v3992 = vpop.permute.xlu0 %3991
          %3993 = vrot.lane.b32.xlu0 %v3868, 126
          %v3994 = vpop.permute.xlu0 %3993
          %3995 = vrot.lane.b32.xlu0 %v3869, 126
          %v3996 = vpop.permute.xlu0 %3995
          %3997 = vrot.lane.b32.xlu0 %v3870, 126
          %v3998 = vpop.permute.xlu0 %3997
          %v4015 = vmul.f32 %v3791, %v3968
          %v4016 = vmul.f32 %v3792, %v3970
          %v4017 = vmul.f32 %v3793, %v3972
          %v4018 = vmul.f32 %v3794, %v3974
          %v4019 = vmul.f32 %v3795, %v3976
          %v4020 = vmul.f32 %v3796, %v3978
          %v4021 = vmul.f32 %v3797, %v3980
          %v4022 = vmul.f32 %v3798, %v3982
          %v4023 = vmul.f32 %v3799, %v3984
          %v4024 = vmul.f32 %v3800, %v3986
          %v4025 = vmul.f32 %v3801, %v3988
          %v4026 = vmul.f32 %v3802, %v3990
          %v4027 = vmul.f32 %v3803, %v3992
          %v4028 = vmul.f32 %v3804, %v3994
          %v4029 = vmul.f32 %v3805, %v3996
          %v4030 = vmul.f32 %v3806, %v3998
          %4047 = vrot.lane.b32.xlu0 %v4015, 127
          %v4048 = vpop.permute.xlu0 %4047
          %4049 = vrot.lane.b32.xlu0 %v4016, 127
          %v4050 = vpop.permute.xlu0 %4049
          %4051 = vrot.lane.b32.xlu0 %v4017, 127
          %v4052 = vpop.permute.xlu0 %4051
          %4053 = vrot.lane.b32.xlu0 %v4018, 127
          %v4054 = vpop.permute.xlu0 %4053
          %4055 = vrot.lane.b32.xlu0 %v4019, 127
          %v4056 = vpop.permute.xlu0 %4055
          %4057 = vrot.lane.b32.xlu0 %v4020, 127
          %v4058 = vpop.permute.xlu0 %4057
          %4059 = vrot.lane.b32.xlu0 %v4021, 127
          %v4060 = vpop.permute.xlu0 %4059
          %4061 = vrot.lane.b32.xlu0 %v4022, 127
          %v4062 = vpop.permute.xlu0 %4061
          %4063 = vrot.lane.b32.xlu0 %v4023, 127
          %v4064 = vpop.permute.xlu0 %4063
          %4065 = vrot.lane.b32.xlu0 %v4024, 127
          %v4066 = vpop.permute.xlu0 %4065
          %4067 = vrot.lane.b32.xlu0 %v4025, 127
          %v4068 = vpop.permute.xlu0 %4067
          %4069 = vrot.lane.b32.xlu0 %v4026, 127
          %v4070 = vpop.permute.xlu0 %4069
          %4071 = vrot.lane.b32.xlu0 %v4027, 127
          %v4072 = vpop.permute.xlu0 %4071
          %4073 = vrot.lane.b32.xlu0 %v4028, 127
          %v4074 = vpop.permute.xlu0 %4073
          %4075 = vrot.lane.b32.xlu0 %v4029, 127
          %v4076 = vpop.permute.xlu0 %4075
          %4077 = vrot.lane.b32.xlu0 %v4030, 127
          %v4078 = vpop.permute.xlu0 %4077
          %v4095 = vsub.f32 %v3951, %v4048
          %v4096 = vsub.f32 %v3952, %v4050
          %v4097 = vsub.f32 %v3953, %v4052
          %v4098 = vsub.f32 %v3954, %v4054
          %v4099 = vsub.f32 %v3955, %v4056
          %v4100 = vsub.f32 %v3956, %v4058
          %v4101 = vsub.f32 %v3957, %v4060
          %v4102 = vsub.f32 %v3958, %v4062
          %v4103 = vsub.f32 %v3959, %v4064
          %v4104 = vsub.f32 %v3960, %v4066
          %v4105 = vsub.f32 %v3961, %v4068
          %v4106 = vsub.f32 %v3962, %v4070
          %v4107 = vsub.f32 %v3963, %v4072
          %v4108 = vsub.f32 %v3964, %v4074
          %v4109 = vsub.f32 %v3965, %v4076
          %v4110 = vsub.f32 %v3966, %v4078
          %4111 = vrot.lane.b32.xlu0 %v3855, 127
          %v4112 = vpop.permute.xlu0 %4111
          %4113 = vrot.lane.b32.xlu0 %v3856, 127
          %v4114 = vpop.permute.xlu0 %4113
          %4115 = vrot.lane.b32.xlu0 %v3857, 127
          %v4116 = vpop.permute.xlu0 %4115
          %4117 = vrot.lane.b32.xlu0 %v3858, 127
          %v4118 = vpop.permute.xlu0 %4117
          %4119 = vrot.lane.b32.xlu0 %v3859, 127
          %v4120 = vpop.permute.xlu0 %4119
          %4121 = vrot.lane.b32.xlu0 %v3860, 127
          %v4122 = vpop.permute.xlu0 %4121
          %4123 = vrot.lane.b32.xlu0 %v3861, 127
          %v4124 = vpop.permute.xlu0 %4123
          %4125 = vrot.lane.b32.xlu0 %v3862, 127
          %v4126 = vpop.permute.xlu0 %4125
          %4127 = vrot.lane.b32.xlu0 %v3863, 127
          %v4128 = vpop.permute.xlu0 %4127
          %4129 = vrot.lane.b32.xlu0 %v3864, 127
          %v4130 = vpop.permute.xlu0 %4129
          %4131 = vrot.lane.b32.xlu0 %v3865, 127
          %v4132 = vpop.permute.xlu0 %4131
          %4133 = vrot.lane.b32.xlu0 %v3866, 127
          %v4134 = vpop.permute.xlu0 %4133
          %4135 = vrot.lane.b32.xlu0 %v3867, 127
          %v4136 = vpop.permute.xlu0 %4135
          %4137 = vrot.lane.b32.xlu0 %v3868, 127
          %v4138 = vpop.permute.xlu0 %4137
          %4139 = vrot.lane.b32.xlu0 %v3869, 127
          %v4140 = vpop.permute.xlu0 %4139
          %4141 = vrot.lane.b32.xlu0 %v3870, 127
          %v4142 = vpop.permute.xlu0 %4141
          %v4159 = vmul.f32 %v3791, %v4112
          %v4160 = vmul.f32 %v3792, %v4114
          %v4161 = vmul.f32 %v3793, %v4116
          %v4162 = vmul.f32 %v3794, %v4118
          %v4163 = vmul.f32 %v3795, %v4120
          %v4164 = vmul.f32 %v3796, %v4122
          %v4165 = vmul.f32 %v3797, %v4124
          %v4166 = vmul.f32 %v3798, %v4126
          %v4167 = vmul.f32 %v3799, %v4128
          %v4168 = vmul.f32 %v3800, %v4130
          %v4169 = vmul.f32 %v3801, %v4132
          %v4170 = vmul.f32 %v3802, %v4134
          %v4171 = vmul.f32 %v3803, %v4136
          %v4172 = vmul.f32 %v3804, %v4138
          %v4173 = vmul.f32 %v3805, %v4140
          %v4174 = vmul.f32 %v3806, %v4142
          %4175 = vrot.lane.b32.xlu0 %v3855, 123
          %v4176 = vpop.permute.xlu0 %4175
          %4177 = vrot.lane.b32.xlu0 %v3856, 123
          %v4178 = vpop.permute.xlu0 %4177
          %4179 = vrot.lane.b32.xlu0 %v3857, 123
          %v4180 = vpop.permute.xlu0 %4179
          %4181 = vrot.lane.b32.xlu0 %v3858, 123
          %v4182 = vpop.permute.xlu0 %4181
          %4183 = vrot.lane.b32.xlu0 %v3859, 123
          %v4184 = vpop.permute.xlu0 %4183
          %4185 = vrot.lane.b32.xlu0 %v3860, 123
          %v4186 = vpop.permute.xlu0 %4185
          %4187 = vrot.lane.b32.xlu0 %v3861, 123
          %v4188 = vpop.permute.xlu0 %4187
          %4189 = vrot.lane.b32.xlu0 %v3862, 123
          %v4190 = vpop.permute.xlu0 %4189
          %4191 = vrot.lane.b32.xlu0 %v3863, 123
          %v4192 = vpop.permute.xlu0 %4191
          %4193 = vrot.lane.b32.xlu0 %v3864, 123
          %v4194 = vpop.permute.xlu0 %4193
          %4195 = vrot.lane.b32.xlu0 %v3865, 123
          %v4196 = vpop.permute.xlu0 %4195
          %4197 = vrot.lane.b32.xlu0 %v3866, 123
          %v4198 = vpop.permute.xlu0 %4197
          %4199 = vrot.lane.b32.xlu0 %v3867, 123
          %v4200 = vpop.permute.xlu0 %4199
          %4201 = vrot.lane.b32.xlu0 %v3868, 123
          %v4202 = vpop.permute.xlu0 %4201
          %4203 = vrot.lane.b32.xlu0 %v3869, 123
          %v4204 = vpop.permute.xlu0 %4203
          %4205 = vrot.lane.b32.xlu0 %v3870, 123
          %v4206 = vpop.permute.xlu0 %4205
          %v4223 = vmul.f32 %v3791, %v4176
          %v4224 = vmul.f32 %v3792, %v4178
          %v4225 = vmul.f32 %v3793, %v4180
          %v4226 = vmul.f32 %v3794, %v4182
          %v4227 = vmul.f32 %v3795, %v4184
          %v4228 = vmul.f32 %v3796, %v4186
          %v4229 = vmul.f32 %v3797, %v4188
          %v4230 = vmul.f32 %v3798, %v4190
          %v4231 = vmul.f32 %v3799, %v4192
          %v4232 = vmul.f32 %v3800, %v4194
          %v4233 = vmul.f32 %v3801, %v4196
          %v4234 = vmul.f32 %v3802, %v4198
          %v4235 = vmul.f32 %v3803, %v4200
          %v4236 = vmul.f32 %v3804, %v4202
          %v4237 = vmul.f32 %v3805, %v4204
          %v4238 = vmul.f32 %v3806, %v4206
          %4255 = vrot.lane.b32.xlu0 %v4223, 2
          %v4256 = vpop.permute.xlu0 %4255
          %4257 = vrot.lane.b32.xlu0 %v4224, 2
          %v4258 = vpop.permute.xlu0 %4257
          %4259 = vrot.lane.b32.xlu0 %v4225, 2
          %v4260 = vpop.permute.xlu0 %4259
          %4261 = vrot.lane.b32.xlu0 %v4226, 2
          %v4262 = vpop.permute.xlu0 %4261
          %4263 = vrot.lane.b32.xlu0 %v4227, 2
          %v4264 = vpop.permute.xlu0 %4263
          %4265 = vrot.lane.b32.xlu0 %v4228, 2
          %v4266 = vpop.permute.xlu0 %4265
          %4267 = vrot.lane.b32.xlu0 %v4229, 2
          %v4268 = vpop.permute.xlu0 %4267
          %4269 = vrot.lane.b32.xlu0 %v4230, 2
          %v4270 = vpop.permute.xlu0 %4269
          %4271 = vrot.lane.b32.xlu0 %v4231, 2
          %v4272 = vpop.permute.xlu0 %4271
          %4273 = vrot.lane.b32.xlu0 %v4232, 2
          %v4274 = vpop.permute.xlu0 %4273
          %4275 = vrot.lane.b32.xlu0 %v4233, 2
          %v4276 = vpop.permute.xlu0 %4275
          %4277 = vrot.lane.b32.xlu0 %v4234, 2
          %v4278 = vpop.permute.xlu0 %4277
          %4279 = vrot.lane.b32.xlu0 %v4235, 2
          %v4280 = vpop.permute.xlu0 %4279
          %4281 = vrot.lane.b32.xlu0 %v4236, 2
          %v4282 = vpop.permute.xlu0 %4281
          %4283 = vrot.lane.b32.xlu0 %v4237, 2
          %v4284 = vpop.permute.xlu0 %4283
          %4285 = vrot.lane.b32.xlu0 %v4238, 2
          %v4286 = vpop.permute.xlu0 %4285
          %v4303 = vsub.f32 %v4159, %v4256
          %v4304 = vsub.f32 %v4160, %v4258
          %v4305 = vsub.f32 %v4161, %v4260
          %v4306 = vsub.f32 %v4162, %v4262
          %v4307 = vsub.f32 %v4163, %v4264
          %v4308 = vsub.f32 %v4164, %v4266
          %v4309 = vsub.f32 %v4165, %v4268
          %v4310 = vsub.f32 %v4166, %v4270
          %v4311 = vsub.f32 %v4167, %v4272
          %v4312 = vsub.f32 %v4168, %v4274
          %v4313 = vsub.f32 %v4169, %v4276
          %v4314 = vsub.f32 %v4170, %v4278
          %v4315 = vsub.f32 %v4171, %v4280
          %v4316 = vsub.f32 %v4172, %v4282
          %v4317 = vsub.f32 %v4173, %v4284
          %v4318 = vsub.f32 %v4174, %v4286
          %v4319 = vmul.f32 %v4095, %v4095
          %v4320 = vmul.f32 %v4096, %v4096
          %v4321 = vmul.f32 %v4097, %v4097
          %v4322 = vmul.f32 %v4098, %v4098
          %v4323 = vmul.f32 %v4099, %v4099
          %v4324 = vmul.f32 %v4100, %v4100
          %v4325 = vmul.f32 %v4101, %v4101
          %v4326 = vmul.f32 %v4102, %v4102
          %v4327 = vmul.f32 %v4103, %v4103
          %v4328 = vmul.f32 %v4104, %v4104
          %v4329 = vmul.f32 %v4105, %v4105
          %v4330 = vmul.f32 %v4106, %v4106
          %v4331 = vmul.f32 %v4107, %v4107
          %v4332 = vmul.f32 %v4108, %v4108
          %v4333 = vmul.f32 %v4109, %v4109
          %v4334 = vmul.f32 %v4110, %v4110
          %v4335 = vmul.f32 %v4303, %v4303
          %v4336 = vmul.f32 %v4304, %v4304
          %v4337 = vmul.f32 %v4305, %v4305
          %v4338 = vmul.f32 %v4306, %v4306
          %v4339 = vmul.f32 %v4307, %v4307
          %v4340 = vmul.f32 %v4308, %v4308
          %v4341 = vmul.f32 %v4309, %v4309
          %v4342 = vmul.f32 %v4310, %v4310
          %v4343 = vmul.f32 %v4311, %v4311
          %v4344 = vmul.f32 %v4312, %v4312
          %v4345 = vmul.f32 %v4313, %v4313
          %v4346 = vmul.f32 %v4314, %v4314
          %v4347 = vmul.f32 %v4315, %v4315
          %v4348 = vmul.f32 %v4316, %v4316
          %v4349 = vmul.f32 %v4317, %v4317
          %v4350 = vmul.f32 %v4318, %v4318
          %4367 = vrot.lane.b32.xlu0 %v4335, 127
          %v4368 = vpop.permute.xlu0 %4367
          %4369 = vrot.lane.b32.xlu0 %v4336, 127
          %v4370 = vpop.permute.xlu0 %4369
          %4371 = vrot.lane.b32.xlu0 %v4337, 127
          %v4372 = vpop.permute.xlu0 %4371
          %4373 = vrot.lane.b32.xlu0 %v4338, 127
          %v4374 = vpop.permute.xlu0 %4373
          %4375 = vrot.lane.b32.xlu0 %v4339, 127
          %v4376 = vpop.permute.xlu0 %4375
          %4377 = vrot.lane.b32.xlu0 %v4340, 127
          %v4378 = vpop.permute.xlu0 %4377
          %4379 = vrot.lane.b32.xlu0 %v4341, 127
          %v4380 = vpop.permute.xlu0 %4379
          %4381 = vrot.lane.b32.xlu0 %v4342, 127
          %v4382 = vpop.permute.xlu0 %4381
          %4383 = vrot.lane.b32.xlu0 %v4343, 127
          %v4384 = vpop.permute.xlu0 %4383
          %4385 = vrot.lane.b32.xlu0 %v4344, 127
          %v4386 = vpop.permute.xlu0 %4385
          %4387 = vrot.lane.b32.xlu0 %v4345, 127
          %v4388 = vpop.permute.xlu0 %4387
          %4389 = vrot.lane.b32.xlu0 %v4346, 127
          %v4390 = vpop.permute.xlu0 %4389
          %4391 = vrot.lane.b32.xlu0 %v4347, 127
          %v4392 = vpop.permute.xlu0 %4391
          %4393 = vrot.lane.b32.xlu0 %v4348, 127
          %v4394 = vpop.permute.xlu0 %4393
          %4395 = vrot.lane.b32.xlu0 %v4349, 127
          %v4396 = vpop.permute.xlu0 %4395
          %4397 = vrot.lane.b32.xlu0 %v4350, 127
          %v4398 = vpop.permute.xlu0 %4397
          %v4415 = vadd.f32 %v4319, %v4368
          %v4416 = vadd.f32 %v4320, %v4370
          %v4417 = vadd.f32 %v4321, %v4372
          %v4418 = vadd.f32 %v4322, %v4374
          %v4419 = vadd.f32 %v4323, %v4376
          %v4420 = vadd.f32 %v4324, %v4378
          %v4421 = vadd.f32 %v4325, %v4380
          %v4422 = vadd.f32 %v4326, %v4382
          %v4423 = vadd.f32 %v4327, %v4384
          %v4424 = vadd.f32 %v4328, %v4386
          %v4425 = vadd.f32 %v4329, %v4388
          %v4426 = vadd.f32 %v4330, %v4390
          %v4427 = vadd.f32 %v4331, %v4392
          %v4428 = vadd.f32 %v4332, %v4394
          %v4429 = vadd.f32 %v4333, %v4396
          %v4430 = vadd.f32 %v4334, %v4398
          %4447 = vrot.lane.b32.xlu0 %v4319, 1
          %v4448 = vpop.permute.xlu0 %4447
          %4449 = vrot.lane.b32.xlu0 %v4320, 1
          %v4450 = vpop.permute.xlu0 %4449
          %4451 = vrot.lane.b32.xlu0 %v4321, 1
          %v4452 = vpop.permute.xlu0 %4451
          %4453 = vrot.lane.b32.xlu0 %v4322, 1
          %v4454 = vpop.permute.xlu0 %4453
          %4455 = vrot.lane.b32.xlu0 %v4323, 1
          %v4456 = vpop.permute.xlu0 %4455
          %4457 = vrot.lane.b32.xlu0 %v4324, 1
          %v4458 = vpop.permute.xlu0 %4457
          %4459 = vrot.lane.b32.xlu0 %v4325, 1
          %v4460 = vpop.permute.xlu0 %4459
          %4461 = vrot.lane.b32.xlu0 %v4326, 1
          %v4462 = vpop.permute.xlu0 %4461
          %4463 = vrot.lane.b32.xlu0 %v4327, 1
          %v4464 = vpop.permute.xlu0 %4463
          %4465 = vrot.lane.b32.xlu0 %v4328, 1
          %v4466 = vpop.permute.xlu0 %4465
          %4467 = vrot.lane.b32.xlu0 %v4329, 1
          %v4468 = vpop.permute.xlu0 %4467
          %4469 = vrot.lane.b32.xlu0 %v4330, 1
          %v4470 = vpop.permute.xlu0 %4469
          %4471 = vrot.lane.b32.xlu0 %v4331, 1
          %v4472 = vpop.permute.xlu0 %4471
          %4473 = vrot.lane.b32.xlu0 %v4332, 1
          %v4474 = vpop.permute.xlu0 %4473
          %4475 = vrot.lane.b32.xlu0 %v4333, 1
          %v4476 = vpop.permute.xlu0 %4475
          %4477 = vrot.lane.b32.xlu0 %v4334, 1
          %v4478 = vpop.permute.xlu0 %4477
          %v4495 = vadd.f32 %v4415, %v4448
          %v4496 = vadd.f32 %v4416, %v4450
          %v4497 = vadd.f32 %v4417, %v4452
          %v4498 = vadd.f32 %v4418, %v4454
          %v4499 = vadd.f32 %v4419, %v4456
          %v4500 = vadd.f32 %v4420, %v4458
          %v4501 = vadd.f32 %v4421, %v4460
          %v4502 = vadd.f32 %v4422, %v4462
          %v4503 = vadd.f32 %v4423, %v4464
          %v4504 = vadd.f32 %v4424, %v4466
          %v4505 = vadd.f32 %v4425, %v4468
          %v4506 = vadd.f32 %v4426, %v4470
          %v4507 = vadd.f32 %v4427, %v4472
          %v4508 = vadd.f32 %v4428, %v4474
          %v4509 = vadd.f32 %v4429, %v4476
          %v4510 = vadd.f32 %v4430, %v4478
          %vm4511 = vcmp.eq.f32.partialorder %v4495, 0.0
          %vm4512 = vcmp.eq.f32.partialorder %v4496, 0.0
          %vm4513 = vcmp.eq.f32.partialorder %v4497, 0.0
          %vm4514 = vcmp.eq.f32.partialorder %v4498, 0.0
          %vm4515 = vcmp.eq.f32.partialorder %v4499, 0.0
          %vm4516 = vcmp.eq.f32.partialorder %v4500, 0.0
          %vm4517 = vcmp.eq.f32.partialorder %v4501, 0.0
          %vm4518 = vcmp.eq.f32.partialorder %v4502, 0.0
          %vm4519 = vcmp.eq.f32.partialorder %v4503, 0.0
          %vm4520 = vcmp.eq.f32.partialorder %v4504, 0.0
          %vm4521 = vcmp.eq.f32.partialorder %v4505, 0.0
          %vm4522 = vcmp.eq.f32.partialorder %v4506, 0.0
          %vm4523 = vcmp.eq.f32.partialorder %v4507, 0.0
          %vm4524 = vcmp.eq.f32.partialorder %v4508, 0.0
          %vm4525 = vcmp.eq.f32.partialorder %v4509, 0.0
          %vm4526 = vcmp.eq.f32.partialorder %v4510, 0.0
          %v4527 = vsel %vm4511, 1e-06, %v4495
          %v4528 = vsel %vm4512, 1e-06, %v4496
          %v4529 = vsel %vm4513, 1e-06, %v4497
          %v4530 = vsel %vm4514, 1e-06, %v4498
          %v4531 = vsel %vm4515, 1e-06, %v4499
          %v4532 = vsel %vm4516, 1e-06, %v4500
          %v4533 = vsel %vm4517, 1e-06, %v4501
          %v4534 = vsel %vm4518, 1e-06, %v4502
          %v4535 = vsel %vm4519, 1e-06, %v4503
          %v4536 = vsel %vm4520, 1e-06, %v4504
          %v4537 = vsel %vm4521, 1e-06, %v4505
          %v4538 = vsel %vm4522, 1e-06, %v4506
          %v4539 = vsel %vm4523, 1e-06, %v4507
          %v4540 = vsel %vm4524, 1e-06, %v4508
          %v4541 = vsel %vm4525, 1e-06, %v4509
          %v4542 = vsel %vm4526, 1e-06, %v4510
          %v4543 = vrcp.pop %v4527
          %v4544 = vmul.f32 %v4527, %v4543
          %v4545 = vsub.f32 1.0, %v4544
          %v4546 = vmul.f32 %v4543, %v4545
          %v4547 = vadd.f32 %v4543, %v4546
          %vm4548 = vweird.f32 %v4527
          %vm4549 = vweird.f32 %v4543
          %vm4550 = vmor %vm4548, %vm4549
          %v4551 = vsel %vm4550, %v4543, %v4547
          %v4552 = vand.u32 2147483647, %v4527
          %vm4553 = vcmp.eq.f32.partialorder %v4552, 8.507059e+37
          %v4554 = vand.u32 %v4527, 2147483648
          %v4555 = vor.u32 1.1754944e-38, %v4554
          %v4556 = vsel %vm4553, %v4555, %v4551
          %v4557 = vmul.f32 1.0, %v4556
          %v4558 = vrcp.pop %v4528
          %v4559 = vmul.f32 %v4528, %v4558
          %v4560 = vsub.f32 1.0, %v4559
          %v4561 = vmul.f32 %v4558, %v4560
          %v4562 = vadd.f32 %v4558, %v4561
          %vm4563 = vweird.f32 %v4528
          %vm4564 = vweird.f32 %v4558
          %vm4565 = vmor %vm4563, %vm4564
          %v4566 = vsel %vm4565, %v4558, %v4562
          %v4567 = vand.u32 2147483647, %v4528
          %vm4568 = vcmp.eq.f32.partialorder %v4567, 8.507059e+37
          %v4569 = vand.u32 %v4528, 2147483648
          %v4570 = vor.u32 1.1754944e-38, %v4569
          %v4571 = vsel %vm4568, %v4570, %v4566
          %v4572 = vmul.f32 1.0, %v4571
          %v4573 = vrcp.pop %v4529
          %v4574 = vmul.f32 %v4529, %v4573
          %v4575 = vsub.f32 1.0, %v4574
          %v4576 = vmul.f32 %v4573, %v4575
          %v4577 = vadd.f32 %v4573, %v4576
          %vm4578 = vweird.f32 %v4529
          %vm4579 = vweird.f32 %v4573
          %vm4580 = vmor %vm4578, %vm4579
          %v4581 = vsel %vm4580, %v4573, %v4577
          %v4582 = vand.u32 2147483647, %v4529
          %vm4583 = vcmp.eq.f32.partialorder %v4582, 8.507059e+37
          %v4584 = vand.u32 %v4529, 2147483648
          %v4585 = vor.u32 1.1754944e-38, %v4584
          %v4586 = vsel %vm4583, %v4585, %v4581
          %v4587 = vmul.f32 1.0, %v4586
          %v4588 = vrcp.pop %v4530
          %v4589 = vmul.f32 %v4530, %v4588
          %v4590 = vsub.f32 1.0, %v4589
          %v4591 = vmul.f32 %v4588, %v4590
          %v4592 = vadd.f32 %v4588, %v4591
          %vm4593 = vweird.f32 %v4530
          %vm4594 = vweird.f32 %v4588
          %vm4595 = vmor %vm4593, %vm4594
          %v4596 = vsel %vm4595, %v4588, %v4592
          %v4597 = vand.u32 2147483647, %v4530
          %vm4598 = vcmp.eq.f32.partialorder %v4597, 8.507059e+37
          %v4599 = vand.u32 %v4530, 2147483648
          %v4600 = vor.u32 1.1754944e-38, %v4599
          %v4601 = vsel %vm4598, %v4600, %v4596
          %v4602 = vmul.f32 1.0, %v4601
          %v4603 = vrcp.pop %v4531
          %v4604 = vmul.f32 %v4531, %v4603
          %v4605 = vsub.f32 1.0, %v4604
          %v4606 = vmul.f32 %v4603, %v4605
          %v4607 = vadd.f32 %v4603, %v4606
          %vm4608 = vweird.f32 %v4531
          %vm4609 = vweird.f32 %v4603
          %vm4610 = vmor %vm4608, %vm4609
          %v4611 = vsel %vm4610, %v4603, %v4607
          %v4612 = vand.u32 2147483647, %v4531
          %vm4613 = vcmp.eq.f32.partialorder %v4612, 8.507059e+37
          %v4614 = vand.u32 %v4531, 2147483648
          %v4615 = vor.u32 1.1754944e-38, %v4614
          %v4616 = vsel %vm4613, %v4615, %v4611
          %v4617 = vmul.f32 1.0, %v4616
          %v4618 = vrcp.pop %v4532
          %v4619 = vmul.f32 %v4532, %v4618
          %v4620 = vsub.f32 1.0, %v4619
          %v4621 = vmul.f32 %v4618, %v4620
          %v4622 = vadd.f32 %v4618, %v4621
          %vm4623 = vweird.f32 %v4532
          %vm4624 = vweird.f32 %v4618
          %vm4625 = vmor %vm4623, %vm4624
          %v4626 = vsel %vm4625, %v4618, %v4622
          %v4627 = vand.u32 2147483647, %v4532
          %vm4628 = vcmp.eq.f32.partialorder %v4627, 8.507059e+37
          %v4629 = vand.u32 %v4532, 2147483648
          %v4630 = vor.u32 1.1754944e-38, %v4629
          %v4631 = vsel %vm4628, %v4630, %v4626
          %v4632 = vmul.f32 1.0, %v4631
          %v4633 = vrcp.pop %v4533
          %v4634 = vmul.f32 %v4533, %v4633
          %v4635 = vsub.f32 1.0, %v4634
          %v4636 = vmul.f32 %v4633, %v4635
          %v4637 = vadd.f32 %v4633, %v4636
          %vm4638 = vweird.f32 %v4533
          %vm4639 = vweird.f32 %v4633
          %vm4640 = vmor %vm4638, %vm4639
          %v4641 = vsel %vm4640, %v4633, %v4637
          %v4642 = vand.u32 2147483647, %v4533
          %vm4643 = vcmp.eq.f32.partialorder %v4642, 8.507059e+37
          %v4644 = vand.u32 %v4533, 2147483648
          %v4645 = vor.u32 1.1754944e-38, %v4644
          %v4646 = vsel %vm4643, %v4645, %v4641
          %v4647 = vmul.f32 1.0, %v4646
          %v4648 = vrcp.pop %v4534
          %v4649 = vmul.f32 %v4534, %v4648
          %v4650 = vsub.f32 1.0, %v4649
          %v4651 = vmul.f32 %v4648, %v4650
          %v4652 = vadd.f32 %v4648, %v4651
          %vm4653 = vweird.f32 %v4534
          %vm4654 = vweird.f32 %v4648
          %vm4655 = vmor %vm4653, %vm4654
          %v4656 = vsel %vm4655, %v4648, %v4652
          %v4657 = vand.u32 2147483647, %v4534
          %vm4658 = vcmp.eq.f32.partialorder %v4657, 8.507059e+37
          %v4659 = vand.u32 %v4534, 2147483648
          %v4660 = vor.u32 1.1754944e-38, %v4659
          %v4661 = vsel %vm4658, %v4660, %v4656
          %v4662 = vmul.f32 1.0, %v4661
          %v4663 = vrcp.pop %v4535
          %v4664 = vmul.f32 %v4535, %v4663
          %v4665 = vsub.f32 1.0, %v4664
          %v4666 = vmul.f32 %v4663, %v4665
          %v4667 = vadd.f32 %v4663, %v4666
          %vm4668 = vweird.f32 %v4535
          %vm4669 = vweird.f32 %v4663
          %vm4670 = vmor %vm4668, %vm4669
          %v4671 = vsel %vm4670, %v4663, %v4667
          %v4672 = vand.u32 2147483647, %v4535
          %vm4673 = vcmp.eq.f32.partialorder %v4672, 8.507059e+37
          %v4674 = vand.u32 %v4535, 2147483648
          %v4675 = vor.u32 1.1754944e-38, %v4674
          %v4676 = vsel %vm4673, %v4675, %v4671
          %v4677 = vmul.f32 1.0, %v4676
          %v4678 = vrcp.pop %v4536
          %v4679 = vmul.f32 %v4536, %v4678
          %v4680 = vsub.f32 1.0, %v4679
          %v4681 = vmul.f32 %v4678, %v4680
          %v4682 = vadd.f32 %v4678, %v4681
          %vm4683 = vweird.f32 %v4536
          %vm4684 = vweird.f32 %v4678
          %vm4685 = vmor %vm4683, %vm4684
          %v4686 = vsel %vm4685, %v4678, %v4682
          %v4687 = vand.u32 2147483647, %v4536
          %vm4688 = vcmp.eq.f32.partialorder %v4687, 8.507059e+37
          %v4689 = vand.u32 %v4536, 2147483648
          %v4690 = vor.u32 1.1754944e-38, %v4689
          %v4691 = vsel %vm4688, %v4690, %v4686
          %v4692 = vmul.f32 1.0, %v4691
          %v4693 = vrcp.pop %v4537
          %v4694 = vmul.f32 %v4537, %v4693
          %v4695 = vsub.f32 1.0, %v4694
          %v4696 = vmul.f32 %v4693, %v4695
          %v4697 = vadd.f32 %v4693, %v4696
          %vm4698 = vweird.f32 %v4537
          %vm4699 = vweird.f32 %v4693
          %vm4700 = vmor %vm4698, %vm4699
          %v4701 = vsel %vm4700, %v4693, %v4697
          %v4702 = vand.u32 2147483647, %v4537
          %vm4703 = vcmp.eq.f32.partialorder %v4702, 8.507059e+37
          %v4704 = vand.u32 %v4537, 2147483648
          %v4705 = vor.u32 1.1754944e-38, %v4704
          %v4706 = vsel %vm4703, %v4705, %v4701
          %v4707 = vmul.f32 1.0, %v4706
          %v4708 = vrcp.pop %v4538
          %v4709 = vmul.f32 %v4538, %v4708
          %v4710 = vsub.f32 1.0, %v4709
          %v4711 = vmul.f32 %v4708, %v4710
          %v4712 = vadd.f32 %v4708, %v4711
          %vm4713 = vweird.f32 %v4538
          %vm4714 = vweird.f32 %v4708
          %vm4715 = vmor %vm4713, %vm4714
          %v4716 = vsel %vm4715, %v4708, %v4712
          %v4717 = vand.u32 2147483647, %v4538
          %vm4718 = vcmp.eq.f32.partialorder %v4717, 8.507059e+37
          %v4719 = vand.u32 %v4538, 2147483648
          %v4720 = vor.u32 1.1754944e-38, %v4719
          %v4721 = vsel %vm4718, %v4720, %v4716
          %v4722 = vmul.f32 1.0, %v4721
          %v4723 = vrcp.pop %v4539
          %v4724 = vmul.f32 %v4539, %v4723
          %v4725 = vsub.f32 1.0, %v4724
          %v4726 = vmul.f32 %v4723, %v4725
          %v4727 = vadd.f32 %v4723, %v4726
          %vm4728 = vweird.f32 %v4539
          %vm4729 = vweird.f32 %v4723
          %vm4730 = vmor %vm4728, %vm4729
          %v4731 = vsel %vm4730, %v4723, %v4727
          %v4732 = vand.u32 2147483647, %v4539
          %vm4733 = vcmp.eq.f32.partialorder %v4732, 8.507059e+37
          %v4734 = vand.u32 %v4539, 2147483648
          %v4735 = vor.u32 1.1754944e-38, %v4734
          %v4736 = vsel %vm4733, %v4735, %v4731
          %v4737 = vmul.f32 1.0, %v4736
          %v4738 = vrcp.pop %v4540
          %v4739 = vmul.f32 %v4540, %v4738
          %v4740 = vsub.f32 1.0, %v4739
          %v4741 = vmul.f32 %v4738, %v4740
          %v4742 = vadd.f32 %v4738, %v4741
          %vm4743 = vweird.f32 %v4540
          %vm4744 = vweird.f32 %v4738
          %vm4745 = vmor %vm4743, %vm4744
          %v4746 = vsel %vm4745, %v4738, %v4742
          %v4747 = vand.u32 2147483647, %v4540
          %vm4748 = vcmp.eq.f32.partialorder %v4747, 8.507059e+37
          %v4749 = vand.u32 %v4540, 2147483648
          %v4750 = vor.u32 1.1754944e-38, %v4749
          %v4751 = vsel %vm4748, %v4750, %v4746
          %v4752 = vmul.f32 1.0, %v4751
          %v4753 = vrcp.pop %v4541
          %v4754 = vmul.f32 %v4541, %v4753
          %v4755 = vsub.f32 1.0, %v4754
          %v4756 = vmul.f32 %v4753, %v4755
          %v4757 = vadd.f32 %v4753, %v4756
          %vm4758 = vweird.f32 %v4541
          %vm4759 = vweird.f32 %v4753
          %vm4760 = vmor %vm4758, %vm4759
          %v4761 = vsel %vm4760, %v4753, %v4757
          %v4762 = vand.u32 2147483647, %v4541
          %vm4763 = vcmp.eq.f32.partialorder %v4762, 8.507059e+37
          %v4764 = vand.u32 %v4541, 2147483648
          %v4765 = vor.u32 1.1754944e-38, %v4764
          %v4766 = vsel %vm4763, %v4765, %v4761
          %v4767 = vmul.f32 1.0, %v4766
          %v4768 = vrcp.pop %v4542
          %v4769 = vmul.f32 %v4542, %v4768
          %v4770 = vsub.f32 1.0, %v4769
          %v4771 = vmul.f32 %v4768, %v4770
          %v4772 = vadd.f32 %v4768, %v4771
          %vm4773 = vweird.f32 %v4542
          %vm4774 = vweird.f32 %v4768
          %vm4775 = vmor %vm4773, %vm4774
          %v4776 = vsel %vm4775, %v4768, %v4772
          %v4777 = vand.u32 2147483647, %v4542
          %vm4778 = vcmp.eq.f32.partialorder %v4777, 8.507059e+37
          %v4779 = vand.u32 %v4542, 2147483648
          %v4780 = vor.u32 1.1754944e-38, %v4779
          %v4781 = vsel %vm4778, %v4780, %v4776
          %v4782 = vmul.f32 1.0, %v4781
          %4799 = vrot.lane.b32.xlu0 %v3871, 2
          %v4800 = vpop.permute.xlu0 %4799
          %4801 = vrot.lane.b32.xlu0 %v3872, 2
          %v4802 = vpop.permute.xlu0 %4801
          %4803 = vrot.lane.b32.xlu0 %v3873, 2
          %v4804 = vpop.permute.xlu0 %4803
          %4805 = vrot.lane.b32.xlu0 %v3874, 2
          %v4806 = vpop.permute.xlu0 %4805
          %4807 = vrot.lane.b32.xlu0 %v3875, 2
          %v4808 = vpop.permute.xlu0 %4807
          %4809 = vrot.lane.b32.xlu0 %v3876, 2
          %v4810 = vpop.permute.xlu0 %4809
          %4811 = vrot.lane.b32.xlu0 %v3877, 2
          %v4812 = vpop.permute.xlu0 %4811
          %4813 = vrot.lane.b32.xlu0 %v3878, 2
          %v4814 = vpop.permute.xlu0 %4813
          %4815 = vrot.lane.b32.xlu0 %v3879, 2
          %v4816 = vpop.permute.xlu0 %4815
          %4817 = vrot.lane.b32.xlu0 %v3880, 2
          %v4818 = vpop.permute.xlu0 %4817
          %4819 = vrot.lane.b32.xlu0 %v3881, 2
          %v4820 = vpop.permute.xlu0 %4819
          %4821 = vrot.lane.b32.xlu0 %v3882, 2
          %v4822 = vpop.permute.xlu0 %4821
          %4823 = vrot.lane.b32.xlu0 %v3883, 2
          %v4824 = vpop.permute.xlu0 %4823
          %4825 = vrot.lane.b32.xlu0 %v3884, 2
          %v4826 = vpop.permute.xlu0 %4825
          %4827 = vrot.lane.b32.xlu0 %v3885, 2
          %v4828 = vpop.permute.xlu0 %4827
          %4829 = vrot.lane.b32.xlu0 %v3886, 2
          %v4830 = vpop.permute.xlu0 %4829
          %v4847 = vmul.f32 %v3791, %v4800
          %v4848 = vmul.f32 %v3792, %v4802
          %v4849 = vmul.f32 %v3793, %v4804
          %v4850 = vmul.f32 %v3794, %v4806
          %v4851 = vmul.f32 %v3795, %v4808
          %v4852 = vmul.f32 %v3796, %v4810
          %v4853 = vmul.f32 %v3797, %v4812
          %v4854 = vmul.f32 %v3798, %v4814
          %v4855 = vmul.f32 %v3799, %v4816
          %v4856 = vmul.f32 %v3800, %v4818
          %v4857 = vmul.f32 %v3801, %v4820
          %v4858 = vmul.f32 %v3802, %v4822
          %v4859 = vmul.f32 %v3803, %v4824
          %v4860 = vmul.f32 %v3804, %v4826
          %v4861 = vmul.f32 %v3805, %v4828
          %v4862 = vmul.f32 %v3806, %v4830
          %4863 = vrot.lane.b32.xlu0 %v3871, 4
          %v4864 = vpop.permute.xlu0 %4863
          %4865 = vrot.lane.b32.xlu0 %v3872, 4
          %v4866 = vpop.permute.xlu0 %4865
          %4867 = vrot.lane.b32.xlu0 %v3873, 4
          %v4868 = vpop.permute.xlu0 %4867
          %4869 = vrot.lane.b32.xlu0 %v3874, 4
          %v4870 = vpop.permute.xlu0 %4869
          %4871 = vrot.lane.b32.xlu0 %v3875, 4
          %v4872 = vpop.permute.xlu0 %4871
          %4873 = vrot.lane.b32.xlu0 %v3876, 4
          %v4874 = vpop.permute.xlu0 %4873
          %4875 = vrot.lane.b32.xlu0 %v3877, 4
          %v4876 = vpop.permute.xlu0 %4875
          %4877 = vrot.lane.b32.xlu0 %v3878, 4
          %v4878 = vpop.permute.xlu0 %4877
          %4879 = vrot.lane.b32.xlu0 %v3879, 4
          %v4880 = vpop.permute.xlu0 %4879
          %4881 = vrot.lane.b32.xlu0 %v3880, 4
          %v4882 = vpop.permute.xlu0 %4881
          %4883 = vrot.lane.b32.xlu0 %v3881, 4
          %v4884 = vpop.permute.xlu0 %4883
          %4885 = vrot.lane.b32.xlu0 %v3882, 4
          %v4886 = vpop.permute.xlu0 %4885
          %4887 = vrot.lane.b32.xlu0 %v3883, 4
          %v4888 = vpop.permute.xlu0 %4887
          %4889 = vrot.lane.b32.xlu0 %v3884, 4
          %v4890 = vpop.permute.xlu0 %4889
          %4891 = vrot.lane.b32.xlu0 %v3885, 4
          %v4892 = vpop.permute.xlu0 %4891
          %4893 = vrot.lane.b32.xlu0 %v3886, 4
          %v4894 = vpop.permute.xlu0 %4893
          %v4911 = vmul.f32 %v3791, %v4864
          %v4912 = vmul.f32 %v3792, %v4866
          %v4913 = vmul.f32 %v3793, %v4868
          %v4914 = vmul.f32 %v3794, %v4870
          %v4915 = vmul.f32 %v3795, %v4872
          %v4916 = vmul.f32 %v3796, %v4874
          %v4917 = vmul.f32 %v3797, %v4876
          %v4918 = vmul.f32 %v3798, %v4878
          %v4919 = vmul.f32 %v3799, %v4880
          %v4920 = vmul.f32 %v3800, %v4882
          %v4921 = vmul.f32 %v3801, %v4884
          %v4922 = vmul.f32 %v3802, %v4886
          %v4923 = vmul.f32 %v3803, %v4888
          %v4924 = vmul.f32 %v3804, %v4890
          %v4925 = vmul.f32 %v3805, %v4892
          %v4926 = vmul.f32 %v3806, %v4894
          %4943 = vrot.lane.b32.xlu0 %v4911, 127
          %v4944 = vpop.permute.xlu0 %4943
          %4945 = vrot.lane.b32.xlu0 %v4912, 127
          %v4946 = vpop.permute.xlu0 %4945
          %4947 = vrot.lane.b32.xlu0 %v4913, 127
          %v4948 = vpop.permute.xlu0 %4947
          %4949 = vrot.lane.b32.xlu0 %v4914, 127
          %v4950 = vpop.permute.xlu0 %4949
          %4951 = vrot.lane.b32.xlu0 %v4915, 127
          %v4952 = vpop.permute.xlu0 %4951
          %4953 = vrot.lane.b32.xlu0 %v4916, 127
          %v4954 = vpop.permute.xlu0 %4953
          %4955 = vrot.lane.b32.xlu0 %v4917, 127
          %v4956 = vpop.permute.xlu0 %4955
          %4957 = vrot.lane.b32.xlu0 %v4918, 127
          %v4958 = vpop.permute.xlu0 %4957
          %4959 = vrot.lane.b32.xlu0 %v4919, 127
          %v4960 = vpop.permute.xlu0 %4959
          %4961 = vrot.lane.b32.xlu0 %v4920, 127
          %v4962 = vpop.permute.xlu0 %4961
          %4963 = vrot.lane.b32.xlu0 %v4921, 127
          %v4964 = vpop.permute.xlu0 %4963
          %4965 = vrot.lane.b32.xlu0 %v4922, 127
          %v4966 = vpop.permute.xlu0 %4965
          %4967 = vrot.lane.b32.xlu0 %v4923, 127
          %v4968 = vpop.permute.xlu0 %4967
          %4969 = vrot.lane.b32.xlu0 %v4924, 127
          %v4970 = vpop.permute.xlu0 %4969
          %4971 = vrot.lane.b32.xlu0 %v4925, 127
          %v4972 = vpop.permute.xlu0 %4971
          %4973 = vrot.lane.b32.xlu0 %v4926, 127
          %v4974 = vpop.permute.xlu0 %4973
          %v4991 = vsub.f32 %v4847, %v4944
          %v4992 = vsub.f32 %v4848, %v4946
          %v4993 = vsub.f32 %v4849, %v4948
          %v4994 = vsub.f32 %v4850, %v4950
          %v4995 = vsub.f32 %v4851, %v4952
          %v4996 = vsub.f32 %v4852, %v4954
          %v4997 = vsub.f32 %v4853, %v4956
          %v4998 = vsub.f32 %v4854, %v4958
          %v4999 = vsub.f32 %v4855, %v4960
          %v5000 = vsub.f32 %v4856, %v4962
          %v5001 = vsub.f32 %v4857, %v4964
          %v5002 = vsub.f32 %v4858, %v4966
          %v5003 = vsub.f32 %v4859, %v4968
          %v5004 = vsub.f32 %v4860, %v4970
          %v5005 = vsub.f32 %v4861, %v4972
          %v5006 = vsub.f32 %v4862, %v4974
          %5007 = vrot.lane.b32.xlu0 %v3871, 5
          %v5008 = vpop.permute.xlu0 %5007
          %5009 = vrot.lane.b32.xlu0 %v3872, 5
          %v5010 = vpop.permute.xlu0 %5009
          %5011 = vrot.lane.b32.xlu0 %v3873, 5
          %v5012 = vpop.permute.xlu0 %5011
          %5013 = vrot.lane.b32.xlu0 %v3874, 5
          %v5014 = vpop.permute.xlu0 %5013
          %5015 = vrot.lane.b32.xlu0 %v3875, 5
          %v5016 = vpop.permute.xlu0 %5015
          %5017 = vrot.lane.b32.xlu0 %v3876, 5
          %v5018 = vpop.permute.xlu0 %5017
          %5019 = vrot.lane.b32.xlu0 %v3877, 5
          %v5020 = vpop.permute.xlu0 %5019
          %5021 = vrot.lane.b32.xlu0 %v3878, 5
          %v5022 = vpop.permute.xlu0 %5021
          %5023 = vrot.lane.b32.xlu0 %v3879, 5
          %v5024 = vpop.permute.xlu0 %5023
          %5025 = vrot.lane.b32.xlu0 %v3880, 5
          %v5026 = vpop.permute.xlu0 %5025
          %5027 = vrot.lane.b32.xlu0 %v3881, 5
          %v5028 = vpop.permute.xlu0 %5027
          %5029 = vrot.lane.b32.xlu0 %v3882, 5
          %v5030 = vpop.permute.xlu0 %5029
          %5031 = vrot.lane.b32.xlu0 %v3883, 5
          %v5032 = vpop.permute.xlu0 %5031
          %5033 = vrot.lane.b32.xlu0 %v3884, 5
          %v5034 = vpop.permute.xlu0 %5033
          %5035 = vrot.lane.b32.xlu0 %v3885, 5
          %v5036 = vpop.permute.xlu0 %5035
          %5037 = vrot.lane.b32.xlu0 %v3886, 5
          %v5038 = vpop.permute.xlu0 %5037
          %v5055 = vmul.f32 %v3791, %v5008
          %v5056 = vmul.f32 %v3792, %v5010
          %v5057 = vmul.f32 %v3793, %v5012
          %v5058 = vmul.f32 %v3794, %v5014
          %v5059 = vmul.f32 %v3795, %v5016
          %v5060 = vmul.f32 %v3796, %v5018
          %v5061 = vmul.f32 %v3797, %v5020
          %v5062 = vmul.f32 %v3798, %v5022
          %v5063 = vmul.f32 %v3799, %v5024
          %v5064 = vmul.f32 %v3800, %v5026
          %v5065 = vmul.f32 %v3801, %v5028
          %v5066 = vmul.f32 %v3802, %v5030
          %v5067 = vmul.f32 %v3803, %v5032
          %v5068 = vmul.f32 %v3804, %v5034
          %v5069 = vmul.f32 %v3805, %v5036
          %v5070 = vmul.f32 %v3806, %v5038
          %5071 = vrot.lane.b32.xlu0 %v3871, 1
          %v5072 = vpop.permute.xlu0 %5071
          %5073 = vrot.lane.b32.xlu0 %v3872, 1
          %v5074 = vpop.permute.xlu0 %5073
          %5075 = vrot.lane.b32.xlu0 %v3873, 1
          %v5076 = vpop.permute.xlu0 %5075
          %5077 = vrot.lane.b32.xlu0 %v3874, 1
          %v5078 = vpop.permute.xlu0 %5077
          %5079 = vrot.lane.b32.xlu0 %v3875, 1
          %v5080 = vpop.permute.xlu0 %5079
          %5081 = vrot.lane.b32.xlu0 %v3876, 1
          %v5082 = vpop.permute.xlu0 %5081
          %5083 = vrot.lane.b32.xlu0 %v3877, 1
          %v5084 = vpop.permute.xlu0 %5083
          %5085 = vrot.lane.b32.xlu0 %v3878, 1
          %v5086 = vpop.permute.xlu0 %5085
          %5087 = vrot.lane.b32.xlu0 %v3879, 1
          %v5088 = vpop.permute.xlu0 %5087
          %5089 = vrot.lane.b32.xlu0 %v3880, 1
          %v5090 = vpop.permute.xlu0 %5089
          %5091 = vrot.lane.b32.xlu0 %v3881, 1
          %v5092 = vpop.permute.xlu0 %5091
          %5093 = vrot.lane.b32.xlu0 %v3882, 1
          %v5094 = vpop.permute.xlu0 %5093
          %5095 = vrot.lane.b32.xlu0 %v3883, 1
          %v5096 = vpop.permute.xlu0 %5095
          %5097 = vrot.lane.b32.xlu0 %v3884, 1
          %v5098 = vpop.permute.xlu0 %5097
          %5099 = vrot.lane.b32.xlu0 %v3885, 1
          %v5100 = vpop.permute.xlu0 %5099
          %5101 = vrot.lane.b32.xlu0 %v3886, 1
          %v5102 = vpop.permute.xlu0 %5101
          %v5119 = vmul.f32 %v3791, %v5072
          %v5120 = vmul.f32 %v3792, %v5074
          %v5121 = vmul.f32 %v3793, %v5076
          %v5122 = vmul.f32 %v3794, %v5078
          %v5123 = vmul.f32 %v3795, %v5080
          %v5124 = vmul.f32 %v3796, %v5082
          %v5125 = vmul.f32 %v3797, %v5084
          %v5126 = vmul.f32 %v3798, %v5086
          %v5127 = vmul.f32 %v3799, %v5088
          %v5128 = vmul.f32 %v3800, %v5090
          %v5129 = vmul.f32 %v3801, %v5092
          %v5130 = vmul.f32 %v3802, %v5094
          %v5131 = vmul.f32 %v3803, %v5096
          %v5132 = vmul.f32 %v3804, %v5098
          %v5133 = vmul.f32 %v3805, %v5100
          %v5134 = vmul.f32 %v3806, %v5102
          %5151 = vrot.lane.b32.xlu0 %v5119, 2
          %v5152 = vpop.permute.xlu0 %5151
          %5153 = vrot.lane.b32.xlu0 %v5120, 2
          %v5154 = vpop.permute.xlu0 %5153
          %5155 = vrot.lane.b32.xlu0 %v5121, 2
          %v5156 = vpop.permute.xlu0 %5155
          %5157 = vrot.lane.b32.xlu0 %v5122, 2
          %v5158 = vpop.permute.xlu0 %5157
          %5159 = vrot.lane.b32.xlu0 %v5123, 2
          %v5160 = vpop.permute.xlu0 %5159
          %5161 = vrot.lane.b32.xlu0 %v5124, 2
          %v5162 = vpop.permute.xlu0 %5161
          %5163 = vrot.lane.b32.xlu0 %v5125, 2
          %v5164 = vpop.permute.xlu0 %5163
          %5165 = vrot.lane.b32.xlu0 %v5126, 2
          %v5166 = vpop.permute.xlu0 %5165
          %5167 = vrot.lane.b32.xlu0 %v5127, 2
          %v5168 = vpop.permute.xlu0 %5167
          %5169 = vrot.lane.b32.xlu0 %v5128, 2
          %v5170 = vpop.permute.xlu0 %5169
          %5171 = vrot.lane.b32.xlu0 %v5129, 2
          %v5172 = vpop.permute.xlu0 %5171
          %5173 = vrot.lane.b32.xlu0 %v5130, 2
          %v5174 = vpop.permute.xlu0 %5173
          %5175 = vrot.lane.b32.xlu0 %v5131, 2
          %v5176 = vpop.permute.xlu0 %5175
          %5177 = vrot.lane.b32.xlu0 %v5132, 2
          %v5178 = vpop.permute.xlu0 %5177
          %5179 = vrot.lane.b32.xlu0 %v5133, 2
          %v5180 = vpop.permute.xlu0 %5179
          %5181 = vrot.lane.b32.xlu0 %v5134, 2
          %v5182 = vpop.permute.xlu0 %5181
          %v5199 = vsub.f32 %v5055, %v5152
          %v5200 = vsub.f32 %v5056, %v5154
          %v5201 = vsub.f32 %v5057, %v5156
          %v5202 = vsub.f32 %v5058, %v5158
          %v5203 = vsub.f32 %v5059, %v5160
          %v5204 = vsub.f32 %v5060, %v5162
          %v5205 = vsub.f32 %v5061, %v5164
          %v5206 = vsub.f32 %v5062, %v5166
          %v5207 = vsub.f32 %v5063, %v5168
          %v5208 = vsub.f32 %v5064, %v5170
          %v5209 = vsub.f32 %v5065, %v5172
          %v5210 = vsub.f32 %v5066, %v5174
          %v5211 = vsub.f32 %v5067, %v5176
          %v5212 = vsub.f32 %v5068, %v5178
          %v5213 = vsub.f32 %v5069, %v5180
          %v5214 = vsub.f32 %v5070, %v5182
          %v5215 = vmul.f32 %v4991, %v4095
          %v5216 = vmul.f32 %v4992, %v4096
          %v5217 = vmul.f32 %v4993, %v4097
          %v5218 = vmul.f32 %v4994, %v4098
          %v5219 = vmul.f32 %v4995, %v4099
          %v5220 = vmul.f32 %v4996, %v4100
          %v5221 = vmul.f32 %v4997, %v4101
          %v5222 = vmul.f32 %v4998, %v4102
          %v5223 = vmul.f32 %v4999, %v4103
          %v5224 = vmul.f32 %v5000, %v4104
          %v5225 = vmul.f32 %v5001, %v4105
          %v5226 = vmul.f32 %v5002, %v4106
          %v5227 = vmul.f32 %v5003, %v4107
          %v5228 = vmul.f32 %v5004, %v4108
          %v5229 = vmul.f32 %v5005, %v4109
          %v5230 = vmul.f32 %v5006, %v4110
          %v5231 = vmul.f32 %v5199, %v4303
          %v5232 = vmul.f32 %v5200, %v4304
          %v5233 = vmul.f32 %v5201, %v4305
          %v5234 = vmul.f32 %v5202, %v4306
          %v5235 = vmul.f32 %v5203, %v4307
          %v5236 = vmul.f32 %v5204, %v4308
          %v5237 = vmul.f32 %v5205, %v4309
          %v5238 = vmul.f32 %v5206, %v4310
          %v5239 = vmul.f32 %v5207, %v4311
          %v5240 = vmul.f32 %v5208, %v4312
          %v5241 = vmul.f32 %v5209, %v4313
          %v5242 = vmul.f32 %v5210, %v4314
          %v5243 = vmul.f32 %v5211, %v4315
          %v5244 = vmul.f32 %v5212, %v4316
          %v5245 = vmul.f32 %v5213, %v4317
          %v5246 = vmul.f32 %v5214, %v4318
          %5263 = vrot.lane.b32.xlu0 %v5231, 127
          %v5264 = vpop.permute.xlu0 %5263
          %5265 = vrot.lane.b32.xlu0 %v5232, 127
          %v5266 = vpop.permute.xlu0 %5265
          %5267 = vrot.lane.b32.xlu0 %v5233, 127
          %v5268 = vpop.permute.xlu0 %5267
          %5269 = vrot.lane.b32.xlu0 %v5234, 127
          %v5270 = vpop.permute.xlu0 %5269
          %5271 = vrot.lane.b32.xlu0 %v5235, 127
          %v5272 = vpop.permute.xlu0 %5271
          %5273 = vrot.lane.b32.xlu0 %v5236, 127
          %v5274 = vpop.permute.xlu0 %5273
          %5275 = vrot.lane.b32.xlu0 %v5237, 127
          %v5276 = vpop.permute.xlu0 %5275
          %5277 = vrot.lane.b32.xlu0 %v5238, 127
          %v5278 = vpop.permute.xlu0 %5277
          %5279 = vrot.lane.b32.xlu0 %v5239, 127
          %v5280 = vpop.permute.xlu0 %5279
          %5281 = vrot.lane.b32.xlu0 %v5240, 127
          %v5282 = vpop.permute.xlu0 %5281
          %5283 = vrot.lane.b32.xlu0 %v5241, 127
          %v5284 = vpop.permute.xlu0 %5283
          %5285 = vrot.lane.b32.xlu0 %v5242, 127
          %v5286 = vpop.permute.xlu0 %5285
          %5287 = vrot.lane.b32.xlu0 %v5243, 127
          %v5288 = vpop.permute.xlu0 %5287
          %5289 = vrot.lane.b32.xlu0 %v5244, 127
          %v5290 = vpop.permute.xlu0 %5289
          %5291 = vrot.lane.b32.xlu0 %v5245, 127
          %v5292 = vpop.permute.xlu0 %5291
          %5293 = vrot.lane.b32.xlu0 %v5246, 127
          %v5294 = vpop.permute.xlu0 %5293
          %v5311 = vadd.f32 %v5215, %v5264
          %v5312 = vadd.f32 %v5216, %v5266
          %v5313 = vadd.f32 %v5217, %v5268
          %v5314 = vadd.f32 %v5218, %v5270
          %v5315 = vadd.f32 %v5219, %v5272
          %v5316 = vadd.f32 %v5220, %v5274
          %v5317 = vadd.f32 %v5221, %v5276
          %v5318 = vadd.f32 %v5222, %v5278
          %v5319 = vadd.f32 %v5223, %v5280
          %v5320 = vadd.f32 %v5224, %v5282
          %v5321 = vadd.f32 %v5225, %v5284
          %v5322 = vadd.f32 %v5226, %v5286
          %v5323 = vadd.f32 %v5227, %v5288
          %v5324 = vadd.f32 %v5228, %v5290
          %v5325 = vadd.f32 %v5229, %v5292
          %v5326 = vadd.f32 %v5230, %v5294
          %5343 = vrot.lane.b32.xlu0 %v5215, 1
          %v5344 = vpop.permute.xlu0 %5343
          %5345 = vrot.lane.b32.xlu0 %v5216, 1
          %v5346 = vpop.permute.xlu0 %5345
          %5347 = vrot.lane.b32.xlu0 %v5217, 1
          %v5348 = vpop.permute.xlu0 %5347
          %5349 = vrot.lane.b32.xlu0 %v5218, 1
          %v5350 = vpop.permute.xlu0 %5349
          %5351 = vrot.lane.b32.xlu0 %v5219, 1
          %v5352 = vpop.permute.xlu0 %5351
          %5353 = vrot.lane.b32.xlu0 %v5220, 1
          %v5354 = vpop.permute.xlu0 %5353
          %5355 = vrot.lane.b32.xlu0 %v5221, 1
          %v5356 = vpop.permute.xlu0 %5355
          %5357 = vrot.lane.b32.xlu0 %v5222, 1
          %v5358 = vpop.permute.xlu0 %5357
          %5359 = vrot.lane.b32.xlu0 %v5223, 1
          %v5360 = vpop.permute.xlu0 %5359
          %5361 = vrot.lane.b32.xlu0 %v5224, 1
          %v5362 = vpop.permute.xlu0 %5361
          %5363 = vrot.lane.b32.xlu0 %v5225, 1
          %v5364 = vpop.permute.xlu0 %5363
          %5365 = vrot.lane.b32.xlu0 %v5226, 1
          %v5366 = vpop.permute.xlu0 %5365
          %5367 = vrot.lane.b32.xlu0 %v5227, 1
          %v5368 = vpop.permute.xlu0 %5367
          %5369 = vrot.lane.b32.xlu0 %v5228, 1
          %v5370 = vpop.permute.xlu0 %5369
          %5371 = vrot.lane.b32.xlu0 %v5229, 1
          %v5372 = vpop.permute.xlu0 %5371
          %5373 = vrot.lane.b32.xlu0 %v5230, 1
          %v5374 = vpop.permute.xlu0 %5373
          %v5391 = vadd.f32 %v5311, %v5344
          %v5392 = vadd.f32 %v5312, %v5346
          %v5393 = vadd.f32 %v5313, %v5348
          %v5394 = vadd.f32 %v5314, %v5350
          %v5395 = vadd.f32 %v5315, %v5352
          %v5396 = vadd.f32 %v5316, %v5354
          %v5397 = vadd.f32 %v5317, %v5356
          %v5398 = vadd.f32 %v5318, %v5358
          %v5399 = vadd.f32 %v5319, %v5360
          %v5400 = vadd.f32 %v5320, %v5362
          %v5401 = vadd.f32 %v5321, %v5364
          %v5402 = vadd.f32 %v5322, %v5366
          %v5403 = vadd.f32 %v5323, %v5368
          %v5404 = vadd.f32 %v5324, %v5370
          %v5405 = vadd.f32 %v5325, %v5372
          %v5406 = vadd.f32 %v5326, %v5374
          %v5407 = vmul.f32 %v5391, %v4557
          %v5408 = vmul.f32 %v5392, %v4572
          %v5409 = vmul.f32 %v5393, %v4587
          %v5410 = vmul.f32 %v5394, %v4602
          %v5411 = vmul.f32 %v5395, %v4617
          %v5412 = vmul.f32 %v5396, %v4632
          %v5413 = vmul.f32 %v5397, %v4647
          %v5414 = vmul.f32 %v5398, %v4662
          %v5415 = vmul.f32 %v5399, %v4677
          %v5416 = vmul.f32 %v5400, %v4692
          %v5417 = vmul.f32 %v5401, %v4707
          %v5418 = vmul.f32 %v5402, %v4722
          %v5419 = vmul.f32 %v5403, %v4737
          %v5420 = vmul.f32 %v5404, %v4752
          %v5421 = vmul.f32 %v5405, %v4767
          %v5422 = vmul.f32 %v5406, %v4782
          %5423 = vrot.lane.b32.xlu0 %v3855, 121
          %v5424 = vpop.permute.xlu0 %5423
          %5425 = vrot.lane.b32.xlu0 %v3856, 121
          %v5426 = vpop.permute.xlu0 %5425
          %5427 = vrot.lane.b32.xlu0 %v3857, 121
          %v5428 = vpop.permute.xlu0 %5427
          %5429 = vrot.lane.b32.xlu0 %v3858, 121
          %v5430 = vpop.permute.xlu0 %5429
          %5431 = vrot.lane.b32.xlu0 %v3859, 121
          %v5432 = vpop.permute.xlu0 %5431
          %5433 = vrot.lane.b32.xlu0 %v3860, 121
          %v5434 = vpop.permute.xlu0 %5433
          %5435 = vrot.lane.b32.xlu0 %v3861, 121
          %v5436 = vpop.permute.xlu0 %5435
          %5437 = vrot.lane.b32.xlu0 %v3862, 121
          %v5438 = vpop.permute.xlu0 %5437
          %5439 = vrot.lane.b32.xlu0 %v3863, 121
          %v5440 = vpop.permute.xlu0 %5439
          %5441 = vrot.lane.b32.xlu0 %v3864, 121
          %v5442 = vpop.permute.xlu0 %5441
          %5443 = vrot.lane.b32.xlu0 %v3865, 121
          %v5444 = vpop.permute.xlu0 %5443
          %5445 = vrot.lane.b32.xlu0 %v3866, 121
          %v5446 = vpop.permute.xlu0 %5445
          %5447 = vrot.lane.b32.xlu0 %v3867, 121
          %v5448 = vpop.permute.xlu0 %5447
          %5449 = vrot.lane.b32.xlu0 %v3868, 121
          %v5450 = vpop.permute.xlu0 %5449
          %5451 = vrot.lane.b32.xlu0 %v3869, 121
          %v5452 = vpop.permute.xlu0 %5451
          %5453 = vrot.lane.b32.xlu0 %v3870, 121
          %v5454 = vpop.permute.xlu0 %5453
          %v5471 = vmul.f32 %v3871, %v5424
          %v5472 = vmul.f32 %v3872, %v5426
          %v5473 = vmul.f32 %v3873, %v5428
          %v5474 = vmul.f32 %v3874, %v5430
          %v5475 = vmul.f32 %v3875, %v5432
          %v5476 = vmul.f32 %v3876, %v5434
          %v5477 = vmul.f32 %v3877, %v5436
          %v5478 = vmul.f32 %v3878, %v5438
          %v5479 = vmul.f32 %v3879, %v5440
          %v5480 = vmul.f32 %v3880, %v5442
          %v5481 = vmul.f32 %v3881, %v5444
          %v5482 = vmul.f32 %v3882, %v5446
          %v5483 = vmul.f32 %v3883, %v5448
          %v5484 = vmul.f32 %v3884, %v5450
          %v5485 = vmul.f32 %v3885, %v5452
          %v5486 = vmul.f32 %v3886, %v5454
          %v5487 = vmul.f32 %v3871, %v4176
          %v5488 = vmul.f32 %v3872, %v4178
          %v5489 = vmul.f32 %v3873, %v4180
          %v5490 = vmul.f32 %v3874, %v4182
          %v5491 = vmul.f32 %v3875, %v4184
          %v5492 = vmul.f32 %v3876, %v4186
          %v5493 = vmul.f32 %v3877, %v4188
          %v5494 = vmul.f32 %v3878, %v4190
          %v5495 = vmul.f32 %v3879, %v4192
          %v5496 = vmul.f32 %v3880, %v4194
          %v5497 = vmul.f32 %v3881, %v4196
          %v5498 = vmul.f32 %v3882, %v4198
          %v5499 = vmul.f32 %v3883, %v4200
          %v5500 = vmul.f32 %v3884, %v4202
          %v5501 = vmul.f32 %v3885, %v4204
          %v5502 = vmul.f32 %v3886, %v4206
          %5519 = vrot.lane.b32.xlu0 %v5487, 127
          %v5520 = vpop.permute.xlu0 %5519
          %5521 = vrot.lane.b32.xlu0 %v5488, 127
          %v5522 = vpop.permute.xlu0 %5521
          %5523 = vrot.lane.b32.xlu0 %v5489, 127
          %v5524 = vpop.permute.xlu0 %5523
          %5525 = vrot.lane.b32.xlu0 %v5490, 127
          %v5526 = vpop.permute.xlu0 %5525
          %5527 = vrot.lane.b32.xlu0 %v5491, 127
          %v5528 = vpop.permute.xlu0 %5527
          %5529 = vrot.lane.b32.xlu0 %v5492, 127
          %v5530 = vpop.permute.xlu0 %5529
          %5531 = vrot.lane.b32.xlu0 %v5493, 127
          %v5532 = vpop.permute.xlu0 %5531
          %5533 = vrot.lane.b32.xlu0 %v5494, 127
          %v5534 = vpop.permute.xlu0 %5533
          %5535 = vrot.lane.b32.xlu0 %v5495, 127
          %v5536 = vpop.permute.xlu0 %5535
          %5537 = vrot.lane.b32.xlu0 %v5496, 127
          %v5538 = vpop.permute.xlu0 %5537
          %5539 = vrot.lane.b32.xlu0 %v5497, 127
          %v5540 = vpop.permute.xlu0 %5539
          %5541 = vrot.lane.b32.xlu0 %v5498, 127
          %v5542 = vpop.permute.xlu0 %5541
          %5543 = vrot.lane.b32.xlu0 %v5499, 127
          %v5544 = vpop.permute.xlu0 %5543
          %5545 = vrot.lane.b32.xlu0 %v5500, 127
          %v5546 = vpop.permute.xlu0 %5545
          %5547 = vrot.lane.b32.xlu0 %v5501, 127
          %v5548 = vpop.permute.xlu0 %5547
          %5549 = vrot.lane.b32.xlu0 %v5502, 127
          %v5550 = vpop.permute.xlu0 %5549
          %v5567 = vsub.f32 %v5471, %v5520
          %v5568 = vsub.f32 %v5472, %v5522
          %v5569 = vsub.f32 %v5473, %v5524
          %v5570 = vsub.f32 %v5474, %v5526
          %v5571 = vsub.f32 %v5475, %v5528
          %v5572 = vsub.f32 %v5476, %v5530
          %v5573 = vsub.f32 %v5477, %v5532
          %v5574 = vsub.f32 %v5478, %v5534
          %v5575 = vsub.f32 %v5479, %v5536
          %v5576 = vsub.f32 %v5480, %v5538
          %v5577 = vsub.f32 %v5481, %v5540
          %v5578 = vsub.f32 %v5482, %v5542
          %v5579 = vsub.f32 %v5483, %v5544
          %v5580 = vsub.f32 %v5484, %v5546
          %v5581 = vsub.f32 %v5485, %v5548
          %v5582 = vsub.f32 %v5486, %v5550
          %v5583 = vmul.f32 %v3871, %v3904
          %v5584 = vmul.f32 %v3872, %v3906
          %v5585 = vmul.f32 %v3873, %v3908
          %v5586 = vmul.f32 %v3874, %v3910
          %v5587 = vmul.f32 %v3875, %v3912
          %v5588 = vmul.f32 %v3876, %v3914
          %v5589 = vmul.f32 %v3877, %v3916
          %v5590 = vmul.f32 %v3878, %v3918
          %v5591 = vmul.f32 %v3879, %v3920
          %v5592 = vmul.f32 %v3880, %v3922
          %v5593 = vmul.f32 %v3881, %v3924
          %v5594 = vmul.f32 %v3882, %v3926
          %v5595 = vmul.f32 %v3883, %v3928
          %v5596 = vmul.f32 %v3884, %v3930
          %v5597 = vmul.f32 %v3885, %v3932
          %v5598 = vmul.f32 %v3886, %v3934
          %5599 = vrot.lane.b32.xlu0 %v3855, 120
          %v5600 = vpop.permute.xlu0 %5599
          %5601 = vrot.lane.b32.xlu0 %v3856, 120
          %v5602 = vpop.permute.xlu0 %5601
          %5603 = vrot.lane.b32.xlu0 %v3857, 120
          %v5604 = vpop.permute.xlu0 %5603
          %5605 = vrot.lane.b32.xlu0 %v3858, 120
          %v5606 = vpop.permute.xlu0 %5605
          %5607 = vrot.lane.b32.xlu0 %v3859, 120
          %v5608 = vpop.permute.xlu0 %5607
          %5609 = vrot.lane.b32.xlu0 %v3860, 120
          %v5610 = vpop.permute.xlu0 %5609
          %5611 = vrot.lane.b32.xlu0 %v3861, 120
          %v5612 = vpop.permute.xlu0 %5611
          %5613 = vrot.lane.b32.xlu0 %v3862, 120
          %v5614 = vpop.permute.xlu0 %5613
          %5615 = vrot.lane.b32.xlu0 %v3863, 120
          %v5616 = vpop.permute.xlu0 %5615
          %5617 = vrot.lane.b32.xlu0 %v3864, 120
          %v5618 = vpop.permute.xlu0 %5617
          %5619 = vrot.lane.b32.xlu0 %v3865, 120
          %v5620 = vpop.permute.xlu0 %5619
          %5621 = vrot.lane.b32.xlu0 %v3866, 120
          %v5622 = vpop.permute.xlu0 %5621
          %5623 = vrot.lane.b32.xlu0 %v3867, 120
          %v5624 = vpop.permute.xlu0 %5623
          %5625 = vrot.lane.b32.xlu0 %v3868, 120
          %v5626 = vpop.permute.xlu0 %5625
          %5627 = vrot.lane.b32.xlu0 %v3869, 120
          %v5628 = vpop.permute.xlu0 %5627
          %5629 = vrot.lane.b32.xlu0 %v3870, 120
          %v5630 = vpop.permute.xlu0 %5629
          %v5647 = vmul.f32 %v3871, %v5600
          %v5648 = vmul.f32 %v3872, %v5602
          %v5649 = vmul.f32 %v3873, %v5604
          %v5650 = vmul.f32 %v3874, %v5606
          %v5651 = vmul.f32 %v3875, %v5608
          %v5652 = vmul.f32 %v3876, %v5610
          %v5653 = vmul.f32 %v3877, %v5612
          %v5654 = vmul.f32 %v3878, %v5614
          %v5655 = vmul.f32 %v3879, %v5616
          %v5656 = vmul.f32 %v3880, %v5618
          %v5657 = vmul.f32 %v3881, %v5620
          %v5658 = vmul.f32 %v3882, %v5622
          %v5659 = vmul.f32 %v3883, %v5624
          %v5660 = vmul.f32 %v3884, %v5626
          %v5661 = vmul.f32 %v3885, %v5628
          %v5662 = vmul.f32 %v3886, %v5630
          %5679 = vrot.lane.b32.xlu0 %v5647, 2
          %v5680 = vpop.permute.xlu0 %5679
          %5681 = vrot.lane.b32.xlu0 %v5648, 2
          %v5682 = vpop.permute.xlu0 %5681
          %5683 = vrot.lane.b32.xlu0 %v5649, 2
          %v5684 = vpop.permute.xlu0 %5683
          %5685 = vrot.lane.b32.xlu0 %v5650, 2
          %v5686 = vpop.permute.xlu0 %5685
          %5687 = vrot.lane.b32.xlu0 %v5651, 2
          %v5688 = vpop.permute.xlu0 %5687
          %5689 = vrot.lane.b32.xlu0 %v5652, 2
          %v5690 = vpop.permute.xlu0 %5689
          %5691 = vrot.lane.b32.xlu0 %v5653, 2
          %v5692 = vpop.permute.xlu0 %5691
          %5693 = vrot.lane.b32.xlu0 %v5654, 2
          %v5694 = vpop.permute.xlu0 %5693
          %5695 = vrot.lane.b32.xlu0 %v5655, 2
          %v5696 = vpop.permute.xlu0 %5695
          %5697 = vrot.lane.b32.xlu0 %v5656, 2
          %v5698 = vpop.permute.xlu0 %5697
          %5699 = vrot.lane.b32.xlu0 %v5657, 2
          %v5700 = vpop.permute.xlu0 %5699
          %5701 = vrot.lane.b32.xlu0 %v5658, 2
          %v5702 = vpop.permute.xlu0 %5701
          %5703 = vrot.lane.b32.xlu0 %v5659, 2
          %v5704 = vpop.permute.xlu0 %5703
          %5705 = vrot.lane.b32.xlu0 %v5660, 2
          %v5706 = vpop.permute.xlu0 %5705
          %5707 = vrot.lane.b32.xlu0 %v5661, 2
          %v5708 = vpop.permute.xlu0 %5707
          %5709 = vrot.lane.b32.xlu0 %v5662, 2
          %v5710 = vpop.permute.xlu0 %5709
          %v5727 = vsub.f32 %v5583, %v5680
          %v5728 = vsub.f32 %v5584, %v5682
          %v5729 = vsub.f32 %v5585, %v5684
          %v5730 = vsub.f32 %v5586, %v5686
          %v5731 = vsub.f32 %v5587, %v5688
          %v5732 = vsub.f32 %v5588, %v5690
          %v5733 = vsub.f32 %v5589, %v5692
          %v5734 = vsub.f32 %v5590, %v5694
          %v5735 = vsub.f32 %v5591, %v5696
          %v5736 = vsub.f32 %v5592, %v5698
          %v5737 = vsub.f32 %v5593, %v5700
          %v5738 = vsub.f32 %v5594, %v5702
          %v5739 = vsub.f32 %v5595, %v5704
          %v5740 = vsub.f32 %v5596, %v5706
          %v5741 = vsub.f32 %v5597, %v5708
          %v5742 = vsub.f32 %v5598, %v5710
          %5759 = vrot.lane.b32.xlu0 %v4095, 125
          %v5760 = vpop.permute.xlu0 %5759
          %5761 = vrot.lane.b32.xlu0 %v4096, 125
          %v5762 = vpop.permute.xlu0 %5761
          %5763 = vrot.lane.b32.xlu0 %v4097, 125
          %v5764 = vpop.permute.xlu0 %5763
          %5765 = vrot.lane.b32.xlu0 %v4098, 125
          %v5766 = vpop.permute.xlu0 %5765
          %5767 = vrot.lane.b32.xlu0 %v4099, 125
          %v5768 = vpop.permute.xlu0 %5767
          %5769 = vrot.lane.b32.xlu0 %v4100, 125
          %v5770 = vpop.permute.xlu0 %5769
          %5771 = vrot.lane.b32.xlu0 %v4101, 125
          %v5772 = vpop.permute.xlu0 %5771
          %5773 = vrot.lane.b32.xlu0 %v4102, 125
          %v5774 = vpop.permute.xlu0 %5773
          %5775 = vrot.lane.b32.xlu0 %v4103, 125
          %v5776 = vpop.permute.xlu0 %5775
          %5777 = vrot.lane.b32.xlu0 %v4104, 125
          %v5778 = vpop.permute.xlu0 %5777
          %5779 = vrot.lane.b32.xlu0 %v4105, 125
          %v5780 = vpop.permute.xlu0 %5779
          %5781 = vrot.lane.b32.xlu0 %v4106, 125
          %v5782 = vpop.permute.xlu0 %5781
          %5783 = vrot.lane.b32.xlu0 %v4107, 125
          %v5784 = vpop.permute.xlu0 %5783
          %5785 = vrot.lane.b32.xlu0 %v4108, 125
          %v5786 = vpop.permute.xlu0 %5785
          %5787 = vrot.lane.b32.xlu0 %v4109, 125
          %v5788 = vpop.permute.xlu0 %5787
          %5789 = vrot.lane.b32.xlu0 %v4110, 125
          %v5790 = vpop.permute.xlu0 %5789
          %v5807 = vmul.f32 %v5567, %v5760
          %v5808 = vmul.f32 %v5568, %v5762
          %v5809 = vmul.f32 %v5569, %v5764
          %v5810 = vmul.f32 %v5570, %v5766
          %v5811 = vmul.f32 %v5571, %v5768
          %v5812 = vmul.f32 %v5572, %v5770
          %v5813 = vmul.f32 %v5573, %v5772
          %v5814 = vmul.f32 %v5574, %v5774
          %v5815 = vmul.f32 %v5575, %v5776
          %v5816 = vmul.f32 %v5576, %v5778
          %v5817 = vmul.f32 %v5577, %v5780
          %v5818 = vmul.f32 %v5578, %v5782
          %v5819 = vmul.f32 %v5579, %v5784
          %v5820 = vmul.f32 %v5580, %v5786
          %v5821 = vmul.f32 %v5581, %v5788
          %v5822 = vmul.f32 %v5582, %v5790
          %5839 = vrot.lane.b32.xlu0 %v4303, 125
          %v5840 = vpop.permute.xlu0 %5839
          %5841 = vrot.lane.b32.xlu0 %v4304, 125
          %v5842 = vpop.permute.xlu0 %5841
          %5843 = vrot.lane.b32.xlu0 %v4305, 125
          %v5844 = vpop.permute.xlu0 %5843
          %5845 = vrot.lane.b32.xlu0 %v4306, 125
          %v5846 = vpop.permute.xlu0 %5845
          %5847 = vrot.lane.b32.xlu0 %v4307, 125
          %v5848 = vpop.permute.xlu0 %5847
          %5849 = vrot.lane.b32.xlu0 %v4308, 125
          %v5850 = vpop.permute.xlu0 %5849
          %5851 = vrot.lane.b32.xlu0 %v4309, 125
          %v5852 = vpop.permute.xlu0 %5851
          %5853 = vrot.lane.b32.xlu0 %v4310, 125
          %v5854 = vpop.permute.xlu0 %5853
          %5855 = vrot.lane.b32.xlu0 %v4311, 125
          %v5856 = vpop.permute.xlu0 %5855
          %5857 = vrot.lane.b32.xlu0 %v4312, 125
          %v5858 = vpop.permute.xlu0 %5857
          %5859 = vrot.lane.b32.xlu0 %v4313, 125
          %v5860 = vpop.permute.xlu0 %5859
          %5861 = vrot.lane.b32.xlu0 %v4314, 125
          %v5862 = vpop.permute.xlu0 %5861
          %5863 = vrot.lane.b32.xlu0 %v4315, 125
          %v5864 = vpop.permute.xlu0 %5863
          %5865 = vrot.lane.b32.xlu0 %v4316, 125
          %v5866 = vpop.permute.xlu0 %5865
          %5867 = vrot.lane.b32.xlu0 %v4317, 125
          %v5868 = vpop.permute.xlu0 %5867
          %5869 = vrot.lane.b32.xlu0 %v4318, 125
          %v5870 = vpop.permute.xlu0 %5869
          %v5887 = vmul.f32 %v5727, %v5840
          %v5888 = vmul.f32 %v5728, %v5842
          %v5889 = vmul.f32 %v5729, %v5844
          %v5890 = vmul.f32 %v5730, %v5846
          %v5891 = vmul.f32 %v5731, %v5848
          %v5892 = vmul.f32 %v5732, %v5850
          %v5893 = vmul.f32 %v5733, %v5852
          %v5894 = vmul.f32 %v5734, %v5854
          %v5895 = vmul.f32 %v5735, %v5856
          %v5896 = vmul.f32 %v5736, %v5858
          %v5897 = vmul.f32 %v5737, %v5860
          %v5898 = vmul.f32 %v5738, %v5862
          %v5899 = vmul.f32 %v5739, %v5864
          %v5900 = vmul.f32 %v5740, %v5866
          %v5901 = vmul.f32 %v5741, %v5868
          %v5902 = vmul.f32 %v5742, %v5870
          %5919 = vrot.lane.b32.xlu0 %v5887, 127
          %v5920 = vpop.permute.xlu0 %5919
          %5921 = vrot.lane.b32.xlu0 %v5888, 127
          %v5922 = vpop.permute.xlu0 %5921
          %5923 = vrot.lane.b32.xlu0 %v5889, 127
          %v5924 = vpop.permute.xlu0 %5923
          %5925 = vrot.lane.b32.xlu0 %v5890, 127
          %v5926 = vpop.permute.xlu0 %5925
          %5927 = vrot.lane.b32.xlu0 %v5891, 127
          %v5928 = vpop.permute.xlu0 %5927
          %5929 = vrot.lane.b32.xlu0 %v5892, 127
          %v5930 = vpop.permute.xlu0 %5929
          %5931 = vrot.lane.b32.xlu0 %v5893, 127
          %v5932 = vpop.permute.xlu0 %5931
          %5933 = vrot.lane.b32.xlu0 %v5894, 127
          %v5934 = vpop.permute.xlu0 %5933
          %5935 = vrot.lane.b32.xlu0 %v5895, 127
          %v5936 = vpop.permute.xlu0 %5935
          %5937 = vrot.lane.b32.xlu0 %v5896, 127
          %v5938 = vpop.permute.xlu0 %5937
          %5939 = vrot.lane.b32.xlu0 %v5897, 127
          %v5940 = vpop.permute.xlu0 %5939
          %5941 = vrot.lane.b32.xlu0 %v5898, 127
          %v5942 = vpop.permute.xlu0 %5941
          %5943 = vrot.lane.b32.xlu0 %v5899, 127
          %v5944 = vpop.permute.xlu0 %5943
          %5945 = vrot.lane.b32.xlu0 %v5900, 127
          %v5946 = vpop.permute.xlu0 %5945
          %5947 = vrot.lane.b32.xlu0 %v5901, 127
          %v5948 = vpop.permute.xlu0 %5947
          %5949 = vrot.lane.b32.xlu0 %v5902, 127
          %v5950 = vpop.permute.xlu0 %5949
          %v5967 = vadd.f32 %v5807, %v5920
          %v5968 = vadd.f32 %v5808, %v5922
          %v5969 = vadd.f32 %v5809, %v5924
          %v5970 = vadd.f32 %v5810, %v5926
          %v5971 = vadd.f32 %v5811, %v5928
          %v5972 = vadd.f32 %v5812, %v5930
          %v5973 = vadd.f32 %v5813, %v5932
          %v5974 = vadd.f32 %v5814, %v5934
          %v5975 = vadd.f32 %v5815, %v5936
          %v5976 = vadd.f32 %v5816, %v5938
          %v5977 = vadd.f32 %v5817, %v5940
          %v5978 = vadd.f32 %v5818, %v5942
          %v5979 = vadd.f32 %v5819, %v5944
          %v5980 = vadd.f32 %v5820, %v5946
          %v5981 = vadd.f32 %v5821, %v5948
          %v5982 = vadd.f32 %v5822, %v5950
          %5999 = vrot.lane.b32.xlu0 %v5807, 1
          %v6000 = vpop.permute.xlu0 %5999
          %6001 = vrot.lane.b32.xlu0 %v5808, 1
          %v6002 = vpop.permute.xlu0 %6001
          %6003 = vrot.lane.b32.xlu0 %v5809, 1
          %v6004 = vpop.permute.xlu0 %6003
          %6005 = vrot.lane.b32.xlu0 %v5810, 1
          %v6006 = vpop.permute.xlu0 %6005
          %6007 = vrot.lane.b32.xlu0 %v5811, 1
          %v6008 = vpop.permute.xlu0 %6007
          %6009 = vrot.lane.b32.xlu0 %v5812, 1
          %v6010 = vpop.permute.xlu0 %6009
          %6011 = vrot.lane.b32.xlu0 %v5813, 1
          %v6012 = vpop.permute.xlu0 %6011
          %6013 = vrot.lane.b32.xlu0 %v5814, 1
          %v6014 = vpop.permute.xlu0 %6013
          %6015 = vrot.lane.b32.xlu0 %v5815, 1
          %v6016 = vpop.permute.xlu0 %6015
          %6017 = vrot.lane.b32.xlu0 %v5816, 1
          %v6018 = vpop.permute.xlu0 %6017
          %6019 = vrot.lane.b32.xlu0 %v5817, 1
          %v6020 = vpop.permute.xlu0 %6019
          %6021 = vrot.lane.b32.xlu0 %v5818, 1
          %v6022 = vpop.permute.xlu0 %6021
          %6023 = vrot.lane.b32.xlu0 %v5819, 1
          %v6024 = vpop.permute.xlu0 %6023
          %6025 = vrot.lane.b32.xlu0 %v5820, 1
          %v6026 = vpop.permute.xlu0 %6025
          %6027 = vrot.lane.b32.xlu0 %v5821, 1
          %v6028 = vpop.permute.xlu0 %6027
          %6029 = vrot.lane.b32.xlu0 %v5822, 1
          %v6030 = vpop.permute.xlu0 %6029
          %v6047 = vadd.f32 %v5967, %v6000
          %v6048 = vadd.f32 %v5968, %v6002
          %v6049 = vadd.f32 %v5969, %v6004
          %v6050 = vadd.f32 %v5970, %v6006
          %v6051 = vadd.f32 %v5971, %v6008
          %v6052 = vadd.f32 %v5972, %v6010
          %v6053 = vadd.f32 %v5973, %v6012
          %v6054 = vadd.f32 %v5974, %v6014
          %v6055 = vadd.f32 %v5975, %v6016
          %v6056 = vadd.f32 %v5976, %v6018
          %v6057 = vadd.f32 %v5977, %v6020
          %v6058 = vadd.f32 %v5978, %v6022
          %v6059 = vadd.f32 %v5979, %v6024
          %v6060 = vadd.f32 %v5980, %v6026
          %v6061 = vadd.f32 %v5981, %v6028
          %v6062 = vadd.f32 %v5982, %v6030
          %6079 = vrot.lane.b32.xlu0 %v4557, 125
          %v6080 = vpop.permute.xlu0 %6079
          %6081 = vrot.lane.b32.xlu0 %v4572, 125
          %v6082 = vpop.permute.xlu0 %6081
          %6083 = vrot.lane.b32.xlu0 %v4587, 125
          %v6084 = vpop.permute.xlu0 %6083
          %6085 = vrot.lane.b32.xlu0 %v4602, 125
          %v6086 = vpop.permute.xlu0 %6085
          %6087 = vrot.lane.b32.xlu0 %v4617, 125
          %v6088 = vpop.permute.xlu0 %6087
          %6089 = vrot.lane.b32.xlu0 %v4632, 125
          %v6090 = vpop.permute.xlu0 %6089
          %6091 = vrot.lane.b32.xlu0 %v4647, 125
          %v6092 = vpop.permute.xlu0 %6091
          %6093 = vrot.lane.b32.xlu0 %v4662, 125
          %v6094 = vpop.permute.xlu0 %6093
          %6095 = vrot.lane.b32.xlu0 %v4677, 125
          %v6096 = vpop.permute.xlu0 %6095
          %6097 = vrot.lane.b32.xlu0 %v4692, 125
          %v6098 = vpop.permute.xlu0 %6097
          %6099 = vrot.lane.b32.xlu0 %v4707, 125
          %v6100 = vpop.permute.xlu0 %6099
          %6101 = vrot.lane.b32.xlu0 %v4722, 125
          %v6102 = vpop.permute.xlu0 %6101
          %6103 = vrot.lane.b32.xlu0 %v4737, 125
          %v6104 = vpop.permute.xlu0 %6103
          %6105 = vrot.lane.b32.xlu0 %v4752, 125
          %v6106 = vpop.permute.xlu0 %6105
          %6107 = vrot.lane.b32.xlu0 %v4767, 125
          %v6108 = vpop.permute.xlu0 %6107
          %6109 = vrot.lane.b32.xlu0 %v4782, 125
          %v6110 = vpop.permute.xlu0 %6109
          %v6127 = vmul.f32 %v6047, %v6080
          %v6128 = vmul.f32 %v6048, %v6082
          %v6129 = vmul.f32 %v6049, %v6084
          %v6130 = vmul.f32 %v6050, %v6086
          %v6131 = vmul.f32 %v6051, %v6088
          %v6132 = vmul.f32 %v6052, %v6090
          %v6133 = vmul.f32 %v6053, %v6092
          %v6134 = vmul.f32 %v6054, %v6094
          %v6135 = vmul.f32 %v6055, %v6096
          %v6136 = vmul.f32 %v6056, %v6098
          %v6137 = vmul.f32 %v6057, %v6100
          %v6138 = vmul.f32 %v6058, %v6102
          %v6139 = vmul.f32 %v6059, %v6104
          %v6140 = vmul.f32 %v6060, %v6106
          %v6141 = vmul.f32 %v6061, %v6108
          %v6142 = vmul.f32 %v6062, %v6110
          %v6143 = vsub.f32 1.0, %v6127
          %v6144 = vsub.f32 1.0, %v6128
          %v6145 = vsub.f32 1.0, %v6129
          %v6146 = vsub.f32 1.0, %v6130
          %v6147 = vsub.f32 1.0, %v6131
          %v6148 = vsub.f32 1.0, %v6132
          %v6149 = vsub.f32 1.0, %v6133
          %v6150 = vsub.f32 1.0, %v6134
          %v6151 = vsub.f32 1.0, %v6135
          %v6152 = vsub.f32 1.0, %v6136
          %v6153 = vsub.f32 1.0, %v6137
          %v6154 = vsub.f32 1.0, %v6138
          %v6155 = vsub.f32 1.0, %v6139
          %v6156 = vsub.f32 1.0, %v6140
          %v6157 = vsub.f32 1.0, %v6141
          %v6158 = vsub.f32 1.0, %v6142
          %6175 = vrot.lane.b32.xlu0 %v5407, 125
          %v6176 = vpop.permute.xlu0 %6175
          %6177 = vrot.lane.b32.xlu0 %v5408, 125
          %v6178 = vpop.permute.xlu0 %6177
          %6179 = vrot.lane.b32.xlu0 %v5409, 125
          %v6180 = vpop.permute.xlu0 %6179
          %6181 = vrot.lane.b32.xlu0 %v5410, 125
          %v6182 = vpop.permute.xlu0 %6181
          %6183 = vrot.lane.b32.xlu0 %v5411, 125
          %v6184 = vpop.permute.xlu0 %6183
          %6185 = vrot.lane.b32.xlu0 %v5412, 125
          %v6186 = vpop.permute.xlu0 %6185
          %6187 = vrot.lane.b32.xlu0 %v5413, 125
          %v6188 = vpop.permute.xlu0 %6187
          %6189 = vrot.lane.b32.xlu0 %v5414, 125
          %v6190 = vpop.permute.xlu0 %6189
          %6191 = vrot.lane.b32.xlu0 %v5415, 125
          %v6192 = vpop.permute.xlu0 %6191
          %6193 = vrot.lane.b32.xlu0 %v5416, 125
          %v6194 = vpop.permute.xlu0 %6193
          %6195 = vrot.lane.b32.xlu0 %v5417, 125
          %v6196 = vpop.permute.xlu0 %6195
          %6197 = vrot.lane.b32.xlu0 %v5418, 125
          %v6198 = vpop.permute.xlu0 %6197
          %6199 = vrot.lane.b32.xlu0 %v5419, 125
          %v6200 = vpop.permute.xlu0 %6199
          %6201 = vrot.lane.b32.xlu0 %v5420, 125
          %v6202 = vpop.permute.xlu0 %6201
          %6203 = vrot.lane.b32.xlu0 %v5421, 125
          %v6204 = vpop.permute.xlu0 %6203
          %6205 = vrot.lane.b32.xlu0 %v5422, 125
          %v6206 = vpop.permute.xlu0 %6205
          %v6223 = vsub.f32 %v6143, %v6176
          %v6224 = vsub.f32 %v6144, %v6178
          %v6225 = vsub.f32 %v6145, %v6180
          %v6226 = vsub.f32 %v6146, %v6182
          %v6227 = vsub.f32 %v6147, %v6184
          %v6228 = vsub.f32 %v6148, %v6186
          %v6229 = vsub.f32 %v6149, %v6188
          %v6230 = vsub.f32 %v6150, %v6190
          %v6231 = vsub.f32 %v6151, %v6192
          %v6232 = vsub.f32 %v6152, %v6194
          %v6233 = vsub.f32 %v6153, %v6196
          %v6234 = vsub.f32 %v6154, %v6198
          %v6235 = vsub.f32 %v6155, %v6200
          %v6236 = vsub.f32 %v6156, %v6202
          %v6237 = vsub.f32 %v6157, %v6204
          %v6238 = vsub.f32 %v6158, %v6206
          %6240 = vset.pattern.permute.xlu0 1
          %6241 = vperm.xlu0 %6240, %v6223
          %v6242 = vpop.permute.xlu0 %6241
          %6245 = vset.pattern.permute.xlu0 1
          %6246 = vperm.xlu0 %6245, %v6224
          %v6247 = vpop.permute.xlu0 %6246
          %6250 = vset.pattern.permute.xlu0 1
          %6251 = vperm.xlu0 %6250, %v6225
          %v6252 = vpop.permute.xlu0 %6251
          %6255 = vset.pattern.permute.xlu0 1
          %6256 = vperm.xlu0 %6255, %v6226
          %v6257 = vpop.permute.xlu0 %6256
          %6260 = vset.pattern.permute.xlu0 1
          %6261 = vperm.xlu0 %6260, %v6227
          %v6262 = vpop.permute.xlu0 %6261
          %6265 = vset.pattern.permute.xlu0 1
          %6266 = vperm.xlu0 %6265, %v6228
          %v6267 = vpop.permute.xlu0 %6266
          %6270 = vset.pattern.permute.xlu0 1
          %6271 = vperm.xlu0 %6270, %v6229
          %v6272 = vpop.permute.xlu0 %6271
          %6275 = vset.pattern.permute.xlu0 1
          %6276 = vperm.xlu0 %6275, %v6230
          %v6277 = vpop.permute.xlu0 %6276
          %6280 = vset.pattern.permute.xlu0 1
          %6281 = vperm.xlu0 %6280, %v6231
          %v6282 = vpop.permute.xlu0 %6281
          %6285 = vset.pattern.permute.xlu0 1
          %6286 = vperm.xlu0 %6285, %v6232
          %v6287 = vpop.permute.xlu0 %6286
          %6290 = vset.pattern.permute.xlu0 1
          %6291 = vperm.xlu0 %6290, %v6233
          %v6292 = vpop.permute.xlu0 %6291
          %6295 = vset.pattern.permute.xlu0 1
          %6296 = vperm.xlu0 %6295, %v6234
          %v6297 = vpop.permute.xlu0 %6296
          %6300 = vset.pattern.permute.xlu0 1
          %6301 = vperm.xlu0 %6300, %v6235
          %v6302 = vpop.permute.xlu0 %6301
          %6305 = vset.pattern.permute.xlu0 1
          %6306 = vperm.xlu0 %6305, %v6236
          %v6307 = vpop.permute.xlu0 %6306
          %6310 = vset.pattern.permute.xlu0 1
          %6311 = vperm.xlu0 %6310, %v6237
          %v6312 = vpop.permute.xlu0 %6311
          %6315 = vset.pattern.permute.xlu0 1
          %6316 = vperm.xlu0 %6315, %v6238
          %v6317 = vpop.permute.xlu0 %6316
          %v6319 = vmul.f32 %v6242, %v3711
          %v6320 = vmul.f32 %v6247, %v3712
          %v6321 = vmul.f32 %v6252, %v3713
          %v6322 = vmul.f32 %v6257, %v3714
          %v6323 = vmul.f32 %v6262, %v3715
          %v6324 = vmul.f32 %v6267, %v3716
          %v6325 = vmul.f32 %v6272, %v3717
          %v6326 = vmul.f32 %v6277, %v3718
          %v6327 = vmul.f32 %v6282, %v3719
          %v6328 = vmul.f32 %v6287, %v3720
          %v6329 = vmul.f32 %v6292, %v3721
          %v6330 = vmul.f32 %v6297, %v3722
          %v6331 = vmul.f32 %v6302, %v3723
          %v6332 = vmul.f32 %v6307, %v3724
          %v6333 = vmul.f32 %v6312, %v3725
          %v6334 = vmul.f32 %v6317, %v3726
          %6336 = vset.pattern.permute.xlu0 1
          %6337 = vperm.xlu0 %6336, %v6127
          %v6338 = vpop.permute.xlu0 %6337
          %6341 = vset.pattern.permute.xlu0 1
          %6342 = vperm.xlu0 %6341, %v6128
          %v6343 = vpop.permute.xlu0 %6342
          %6346 = vset.pattern.permute.xlu0 1
          %6347 = vperm.xlu0 %6346, %v6129
          %v6348 = vpop.permute.xlu0 %6347
          %6351 = vset.pattern.permute.xlu0 1
          %6352 = vperm.xlu0 %6351, %v6130
          %v6353 = vpop.permute.xlu0 %6352
          %6356 = vset.pattern.permute.xlu0 1
          %6357 = vperm.xlu0 %6356, %v6131
          %v6358 = vpop.permute.xlu0 %6357
          %6361 = vset.pattern.permute.xlu0 1
          %6362 = vperm.xlu0 %6361, %v6132
          %v6363 = vpop.permute.xlu0 %6362
          %6366 = vset.pattern.permute.xlu0 1
          %6367 = vperm.xlu0 %6366, %v6133
          %v6368 = vpop.permute.xlu0 %6367
          %6371 = vset.pattern.permute.xlu0 1
          %6372 = vperm.xlu0 %6371, %v6134
          %v6373 = vpop.permute.xlu0 %6372
          %6376 = vset.pattern.permute.xlu0 1
          %6377 = vperm.xlu0 %6376, %v6135
          %v6378 = vpop.permute.xlu0 %6377
          %6381 = vset.pattern.permute.xlu0 1
          %6382 = vperm.xlu0 %6381, %v6136
          %v6383 = vpop.permute.xlu0 %6382
          %6386 = vset.pattern.permute.xlu0 1
          %6387 = vperm.xlu0 %6386, %v6137
          %v6388 = vpop.permute.xlu0 %6387
          %6391 = vset.pattern.permute.xlu0 1
          %6392 = vperm.xlu0 %6391, %v6138
          %v6393 = vpop.permute.xlu0 %6392
          %6396 = vset.pattern.permute.xlu0 1
          %6397 = vperm.xlu0 %6396, %v6139
          %v6398 = vpop.permute.xlu0 %6397
          %6401 = vset.pattern.permute.xlu0 1
          %6402 = vperm.xlu0 %6401, %v6140
          %v6403 = vpop.permute.xlu0 %6402
          %6406 = vset.pattern.permute.xlu0 1
          %6407 = vperm.xlu0 %6406, %v6141
          %v6408 = vpop.permute.xlu0 %6407
          %6411 = vset.pattern.permute.xlu0 1
          %6412 = vperm.xlu0 %6411, %v6142
          %v6413 = vpop.permute.xlu0 %6412
          %v6415 = vmul.f32 %v6338, %v3711
          %v6416 = vmul.f32 %v6343, %v3712
          %v6417 = vmul.f32 %v6348, %v3713
          %v6418 = vmul.f32 %v6353, %v3714
          %v6419 = vmul.f32 %v6358, %v3715
          %v6420 = vmul.f32 %v6363, %v3716
          %v6421 = vmul.f32 %v6368, %v3717
          %v6422 = vmul.f32 %v6373, %v3718
          %v6423 = vmul.f32 %v6378, %v3719
          %v6424 = vmul.f32 %v6383, %v3720
          %v6425 = vmul.f32 %v6388, %v3721
          %v6426 = vmul.f32 %v6393, %v3722
          %v6427 = vmul.f32 %v6398, %v3723
          %v6428 = vmul.f32 %v6403, %v3724
          %v6429 = vmul.f32 %v6408, %v3725
          %v6430 = vmul.f32 %v6413, %v3726
          %6447 = vrot.lane.b32.xlu0 %v6415, 112
          %v6448 = vpop.permute.xlu0 %6447
          %6449 = vrot.lane.b32.xlu0 %v6416, 112
          %v6450 = vpop.permute.xlu0 %6449
          %6451 = vrot.lane.b32.xlu0 %v6417, 112
          %v6452 = vpop.permute.xlu0 %6451
          %6453 = vrot.lane.b32.xlu0 %v6418, 112
          %v6454 = vpop.permute.xlu0 %6453
          %6455 = vrot.lane.b32.xlu0 %v6419, 112
          %v6456 = vpop.permute.xlu0 %6455
          %6457 = vrot.lane.b32.xlu0 %v6420, 112
          %v6458 = vpop.permute.xlu0 %6457
          %6459 = vrot.lane.b32.xlu0 %v6421, 112
          %v6460 = vpop.permute.xlu0 %6459
          %6461 = vrot.lane.b32.xlu0 %v6422, 112
          %v6462 = vpop.permute.xlu0 %6461
          %6463 = vrot.lane.b32.xlu0 %v6423, 112
          %v6464 = vpop.permute.xlu0 %6463
          %6465 = vrot.lane.b32.xlu0 %v6424, 112
          %v6466 = vpop.permute.xlu0 %6465
          %6467 = vrot.lane.b32.xlu0 %v6425, 112
          %v6468 = vpop.permute.xlu0 %6467
          %6469 = vrot.lane.b32.xlu0 %v6426, 112
          %v6470 = vpop.permute.xlu0 %6469
          %6471 = vrot.lane.b32.xlu0 %v6427, 112
          %v6472 = vpop.permute.xlu0 %6471
          %6473 = vrot.lane.b32.xlu0 %v6428, 112
          %v6474 = vpop.permute.xlu0 %6473
          %6475 = vrot.lane.b32.xlu0 %v6429, 112
          %v6476 = vpop.permute.xlu0 %6475
          %6477 = vrot.lane.b32.xlu0 %v6430, 112
          %v6478 = vpop.permute.xlu0 %6477
          %v6495 = vadd.f32 %v6319, %v6448
          %v6496 = vadd.f32 %v6320, %v6450
          %v6497 = vadd.f32 %v6321, %v6452
          %v6498 = vadd.f32 %v6322, %v6454
          %v6499 = vadd.f32 %v6323, %v6456
          %v6500 = vadd.f32 %v6324, %v6458
          %v6501 = vadd.f32 %v6325, %v6460
          %v6502 = vadd.f32 %v6326, %v6462
          %v6503 = vadd.f32 %v6327, %v6464
          %v6504 = vadd.f32 %v6328, %v6466
          %v6505 = vadd.f32 %v6329, %v6468
          %v6506 = vadd.f32 %v6330, %v6470
          %v6507 = vadd.f32 %v6331, %v6472
          %v6508 = vadd.f32 %v6332, %v6474
          %v6509 = vadd.f32 %v6333, %v6476
          %v6510 = vadd.f32 %v6334, %v6478
          %6511 = vset.pattern.permute.xlu0 4
          %6512 = vperm.xlu0 %6511, %v5407
          %v6513 = vpop.permute.xlu0 %6512
          %6515 = vset.pattern.permute.xlu0 4
          %6516 = vperm.xlu0 %6515, %v5408
          %v6517 = vpop.permute.xlu0 %6516
          %6519 = vset.pattern.permute.xlu0 4
          %6520 = vperm.xlu0 %6519, %v5409
          %v6521 = vpop.permute.xlu0 %6520
          %6523 = vset.pattern.permute.xlu0 4
          %6524 = vperm.xlu0 %6523, %v5410
          %v6525 = vpop.permute.xlu0 %6524
          %6527 = vset.pattern.permute.xlu0 4
          %6528 = vperm.xlu0 %6527, %v5411
          %v6529 = vpop.permute.xlu0 %6528
          %6531 = vset.pattern.permute.xlu0 4
          %6532 = vperm.xlu0 %6531, %v5412
          %v6533 = vpop.permute.xlu0 %6532
          %6535 = vset.pattern.permute.xlu0 4
          %6536 = vperm.xlu0 %6535, %v5413
          %v6537 = vpop.permute.xlu0 %6536
          %6539 = vset.pattern.permute.xlu0 4
          %6540 = vperm.xlu0 %6539, %v5414
          %v6541 = vpop.permute.xlu0 %6540
          %6543 = vset.pattern.permute.xlu0 4
          %6544 = vperm.xlu0 %6543, %v5415
          %v6545 = vpop.permute.xlu0 %6544
          %6547 = vset.pattern.permute.xlu0 4
          %6548 = vperm.xlu0 %6547, %v5416
          %v6549 = vpop.permute.xlu0 %6548
          %6551 = vset.pattern.permute.xlu0 4
          %6552 = vperm.xlu0 %6551, %v5417
          %v6553 = vpop.permute.xlu0 %6552
          %6555 = vset.pattern.permute.xlu0 4
          %6556 = vperm.xlu0 %6555, %v5418
          %v6557 = vpop.permute.xlu0 %6556
          %6559 = vset.pattern.permute.xlu0 4
          %6560 = vperm.xlu0 %6559, %v5419
          %v6561 = vpop.permute.xlu0 %6560
          %6563 = vset.pattern.permute.xlu0 4
          %6564 = vperm.xlu0 %6563, %v5420
          %v6565 = vpop.permute.xlu0 %6564
          %6567 = vset.pattern.permute.xlu0 4
          %6568 = vperm.xlu0 %6567, %v5421
          %v6569 = vpop.permute.xlu0 %6568
          %6571 = vset.pattern.permute.xlu0 4
          %6572 = vperm.xlu0 %6571, %v5422
          %v6573 = vpop.permute.xlu0 %6572
          %v6575 = vmul.f32 %v6513, %v3711
          %v6576 = vmul.f32 %v6517, %v3712
          %v6577 = vmul.f32 %v6521, %v3713
          %v6578 = vmul.f32 %v6525, %v3714
          %v6579 = vmul.f32 %v6529, %v3715
          %v6580 = vmul.f32 %v6533, %v3716
          %v6581 = vmul.f32 %v6537, %v3717
          %v6582 = vmul.f32 %v6541, %v3718
          %v6583 = vmul.f32 %v6545, %v3719
          %v6584 = vmul.f32 %v6549, %v3720
          %v6585 = vmul.f32 %v6553, %v3721
          %v6586 = vmul.f32 %v6557, %v3722
          %v6587 = vmul.f32 %v6561, %v3723
          %v6588 = vmul.f32 %v6565, %v3724
          %v6589 = vmul.f32 %v6569, %v3725
          %v6590 = vmul.f32 %v6573, %v3726
          %6607 = vrot.lane.b32.xlu0 %v6575, 96
          %v6608 = vpop.permute.xlu0 %6607
          %6609 = vrot.lane.b32.xlu0 %v6576, 96
          %v6610 = vpop.permute.xlu0 %6609
          %6611 = vrot.lane.b32.xlu0 %v6577, 96
          %v6612 = vpop.permute.xlu0 %6611
          %6613 = vrot.lane.b32.xlu0 %v6578, 96
          %v6614 = vpop.permute.xlu0 %6613
          %6615 = vrot.lane.b32.xlu0 %v6579, 96
          %v6616 = vpop.permute.xlu0 %6615
          %6617 = vrot.lane.b32.xlu0 %v6580, 96
          %v6618 = vpop.permute.xlu0 %6617
          %6619 = vrot.lane.b32.xlu0 %v6581, 96
          %v6620 = vpop.permute.xlu0 %6619
          %6621 = vrot.lane.b32.xlu0 %v6582, 96
          %v6622 = vpop.permute.xlu0 %6621
          %6623 = vrot.lane.b32.xlu0 %v6583, 96
          %v6624 = vpop.permute.xlu0 %6623
          %6625 = vrot.lane.b32.xlu0 %v6584, 96
          %v6626 = vpop.permute.xlu0 %6625
          %6627 = vrot.lane.b32.xlu0 %v6585, 96
          %v6628 = vpop.permute.xlu0 %6627
          %6629 = vrot.lane.b32.xlu0 %v6586, 96
          %v6630 = vpop.permute.xlu0 %6629
          %6631 = vrot.lane.b32.xlu0 %v6587, 96
          %v6632 = vpop.permute.xlu0 %6631
          %6633 = vrot.lane.b32.xlu0 %v6588, 96
          %v6634 = vpop.permute.xlu0 %6633
          %6635 = vrot.lane.b32.xlu0 %v6589, 96
          %v6636 = vpop.permute.xlu0 %6635
          %6637 = vrot.lane.b32.xlu0 %v6590, 96
          %v6638 = vpop.permute.xlu0 %6637
          %v6655 = vadd.f32 %v6495, %v6608
          %v6656 = vadd.f32 %v6496, %v6610
          %v6657 = vadd.f32 %v6497, %v6612
          %v6658 = vadd.f32 %v6498, %v6614
          %v6659 = vadd.f32 %v6499, %v6616
          %v6660 = vadd.f32 %v6500, %v6618
          %v6661 = vadd.f32 %v6501, %v6620
          %v6662 = vadd.f32 %v6502, %v6622
          %v6663 = vadd.f32 %v6503, %v6624
          %v6664 = vadd.f32 %v6504, %v6626
          %v6665 = vadd.f32 %v6505, %v6628
          %v6666 = vadd.f32 %v6506, %v6630
          %v6667 = vadd.f32 %v6507, %v6632
          %v6668 = vadd.f32 %v6508, %v6634
          %v6669 = vadd.f32 %v6509, %v6636
          %v6670 = vadd.f32 %v6510, %v6638
          %6687 = vrot.lane.b32.xlu0 %v6655, 119
          %v6688 = vpop.permute.xlu0 %6687
          %6689 = vrot.lane.b32.xlu0 %v6656, 119
          %v6690 = vpop.permute.xlu0 %6689
          %6691 = vrot.lane.b32.xlu0 %v6657, 119
          %v6692 = vpop.permute.xlu0 %6691
          %6693 = vrot.lane.b32.xlu0 %v6658, 119
          %v6694 = vpop.permute.xlu0 %6693
          %6695 = vrot.lane.b32.xlu0 %v6659, 119
          %v6696 = vpop.permute.xlu0 %6695
          %6697 = vrot.lane.b32.xlu0 %v6660, 119
          %v6698 = vpop.permute.xlu0 %6697
          %6699 = vrot.lane.b32.xlu0 %v6661, 119
          %v6700 = vpop.permute.xlu0 %6699
          %6701 = vrot.lane.b32.xlu0 %v6662, 119
          %v6702 = vpop.permute.xlu0 %6701
          %6703 = vrot.lane.b32.xlu0 %v6663, 119
          %v6704 = vpop.permute.xlu0 %6703
          %6705 = vrot.lane.b32.xlu0 %v6664, 119
          %v6706 = vpop.permute.xlu0 %6705
          %6707 = vrot.lane.b32.xlu0 %v6665, 119
          %v6708 = vpop.permute.xlu0 %6707
          %6709 = vrot.lane.b32.xlu0 %v6666, 119
          %v6710 = vpop.permute.xlu0 %6709
          %6711 = vrot.lane.b32.xlu0 %v6667, 119
          %v6712 = vpop.permute.xlu0 %6711
          %6713 = vrot.lane.b32.xlu0 %v6668, 119
          %v6714 = vpop.permute.xlu0 %6713
          %6715 = vrot.lane.b32.xlu0 %v6669, 119
          %v6716 = vpop.permute.xlu0 %6715
          %6717 = vrot.lane.b32.xlu0 %v6670, 119
          %v6718 = vpop.permute.xlu0 %6717
          %6735 = vxpose.xlu0.b32.start [1/16] %v6688, 128
          %6736 = vxpose.xlu0.b32.cont [2/16] %v6690, 128
          %6737 = vxpose.xlu0.b32.cont [3/16] %v6692, 128
          %6738 = vxpose.xlu0.b32.cont [4/16] %v6694, 128
          %6739 = vxpose.xlu0.b32.cont [5/16] %v6696, 128
          %6740 = vxpose.xlu0.b32.cont [6/16] %v6698, 128
          %6741 = vxpose.xlu0.b32.cont [7/16] %v6700, 128
          %6742 = vxpose.xlu0.b32.cont [8/16] %v6702, 128
          %6743 = vxpose.xlu0.b32.cont [9/16] %v6704, 128
          %6744 = vxpose.xlu0.b32.cont [10/16] %v6706, 128
          %6745 = vxpose.xlu0.b32.cont [11/16] %v6708, 128
          %6746 = vxpose.xlu0.b32.cont [12/16] %v6710, 128
          %6747 = vxpose.xlu0.b32.cont [13/16] %v6712, 128
          %6748 = vxpose.xlu0.b32.cont [14/16] %v6714, 128
          %6749 = vxpose.xlu0.b32.cont [15/16] %v6716, 128
          %6750 = vxpose.xlu0.b32.end [16/16] %v6718, 128
          %v6751 = vpop.trf.xlu0
          %v6752 = vpop.trf.xlu0
          %v6753 = vpop.trf.xlu0
          %v6754 = vpop.trf.xlu0
          %v6755 = vpop.trf.xlu0
          %v6756 = vpop.trf.xlu0
          %v6757 = vpop.trf.xlu0
          %v6758 = vpop.trf.xlu0
          %v6759 = vpop.trf.xlu0
          %v6760 = vpop.trf.xlu0
          %v6761 = vpop.trf.xlu0
          %v6762 = vpop.trf.xlu0
          %v6763 = vpop.trf.xlu0
          %v6764 = vpop.trf.xlu0
          %v6765 = vpop.trf.xlu0
          %v6766 = vpop.trf.xlu0
          %6767 = vst [vmem:[%s284] sm:$0xff] %v6751
          %6768 = vst [vmem:[%s284 + $0x8] sm:$0xff] %v6752
        $region78: #{tpu_custom_call.1} parent=65 // pred_fallthru
          _
        %s6769 = sand.u32 %s130, 1
        %s6770 = scalar_lea.sflag [#allocation6], %s6769
        %s6771 = sand.u32 %s130, 1
        %s6772 = smul.addr %s6771, 16
        %s6773 = scalar_lea.vmem [#allocation5], %s6772
        // Predicated region
        $region79: #{tpu_custom_call.1} parent=65 // pred_check
          %p6774 = pneg %p140
        $region80: #{tpu_custom_call.1} parent=65 // pred_check_branch
          %6776 = sbr.rel (%p6774) target = $region82
        $region81: #{tpu_custom_call.1} parent=65 // pred_region
          %6778 = vsyncadd %s6770, 0
          %s6779 = smul.addr %s22, 6
          %s6780 = sadd.s32 %s23, %s6779
          %s6781 = smul.addr %s6780, 8
          %s6782 = scalar_lea.hbm %s3, %s6781
          %s6783 = sshll.u32 %s6773, 4
          %s6784 = int_to_ptr.vmem [resolvable:$true] %s6783
          %s6785 = sshll.u32 %s6782, 4
          %s6786 = int_to_ptr.hbm [resolvable:$true] %s6785
          %6791 = dma.vmem_to_hbm [thread:$0]  %s6784, 256, %s6786, %s6770, 128, 384, 8
        $region82: #{tpu_custom_call.1} parent=65 // pred_fallthru
          _
      $region66: #{tpu_custom_call.1} parent=5 // pred_fallthru
        _
      %p6792 = scmp.le.s32.totalorder 2, %s12
      // Predicated region
      $region83: #{tpu_custom_call.1} parent=5 // pred_check
        %p6793 = pneg %p6792
      $region84: #{tpu_custom_call.1} parent=5 // pred_check_branch
        %6795 = sbr.rel (%p6793) target = $region86
      $region85: #{tpu_custom_call.1} parent=5 // pred_region
        %s6796 = ssub.s32 %s12, 2
        // Predicated region
        $region87: #{tpu_custom_call.1} parent=85 // pred_check
          %p6797 = pneg %p146
        $region88: #{tpu_custom_call.1} parent=85 // pred_check_branch
          %6799 = sbr.rel (%p6797) target = $region90
        $region89: #{tpu_custom_call.1} parent=85 // pred_region
          %s6800 = sand.u32 %s131, 1
          %s6801 = scalar_lea.sflag [#allocation6], %s6800
          %s6802 = sand.u32 %s131, 1
          %s6803 = smul.addr %s6802, 16
          %s6804 = scalar_lea.vmem [#allocation5], %s6803
          %6806 = dma.done %s6801, 256
        $region90: #{tpu_custom_call.1} parent=85 // pred_fallthru
          _
      $region86: #{tpu_custom_call.1} parent=5 // pred_fallthru
        _
    $region6: #{tpu_custom_call.1} parent=1 // loop_footer
      %s16 = sadd.s32 1, %s12
    $region7: #{tpu_custom_call.1} parent=1 // loop_footer_branch
      %11 = sbr.rel target = $region3
    $region8: #{tpu_custom_call.1} parent=1 // loop_exit
      _
    %6807 = vsyncpa [#allocation6], 1
    %s6808 = scalar_lea.sflag [#allocation6], 1
    %6809 = vsyncpa %s6808, 1

</llo_original>
